<compile_context>
chip_gen: v7x
topology: tpu7x:2x2x1
jax: 0.10.0
libtpu: 0.0.40
codegen_flags: <defaults>
</compile_context>

<pallas_src>
import jax
import jax.numpy as jnp
from jax.experimental import pallas as pl
from jax.experimental.pallas import tpu as pltpu

EMBED_DIM = 8
PARAM_DIM = 100
PARAM_DIM_PADDED = 128          # lane-dense (multiple of 128) output width
HIDDEN = (128, 512, 1024)


def _round_up(x, m):
    return (x + m - 1) // m * m


def decoder_kernel(e_ref,
                   w1_ref, b1_ref,
                   w2_ref, b2_ref,
                   w3_ref, b3_ref,
                   w4_ref, b4_ref,
                   out_ref):
    # ---- layer 1 on the VPU: K=8 wastes the MXU's K dimension, so do 8
    # f32 broadcast-FMAs instead (free filler while the MXU runs layers 2-4).
    x = e_ref[...]                       # (bm, 8)   f32
    w1 = w1_ref[...]                     # (8, 128)  f32
    h = x[:, 0:1] * w1[0:1, :]
    for k in range(1, EMBED_DIM):        # static, fully unrolled
        h = h + x[:, k:k + 1] * w1[k:k + 1, :]
    h = jnp.maximum(h + b1_ref[...], 0.0).astype(jnp.bfloat16)

    # ---- layer 2: (bm, 128) @ (128, 512) + (1, 512) -> ReLU   (MXU, f32 acc)
    h = jnp.dot(h, w2_ref[...], preferred_element_type=jnp.float32)
    h = jnp.maximum(h + b2_ref[...], 0.0).astype(jnp.bfloat16)

    # ---- layer 3: (bm, 512) @ (512, 1024) + (1, 1024) -> ReLU
    h = jnp.dot(h, w3_ref[...], preferred_element_type=jnp.float32)
    h = jnp.maximum(h + b3_ref[...], 0.0).astype(jnp.bfloat16)

    # ---- layer 4: (bm, 1024) @ (1024, 128 padded) + (1, 128)  (no activation)
    h = jnp.dot(h, w4_ref[...], preferred_element_type=jnp.float32)
    out_ref[...] = (h + b4_ref[...]).astype(out_ref.dtype)


def decoder_forward(E, params, *, bm=1024, return_padded=False):
    """E: [B, EMBED_DIM] float32 -> [B, PARAM_DIM] float32.

    If return_padded=True, returns the (Bp, 128) padded kernel output so the
    consumer can slice lazily (avoids an extra read+write pass over the
    output); padded rows/columns are garbage and must be ignored.
    """
    (w1, b1), (w2, b2), (w3, b3), (w4, b4) = params
    B = E.shape[0]

    # Layer-1 weight stays f32 (VPU path); layers 2-4 weights -> bf16 for the
    # MXU.  Biases stay f32 and are added to the f32 accumulator.  Pad the
    # last layer 100 -> 128 output columns for lane-dense stores.
    pad_n = PARAM_DIM_PADDED - PARAM_DIM
    w1f = w1.astype(jnp.float32)
    w2b = w2.astype(jnp.bfloat16)
    w3b = w3.astype(jnp.bfloat16)
    w4b = jnp.pad(w4, ((0, 0), (0, pad_n))).astype(jnp.bfloat16)
    b4p = jnp.pad(b4, ((0, 0), (0, pad_n)))

    # Batch tile selection:
    #   * large B: bm rows per step (default 1024, ~6 MB/step of VMEM).
    #   * 16 < B <= bm: split into >= 2 grid steps so ("parallel",) can shard
    #     across v7x's two TensorCores (harmless on single-TC v5e/v6e).
    #   * tiny B: one 8-aligned step.
    bm = _round_up(max(bm, 8), 8)
    if B > bm:
        bm_eff = bm
    elif B > 16:
        bm_eff = _round_up(pl.cdiv(B, 2), 8)
    else:
        bm_eff = _round_up(max(B, 1), 8)
    Bp = _round_up(B, bm_eff)
    Ep = jnp.pad(E, ((0, Bp - B), (0, 0))) if Bp != B else E
    grid = (Bp // bm_eff,)

    weight_ops = (w1f, b1, w2b, b2, w3b, b3, w4b, b4p)
    operands = (Ep,) + weight_ops

    weight_bytes = sum(int(a.size) * a.dtype.itemsize for a in weight_ops)
    flops = 2 * Bp * (EMBED_DIM * HIDDEN[0]
                      + HIDDEN[0] * HIDDEN[1]
                      + HIDDEN[1] * HIDDEN[2]
                      + HIDDEN[2] * PARAM_DIM_PADDED)
    bytes_accessed = (int(Ep.size) * Ep.dtype.itemsize
                      + weight_bytes
                      + Bp * PARAM_DIM_PADDED * 4)

    def build(single_buffer_consts):
        def const_spec(arr):
            # Constant index_map: block never changes across grid steps, so a
            # single VMEM buffer suffices (saves ~1.5 MB vs double-buffering).
            if single_buffer_consts:
                return pl.BlockSpec(arr.shape, lambda i: (0, 0),
                                    pipeline_mode=pl.Buffered(1))
            return pl.BlockSpec(arr.shape, lambda i: (0, 0))

        in_specs = [pl.BlockSpec((bm_eff, EMBED_DIM), lambda i: (i, 0))]
        in_specs += [const_spec(a) for a in weight_ops]
        out_specs = pl.BlockSpec((bm_eff, PARAM_DIM_PADDED), lambda i: (i, 0))

        return pl.pallas_call(
            decoder_kernel,
            out_shape=jax.ShapeDtypeStruct((Bp, PARAM_DIM_PADDED), jnp.float32),
            grid_spec=pltpu.PrefetchScalarGridSpec(
                num_scalar_prefetch=0,
                grid=grid,
                in_specs=in_specs,
                out_specs=out_specs,
            ),
            compiler_params=pltpu.CompilerParams(
                dimension_semantics=("parallel",),   # batch steps shard across TCs (v7x)
                vmem_limit_bytes=48 * 1024 * 1024,   # safe on v5e/v6e/v7x; plenty for bm=1024
            ),
            cost_estimate=pl.CostEstimate(
                flops=flops, transcendentals=0, bytes_accessed=bytes_accessed),
        )

    try:
        out = build(True)(*operands)
    except Exception:
        # Fallback if this jax build rejects single-buffered constant specs.
        out = build(False)(*operands)

    if return_padded:
        return out                     # (Bp, 128); caller slices lazily
    return out[:B, :PARAM_DIM]


def init_params(key):
    """Deterministic init mimicking nn.Linear's U(-1/sqrt(fan_in), 1/sqrt(fan_in))."""
    dims = (EMBED_DIM,) + HIDDEN + (PARAM_DIM,)
    params = []
    for d_in, d_out in zip(dims[:-1], dims[1:]):
        key, kw, kb = jax.random.split(key, 3)
        bound = 1.0 / jnp.sqrt(jnp.float32(d_in))
        # stored as [in, out] so the kernel does x @ W
        w = jax.random.uniform(kw, (d_in, d_out), jnp.float32, -bound, bound)
        b = jax.random.uniform(kb, (1, d_out), jnp.float32, -bound, bound)
        params.append((w, b))
    return params


def decoder_reference(E, params):
    """Pure f32 reference."""
    h = E
    for i, (w, b) in enumerate(params):
        h = h @ w + b
        if i < len(params) - 1:
            h = jnp.maximum(h, 0.0)
    return h


if __name__ == "__main__":
    key = jax.random.PRNGKey(0)
    kp, kx = jax.random.split(key)
    params = init_params(kp)

    B = 32   # small batch; > 16 so the grid splits into 2 steps (v7x dual-TC path)
    E = jax.random.normal(kx, (B, EMBED_DIM), jnp.float32)

    out = jax.block_until_ready(decoder_forward(E, params))

    ref = decoder_reference(E, params)
    assert out.shape == (B, PARAM_DIM)
    # bf16 weights/activations (layers 2-4) with f32 accumulation -> loosened tolerance.
    assert jnp.allclose(out, ref, atol=2e-2, rtol=2e-2)
    print("KERNEL_OK")
</pallas_src>

<mosaic_0001>
module attributes {stable_mosaic.version = 11 : i64} {
  func.func @decoder_kernel(%arg0: i32, %arg1: memref<16x8xf32, #tpu.memory_space<vmem>>, %arg2: memref<8x128xf32, #tpu.memory_space<vmem>>, %arg3: memref<1x128xf32, #tpu.memory_space<vmem>>, %arg4: memref<128x512xbf16, #tpu.memory_space<vmem>>, %arg5: memref<1x512xf32, #tpu.memory_space<vmem>>, %arg6: memref<512x1024xbf16, #tpu.memory_space<vmem>>, %arg7: memref<1x1024xf32, #tpu.memory_space<vmem>>, %arg8: memref<1024x128xbf16, #tpu.memory_space<vmem>>, %arg9: memref<1x128xf32, #tpu.memory_space<vmem>>, %arg10: memref<16x128xf32, #tpu.memory_space<vmem>>) attributes {dimension_semantics = [#tpu.dimension_semantics<parallel>], iteration_bounds = array<i64: 2>, scalar_prefetch = 0 : i64, scratch_operands = 0 : i64, tpu.core_type = #tpu.core_type<tc>, window_params = [{transform_indices = @transform_0, window_bounds = array<i64: 16, 8>}, {pipeline_mode = #tpu.pipeline_mode<synchronous>, transform_indices = @transform_1, window_bounds = array<i64: 8, 128>}, {pipeline_mode = #tpu.pipeline_mode<synchronous>, transform_indices = @transform_2, window_bounds = array<i64: 1, 128>}, {pipeline_mode = #tpu.pipeline_mode<synchronous>, transform_indices = @transform_3, window_bounds = array<i64: 128, 512>}, {pipeline_mode = #tpu.pipeline_mode<synchronous>, transform_indices = @transform_4, window_bounds = array<i64: 1, 512>}, {pipeline_mode = #tpu.pipeline_mode<synchronous>, transform_indices = @transform_5, window_bounds = array<i64: 512, 1024>}, {pipeline_mode = #tpu.pipeline_mode<synchronous>, transform_indices = @transform_6, window_bounds = array<i64: 1, 1024>}, {pipeline_mode = #tpu.pipeline_mode<synchronous>, transform_indices = @transform_7, window_bounds = array<i64: 1024, 128>}, {pipeline_mode = #tpu.pipeline_mode<synchronous>, transform_indices = @transform_8, window_bounds = array<i64: 1, 128>}, {transform_indices = @transform_9, window_bounds = array<i64: 16, 128>}]} {
    %c0 = arith.constant 0 : index
    %c0_0 = arith.constant 0 : index
    %0 = vector.load %arg1[%c0, %c0_0] : memref<16x8xf32, #tpu.memory_space<vmem>>, vector<16x8xf32>
    %c0_1 = arith.constant 0 : index
    %c0_2 = arith.constant 0 : index
    %1 = vector.load %arg2[%c0_1, %c0_2] : memref<8x128xf32, #tpu.memory_space<vmem>>, vector<8x128xf32>
    %2 = vector.extract_strided_slice %0 {offsets = [0, 0], sizes = [16, 1], strides = [1, 1]} : vector<16x8xf32> to vector<16x1xf32>
    %3 = vector.extract_strided_slice %1 {offsets = [0, 0], sizes = [1, 128], strides = [1, 1]} : vector<8x128xf32> to vector<1x128xf32>
    %4 = vector.broadcast %2 : vector<16x1xf32> to vector<16x128xf32>
    %5 = vector.broadcast %3 : vector<1x128xf32> to vector<16x128xf32>
    %6 = arith.mulf %4, %5 : vector<16x128xf32>
    %7 = vector.extract_strided_slice %0 {offsets = [0, 1], sizes = [16, 1], strides = [1, 1]} : vector<16x8xf32> to vector<16x1xf32>
    %8 = vector.extract_strided_slice %1 {offsets = [1, 0], sizes = [1, 128], strides = [1, 1]} : vector<8x128xf32> to vector<1x128xf32>
    %9 = vector.broadcast %7 : vector<16x1xf32> to vector<16x128xf32>
    %10 = vector.broadcast %8 : vector<1x128xf32> to vector<16x128xf32>
    %11 = arith.mulf %9, %10 : vector<16x128xf32>
    %12 = arith.addf %6, %11 : vector<16x128xf32>
    %13 = vector.extract_strided_slice %0 {offsets = [0, 2], sizes = [16, 1], strides = [1, 1]} : vector<16x8xf32> to vector<16x1xf32>
    %14 = vector.extract_strided_slice %1 {offsets = [2, 0], sizes = [1, 128], strides = [1, 1]} : vector<8x128xf32> to vector<1x128xf32>
    %15 = vector.broadcast %13 : vector<16x1xf32> to vector<16x128xf32>
    %16 = vector.broadcast %14 : vector<1x128xf32> to vector<16x128xf32>
    %17 = arith.mulf %15, %16 : vector<16x128xf32>
    %18 = arith.addf %12, %17 : vector<16x128xf32>
    %19 = vector.extract_strided_slice %0 {offsets = [0, 3], sizes = [16, 1], strides = [1, 1]} : vector<16x8xf32> to vector<16x1xf32>
    %20 = vector.extract_strided_slice %1 {offsets = [3, 0], sizes = [1, 128], strides = [1, 1]} : vector<8x128xf32> to vector<1x128xf32>
    %21 = vector.broadcast %19 : vector<16x1xf32> to vector<16x128xf32>
    %22 = vector.broadcast %20 : vector<1x128xf32> to vector<16x128xf32>
    %23 = arith.mulf %21, %22 : vector<16x128xf32>
    %24 = arith.addf %18, %23 : vector<16x128xf32>
    %25 = vector.extract_strided_slice %0 {offsets = [0, 4], sizes = [16, 1], strides = [1, 1]} : vector<16x8xf32> to vector<16x1xf32>
    %26 = vector.extract_strided_slice %1 {offsets = [4, 0], sizes = [1, 128], strides = [1, 1]} : vector<8x128xf32> to vector<1x128xf32>
    %27 = vector.broadcast %25 : vector<16x1xf32> to vector<16x128xf32>
    %28 = vector.broadcast %26 : vector<1x128xf32> to vector<16x128xf32>
    %29 = arith.mulf %27, %28 : vector<16x128xf32>
    %30 = arith.addf %24, %29 : vector<16x128xf32>
    %31 = vector.extract_strided_slice %0 {offsets = [0, 5], sizes = [16, 1], strides = [1, 1]} : vector<16x8xf32> to vector<16x1xf32>
    %32 = vector.extract_strided_slice %1 {offsets = [5, 0], sizes = [1, 128], strides = [1, 1]} : vector<8x128xf32> to vector<1x128xf32>
    %33 = vector.broadcast %31 : vector<16x1xf32> to vector<16x128xf32>
    %34 = vector.broadcast %32 : vector<1x128xf32> to vector<16x128xf32>
    %35 = arith.mulf %33, %34 : vector<16x128xf32>
    %36 = arith.addf %30, %35 : vector<16x128xf32>
    %37 = vector.extract_strided_slice %0 {offsets = [0, 6], sizes = [16, 1], strides = [1, 1]} : vector<16x8xf32> to vector<16x1xf32>
    %38 = vector.extract_strided_slice %1 {offsets = [6, 0], sizes = [1, 128], strides = [1, 1]} : vector<8x128xf32> to vector<1x128xf32>
    %39 = vector.broadcast %37 : vector<16x1xf32> to vector<16x128xf32>
    %40 = vector.broadcast %38 : vector<1x128xf32> to vector<16x128xf32>
    %41 = arith.mulf %39, %40 : vector<16x128xf32>
    %42 = arith.addf %36, %41 : vector<16x128xf32>
    %43 = vector.extract_strided_slice %0 {offsets = [0, 7], sizes = [16, 1], strides = [1, 1]} : vector<16x8xf32> to vector<16x1xf32>
    %44 = vector.extract_strided_slice %1 {offsets = [7, 0], sizes = [1, 128], strides = [1, 1]} : vector<8x128xf32> to vector<1x128xf32>
    %45 = vector.broadcast %43 : vector<16x1xf32> to vector<16x128xf32>
    %46 = vector.broadcast %44 : vector<1x128xf32> to vector<16x128xf32>
    %47 = arith.mulf %45, %46 : vector<16x128xf32>
    %48 = arith.addf %42, %47 : vector<16x128xf32>
    %c0_3 = arith.constant 0 : index
    %c0_4 = arith.constant 0 : index
    %49 = vector.load %arg3[%c0_3, %c0_4] : memref<1x128xf32, #tpu.memory_space<vmem>>, vector<1x128xf32>
    %50 = vector.broadcast %49 : vector<1x128xf32> to vector<16x128xf32>
    %51 = arith.addf %48, %50 : vector<16x128xf32>
    %cst = arith.constant 0.000000e+00 : f32
    %52 = vector.broadcast %cst : f32 to vector<16x128xf32>
    %53 = arith.maximumf %51, %52 : vector<16x128xf32>
    %54 = arith.truncf %53 : vector<16x128xf32> to vector<16x128xbf16>
    %c0_5 = arith.constant 0 : index
    %c0_6 = arith.constant 0 : index
    %55 = vector.load %arg4[%c0_5, %c0_6] : memref<128x512xbf16, #tpu.memory_space<vmem>>, vector<128x512xbf16>
    %cst_7 = arith.constant dense<0.000000e+00> : vector<16x512xf32>
    %56 = tpu.matmul %54, %55, %cst_7 {dimension_numbers = #tpu.dot_dimension_numbers<[1], [0], [0], [1], [0, 0, 1, 1], [], []>} : vector<16x128xbf16>, vector<128x512xbf16>, vector<16x512xf32> -> vector<16x512xf32>
    %c0_8 = arith.constant 0 : index
    %c0_9 = arith.constant 0 : index
    %57 = vector.load %arg5[%c0_8, %c0_9] : memref<1x512xf32, #tpu.memory_space<vmem>>, vector<1x512xf32>
    %58 = vector.broadcast %57 : vector<1x512xf32> to vector<16x512xf32>
    %59 = arith.addf %56, %58 : vector<16x512xf32>
    %cst_10 = arith.constant 0.000000e+00 : f32
    %60 = vector.broadcast %cst_10 : f32 to vector<16x512xf32>
    %61 = arith.maximumf %59, %60 : vector<16x512xf32>
    %62 = arith.truncf %61 : vector<16x512xf32> to vector<16x512xbf16>
    %c0_11 = arith.constant 0 : index
    %c0_12 = arith.constant 0 : index
    %63 = vector.load %arg6[%c0_11, %c0_12] : memref<512x1024xbf16, #tpu.memory_space<vmem>>, vector<512x1024xbf16>
    %cst_13 = arith.constant dense<0.000000e+00> : vector<16x1024xf32>
    %64 = tpu.matmul %62, %63, %cst_13 {dimension_numbers = #tpu.dot_dimension_numbers<[1], [0], [0], [1], [0, 0, 1, 1], [], []>} : vector<16x512xbf16>, vector<512x1024xbf16>, vector<16x1024xf32> -> vector<16x1024xf32>
    %c0_14 = arith.constant 0 : index
    %c0_15 = arith.constant 0 : index
    %65 = vector.load %arg7[%c0_14, %c0_15] : memref<1x1024xf32, #tpu.memory_space<vmem>>, vector<1x1024xf32>
    %66 = vector.broadcast %65 : vector<1x1024xf32> to vector<16x1024xf32>
    %67 = arith.addf %64, %66 : vector<16x1024xf32>
    %cst_16 = arith.constant 0.000000e+00 : f32
    %68 = vector.broadcast %cst_16 : f32 to vector<16x1024xf32>
    %69 = arith.maximumf %67, %68 : vector<16x1024xf32>
    %70 = arith.truncf %69 : vector<16x1024xf32> to vector<16x1024xbf16>
    %c0_17 = arith.constant 0 : index
    %c0_18 = arith.constant 0 : index
    %71 = vector.load %arg8[%c0_17, %c0_18] : memref<1024x128xbf16, #tpu.memory_space<vmem>>, vector<1024x128xbf16>
    %cst_19 = arith.constant dense<0.000000e+00> : vector<16x128xf32>
    %72 = tpu.matmul %70, %71, %cst_19 {dimension_numbers = #tpu.dot_dimension_numbers<[1], [0], [0], [1], [0, 0, 1, 1], [], []>} : vector<16x1024xbf16>, vector<1024x128xbf16>, vector<16x128xf32> -> vector<16x128xf32>
    %c0_20 = arith.constant 0 : index
    %c0_21 = arith.constant 0 : index
    %73 = vector.load %arg9[%c0_20, %c0_21] : memref<1x128xf32, #tpu.memory_space<vmem>>, vector<1x128xf32>
    %74 = vector.broadcast %73 : vector<1x128xf32> to vector<16x128xf32>
    %75 = arith.addf %72, %74 : vector<16x128xf32>
    %c0_22 = arith.constant 0 : index
    %c0_23 = arith.constant 0 : index
    %76 = vector.load %arg10[%c0_22, %c0_23] : memref<16x128xf32, #tpu.memory_space<vmem>>, vector<16x128xf32>
    tpu.vector_store %arg10[%c0_22, %c0_23], %75 {strides = array<i32>} : memref<16x128xf32, #tpu.memory_space<vmem>>, vector<16x128xf32>,
    return
  }
  func.func @transform_0(%arg0: i32) -> (i32, i32) {
    %c0_i32 = arith.constant 0 : i32
    %c0_i32_0 = arith.constant 0 : i32
    return %arg0, %c0_i32 : i32, i32
  }
  func.func @transform_1(%arg0: i32) -> (i32, i32) {
    %c0_i32 = arith.constant 0 : i32
    %c0_i32_0 = arith.constant 0 : i32
    %c0_i32_1 = arith.constant 0 : i32
    return %c0_i32, %c0_i32_0 : i32, i32
  }
  func.func @transform_2(%arg0: i32) -> (i32, i32) {
    %c0_i32 = arith.constant 0 : i32
    %c0_i32_0 = arith.constant 0 : i32
    %c0_i32_1 = arith.constant 0 : i32
    return %c0_i32, %c0_i32_0 : i32, i32
  }
  func.func @transform_3(%arg0: i32) -> (i32, i32) {
    %c0_i32 = arith.constant 0 : i32
    %c0_i32_0 = arith.constant 0 : i32
    %c0_i32_1 = arith.constant 0 : i32
    return %c0_i32, %c0_i32_0 : i32, i32
  }
  func.func @transform_4(%arg0: i32) -> (i32, i32) {
    %c0_i32 = arith.constant 0 : i32
    %c0_i32_0 = arith.constant 0 : i32
    %c0_i32_1 = arith.constant 0 : i32
    return %c0_i32, %c0_i32_0 : i32, i32
  }
  func.func @transform_5(%arg0: i32) -> (i32, i32) {
    %c0_i32 = arith.constant 0 : i32
    %c0_i32_0 = arith.constant 0 : i32
    %c0_i32_1 = arith.constant 0 : i32
    return %c0_i32, %c0_i32_0 : i32, i32
  }
  func.func @transform_6(%arg0: i32) -> (i32, i32) {
    %c0_i32 = arith.constant 0 : i32
    %c0_i32_0 = arith.constant 0 : i32
    %c0_i32_1 = arith.constant 0 : i32
    return %c0_i32, %c0_i32_0 : i32, i32
  }
  func.func @transform_7(%arg0: i32) -> (i32, i32) {
    %c0_i32 = arith.constant 0 : i32
    %c0_i32_0 = arith.constant 0 : i32
    %c0_i32_1 = arith.constant 0 : i32
    return %c0_i32, %c0_i32_0 : i32, i32
  }
  func.func @transform_8(%arg0: i32) -> (i32, i32) {
    %c0_i32 = arith.constant 0 : i32
    %c0_i32_0 = arith.constant 0 : i32
    %c0_i32_1 = arith.constant 0 : i32
    return %c0_i32, %c0_i32_0 : i32, i32
  }
  func.func @transform_9(%arg0: i32) -> (i32, i32) {
    %c0_i32 = arith.constant 0 : i32
    %c0_i32_0 = arith.constant 0 : i32
    return %arg0, %c0_i32 : i32, i32
  }
}

module attributes {stable_mosaic.version = 11 : i64} {
  func.func @decoder_kernel(%arg0: i32, %arg1: memref<16x8xf32, #tpu.memory_space<vmem>>, %arg2: memref<8x128xf32, #tpu.memory_space<vmem>>, %arg3: memref<1x128xf32, #tpu.memory_space<vmem>>, %arg4: memref<128x512xbf16, #tpu.memory_space<vmem>>, %arg5: memref<1x512xf32, #tpu.memory_space<vmem>>, %arg6: memref<512x1024xbf16, #tpu.memory_space<vmem>>, %arg7: memref<1x1024xf32, #tpu.memory_space<vmem>>, %arg8: memref<1024x128xbf16, #tpu.memory_space<vmem>>, %arg9: memref<1x128xf32, #tpu.memory_space<vmem>>, %arg10: memref<16x128xf32, #tpu.memory_space<vmem>>) attributes {dimension_semantics = [#tpu.dimension_semantics<parallel>], iteration_bounds = array<i64: 2>, scalar_prefetch = 0 : i64, scratch_operands = 0 : i64, tpu.core_type = #tpu.core_type<tc>, window_params = [{transform_indices = @transform_0, window_bounds = array<i64: 16, 8>}, {pipeline_mode = #tpu.pipeline_mode<synchronous>, transform_indices = @transform_1, window_bounds = array<i64: 8, 128>}, {pipeline_mode = #tpu.pipeline_mode<synchronous>, transform_indices = @transform_2, window_bounds = array<i64: 1, 128>}, {pipeline_mode = #tpu.pipeline_mode<synchronous>, transform_indices = @transform_3, window_bounds = array<i64: 128, 512>}, {pipeline_mode = #tpu.pipeline_mode<synchronous>, transform_indices = @transform_4, window_bounds = array<i64: 1, 512>}, {pipeline_mode = #tpu.pipeline_mode<synchronous>, transform_indices = @transform_5, window_bounds = array<i64: 512, 1024>}, {pipeline_mode = #tpu.pipeline_mode<synchronous>, transform_indices = @transform_6, window_bounds = array<i64: 1, 1024>}, {pipeline_mode = #tpu.pipeline_mode<synchronous>, transform_indices = @transform_7, window_bounds = array<i64: 1024, 128>}, {pipeline_mode = #tpu.pipeline_mode<synchronous>, transform_indices = @transform_8, window_bounds = array<i64: 1, 128>}, {transform_indices = @transform_9, window_bounds = array<i64: 16, 128>}]} {
    %c0 = arith.constant 0 : index
    %c0_0 = arith.constant 0 : index
    %0 = vector.load %arg1[%c0, %c0_0] : memref<16x8xf32, #tpu.memory_space<vmem>>, vector<16x8xf32>
    %c0_1 = arith.constant 0 : index
    %c0_2 = arith.constant 0 : index
    %1 = vector.load %arg2[%c0_1, %c0_2] : memref<8x128xf32, #tpu.memory_space<vmem>>, vector<8x128xf32>
    %2 = vector.extract_strided_slice %0 {offsets = [0, 0], sizes = [16, 1], strides = [1, 1]} : vector<16x8xf32> to vector<16x1xf32>
    %3 = vector.extract_strided_slice %1 {offsets = [0, 0], sizes = [1, 128], strides = [1, 1]} : vector<8x128xf32> to vector<1x128xf32>
    %4 = vector.broadcast %2 : vector<16x1xf32> to vector<16x128xf32>
    %5 = vector.broadcast %3 : vector<1x128xf32> to vector<16x128xf32>
    %6 = arith.mulf %4, %5 : vector<16x128xf32>
    %7 = vector.extract_strided_slice %0 {offsets = [0, 1], sizes = [16, 1], strides = [1, 1]} : vector<16x8xf32> to vector<16x1xf32>
    %8 = vector.extract_strided_slice %1 {offsets = [1, 0], sizes = [1, 128], strides = [1, 1]} : vector<8x128xf32> to vector<1x128xf32>
    %9 = vector.broadcast %7 : vector<16x1xf32> to vector<16x128xf32>
    %10 = vector.broadcast %8 : vector<1x128xf32> to vector<16x128xf32>
    %11 = arith.mulf %9, %10 : vector<16x128xf32>
    %12 = arith.addf %6, %11 : vector<16x128xf32>
    %13 = vector.extract_strided_slice %0 {offsets = [0, 2], sizes = [16, 1], strides = [1, 1]} : vector<16x8xf32> to vector<16x1xf32>
    %14 = vector.extract_strided_slice %1 {offsets = [2, 0], sizes = [1, 128], strides = [1, 1]} : vector<8x128xf32> to vector<1x128xf32>
    %15 = vector.broadcast %13 : vector<16x1xf32> to vector<16x128xf32>
    %16 = vector.broadcast %14 : vector<1x128xf32> to vector<16x128xf32>
    %17 = arith.mulf %15, %16 : vector<16x128xf32>
    %18 = arith.addf %12, %17 : vector<16x128xf32>
    %19 = vector.extract_strided_slice %0 {offsets = [0, 3], sizes = [16, 1], strides = [1, 1]} : vector<16x8xf32> to vector<16x1xf32>
    %20 = vector.extract_strided_slice %1 {offsets = [3, 0], sizes = [1, 128], strides = [1, 1]} : vector<8x128xf32> to vector<1x128xf32>
    %21 = vector.broadcast %19 : vector<16x1xf32> to vector<16x128xf32>
    %22 = vector.broadcast %20 : vector<1x128xf32> to vector<16x128xf32>
    %23 = arith.mulf %21, %22 : vector<16x128xf32>
    %24 = arith.addf %18, %23 : vector<16x128xf32>
    %25 = vector.extract_strided_slice %0 {offsets = [0, 4], sizes = [16, 1], strides = [1, 1]} : vector<16x8xf32> to vector<16x1xf32>
    %26 = vector.extract_strided_slice %1 {offsets = [4, 0], sizes = [1, 128], strides = [1, 1]} : vector<8x128xf32> to vector<1x128xf32>
    %27 = vector.broadcast %25 : vector<16x1xf32> to vector<16x128xf32>
    %28 = vector.broadcast %26 : vector<1x128xf32> to vector<16x128xf32>
    %29 = arith.mulf %27, %28 : vector<16x128xf32>
    %30 = arith.addf %24, %29 : vector<16x128xf32>
    %31 = vector.extract_strided_slice %0 {offsets = [0, 5], sizes = [16, 1], strides = [1, 1]} : vector<16x8xf32> to vector<16x1xf32>
    %32 = vector.extract_strided_slice %1 {offsets = [5, 0], sizes = [1, 128], strides = [1, 1]} : vector<8x128xf32> to vector<1x128xf32>
    %33 = vector.broadcast %31 : vector<16x1xf32> to vector<16x128xf32>
    %34 = vector.broadcast %32 : vector<1x128xf32> to vector<16x128xf32>
    %35 = arith.mulf %33, %34 : vector<16x128xf32>
    %36 = arith.addf %30, %35 : vector<16x128xf32>
    %37 = vector.extract_strided_slice %0 {offsets = [0, 6], sizes = [16, 1], strides = [1, 1]} : vector<16x8xf32> to vector<16x1xf32>
    %38 = vector.extract_strided_slice %1 {offsets = [6, 0], sizes = [1, 128], strides = [1, 1]} : vector<8x128xf32> to vector<1x128xf32>
    %39 = vector.broadcast %37 : vector<16x1xf32> to vector<16x128xf32>
    %40 = vector.broadcast %38 : vector<1x128xf32> to vector<16x128xf32>
    %41 = arith.mulf %39, %40 : vector<16x128xf32>
    %42 = arith.addf %36, %41 : vector<16x128xf32>
    %43 = vector.extract_strided_slice %0 {offsets = [0, 7], sizes = [16, 1], strides = [1, 1]} : vector<16x8xf32> to vector<16x1xf32>
    %44 = vector.extract_strided_slice %1 {offsets = [7, 0], sizes = [1, 128], strides = [1, 1]} : vector<8x128xf32> to vector<1x128xf32>
    %45 = vector.broadcast %43 : vector<16x1xf32> to vector<16x128xf32>
    %46 = vector.broadcast %44 : vector<1x128xf32> to vector<16x128xf32>
    %47 = arith.mulf %45, %46 : vector<16x128xf32>
    %48 = arith.addf %42, %47 : vector<16x128xf32>
    %c0_3 = arith.constant 0 : index
    %c0_4 = arith.constant 0 : index
    %49 = vector.load %arg3[%c0_3, %c0_4] : memref<1x128xf32, #tpu.memory_space<vmem>>, vector<1x128xf32>
    %50 = vector.broadcast %49 : vector<1x128xf32> to vector<16x128xf32>
    %51 = arith.addf %48, %50 : vector<16x128xf32>
    %cst = arith.constant 0.000000e+00 : f32
    %52 = vector.broadcast %cst : f32 to vector<16x128xf32>
    %53 = arith.maximumf %51, %52 : vector<16x128xf32>
    %54 = arith.truncf %53 : vector<16x128xf32> to vector<16x128xbf16>
    %c0_5 = arith.constant 0 : index
    %c0_6 = arith.constant 0 : index
    %55 = vector.load %arg4[%c0_5, %c0_6] : memref<128x512xbf16, #tpu.memory_space<vmem>>, vector<128x512xbf16>
    %cst_7 = arith.constant dense<0.000000e+00> : vector<16x512xf32>
    %56 = tpu.matmul %54, %55, %cst_7 {dimension_numbers = #tpu.dot_dimension_numbers<[1], [0], [0], [1], [0, 0, 1, 1], [], []>} : vector<16x128xbf16>, vector<128x512xbf16>, vector<16x512xf32> -> vector<16x512xf32>
    %c0_8 = arith.constant 0 : index
    %c0_9 = arith.constant 0 : index
    %57 = vector.load %arg5[%c0_8, %c0_9] : memref<1x512xf32, #tpu.memory_space<vmem>>, vector<1x512xf32>
    %58 = vector.broadcast %57 : vector<1x512xf32> to vector<16x512xf32>
    %59 = arith.addf %56, %58 : vector<16x512xf32>
    %cst_10 = arith.constant 0.000000e+00 : f32
    %60 = vector.broadcast %cst_10 : f32 to vector<16x512xf32>
    %61 = arith.maximumf %59, %60 : vector<16x512xf32>
    %62 = arith.truncf %61 : vector<16x512xf32> to vector<16x512xbf16>
    %c0_11 = arith.constant 0 : index
    %c0_12 = arith.constant 0 : index
    %63 = vector.load %arg6[%c0_11, %c0_12] : memref<512x1024xbf16, #tpu.memory_space<vmem>>, vector<512x1024xbf16>
    %cst_13 = arith.constant dense<0.000000e+00> : vector<16x1024xf32>
    %64 = tpu.matmul %62, %63, %cst_13 {dimension_numbers = #tpu.dot_dimension_numbers<[1], [0], [0], [1], [0, 0, 1, 1], [], []>} : vector<16x512xbf16>, vector<512x1024xbf16>, vector<16x1024xf32> -> vector<16x1024xf32>
    %c0_14 = arith.constant 0 : index
    %c0_15 = arith.constant 0 : index
    %65 = vector.load %arg7[%c0_14, %c0_15] : memref<1x1024xf32, #tpu.memory_space<vmem>>, vector<1x1024xf32>
    %66 = vector.broadcast %65 : vector<1x1024xf32> to vector<16x1024xf32>
    %67 = arith.addf %64, %66 : vector<16x1024xf32>
    %cst_16 = arith.constant 0.000000e+00 : f32
    %68 = vector.broadcast %cst_16 : f32 to vector<16x1024xf32>
    %69 = arith.maximumf %67, %68 : vector<16x1024xf32>
    %70 = arith.truncf %69 : vector<16x1024xf32> to vector<16x1024xbf16>
    %c0_17 = arith.constant 0 : index
    %c0_18 = arith.constant 0 : index
    %71 = vector.load %arg8[%c0_17, %c0_18] : memref<1024x128xbf16, #tpu.memory_space<vmem>>, vector<1024x128xbf16>
    %cst_19 = arith.constant dense<0.000000e+00> : vector<16x128xf32>
    %72 = tpu.matmul %70, %71, %cst_19 {dimension_numbers = #tpu.dot_dimension_numbers<[1], [0], [0], [1], [0, 0, 1, 1], [], []>} : vector<16x1024xbf16>, vector<1024x128xbf16>, vector<16x128xf32> -> vector<16x128xf32>
    %c0_20 = arith.constant 0 : index
    %c0_21 = arith.constant 0 : index
    %73 = vector.load %arg9[%c0_20, %c0_21] : memref<1x128xf32, #tpu.memory_space<vmem>>, vector<1x128xf32>
    %74 = vector.broadcast %73 : vector<1x128xf32> to vector<16x128xf32>
    %75 = arith.addf %72, %74 : vector<16x128xf32>
    %c0_22 = arith.constant 0 : index
    %c0_23 = arith.constant 0 : index
    %76 = vector.load %arg10[%c0_22, %c0_23] : memref<16x128xf32, #tpu.memory_space<vmem>>, vector<16x128xf32>
    tpu.vector_store %arg10[%c0_22, %c0_23], %75 {strides = array<i32>} : memref<16x128xf32, #tpu.memory_space<vmem>>, vector<16x128xf32>,
    return
  }
  func.func @transform_0(%arg0: i32) -> (i32, i32) {
    %c0_i32 = arith.constant 0 : i32
    %c0_i32_0 = arith.constant 0 : i32
    return %arg0, %c0_i32 : i32, i32
  }
  func.func @transform_1(%arg0: i32) -> (i32, i32) {
    %c0_i32 = arith.constant 0 : i32
    %c0_i32_0 = arith.constant 0 : i32
    %c0_i32_1 = arith.constant 0 : i32
    return %c0_i32, %c0_i32_0 : i32, i32
  }
  func.func @transform_2(%arg0: i32) -> (i32, i32) {
    %c0_i32 = arith.constant 0 : i32
    %c0_i32_0 = arith.constant 0 : i32
    %c0_i32_1 = arith.constant 0 : i32
    return %c0_i32, %c0_i32_0 : i32, i32
  }
  func.func @transform_3(%arg0: i32) -> (i32, i32) {
    %c0_i32 = arith.constant 0 : i32
    %c0_i32_0 = arith.constant 0 : i32
    %c0_i32_1 = arith.constant 0 : i32
    return %c0_i32, %c0_i32_0 : i32, i32
  }
  func.func @transform_4(%arg0: i32) -> (i32, i32) {
    %c0_i32 = arith.constant 0 : i32
    %c0_i32_0 = arith.constant 0 : i32
    %c0_i32_1 = arith.constant 0 : i32
    return %c0_i32, %c0_i32_0 : i32, i32
  }
  func.func @transform_5(%arg0: i32) -> (i32, i32) {
    %c0_i32 = arith.constant 0 : i32
    %c0_i32_0 = arith.constant 0 : i32
    %c0_i32_1 = arith.constant 0 : i32
    return %c0_i32, %c0_i32_0 : i32, i32
  }
  func.func @transform_6(%arg0: i32) -> (i32, i32) {
    %c0_i32 = arith.constant 0 : i32
    %c0_i32_0 = arith.constant 0 : i32
    %c0_i32_1 = arith.constant 0 : i32
    return %c0_i32, %c0_i32_0 : i32, i32
  }
  func.func @transform_7(%arg0: i32) -> (i32, i32) {
    %c0_i32 = arith.constant 0 : i32
    %c0_i32_0 = arith.constant 0 : i32
    %c0_i32_1 = arith.constant 0 : i32
    return %c0_i32, %c0_i32_0 : i32, i32
  }
  func.func @transform_8(%arg0: i32) -> (i32, i32) {
    %c0_i32 = arith.constant 0 : i32
    %c0_i32_0 = arith.constant 0 : i32
    %c0_i32_1 = arith.constant 0 : i32
    return %c0_i32, %c0_i32_0 : i32, i32
  }
  func.func @transform_9(%arg0: i32) -> (i32, i32) {
    %c0_i32 = arith.constant 0 : i32
    %c0_i32_0 = arith.constant 0 : i32
    return %arg0, %c0_i32 : i32, i32
  }
}

</mosaic_0001>

<llo_original>
// kernel: tpu_custom_call.1
$region0: #{tpu_custom_call.1}
  #allocation0 [shape = 'u32[]', space=smem, size = 0x4, offset = 0x4, fixed_abs, tag = 'smem constant byte address 0x4 - core index']
  #allocation1 [shape = 'u32[144,128]{1,0:T(1,128)}', space=vmem, size = 0x12000, scoped, tag = 'internal scratch']
  %s0 = inlined_call_operand.vmem [shape: f32[32,8], index: 0, kind: input, shape index: {}]
  %s1 = inlined_call_operand.vmem [shape: f32[8,128], index: 1, kind: input, shape index: {}]
  %s2 = inlined_call_operand.vmem [shape: f32[1,128], index: 2, kind: input, shape index: {}]
  %s3 = inlined_call_operand.hbm [shape: bf16[128,512], index: 3, kind: input, shape index: {}]
  %s4 = inlined_call_operand.vmem [shape: f32[1,512], index: 4, kind: input, shape index: {}]
  %s5 = inlined_call_operand.hbm [shape: bf16[512,1024], index: 5, kind: input, shape index: {}]
  %s6 = inlined_call_operand.vmem [shape: f32[1,1024], index: 6, kind: input, shape index: {}]
  %s7 = inlined_call_operand.hbm [shape: bf16[1024,128], index: 7, kind: input, shape index: {}]
  %s8 = inlined_call_operand.vmem [shape: f32[1,128], index: 8, kind: input, shape index: {}]
  %s9 = inlined_call_operand.hbm [shape: f32[32,128], index: 9, kind: output, shape index: {}]
  %s10 = sld [smem:[#allocation0]]
  $region81: #{tpu_custom_call.1} parent=0
    _
  %s12 = ssub.s32 1, %s10
  %s13 = scalar_select 0, %s12, %s10
  $region1: #{tpu_custom_call.1} parent=0
    #allocation2 [shape = 'u8[131072]{0}', space=vmem, size = 0x20000, scoped, tag = 'input window, operand 3, single buffered']
    #allocation3 [shape = 's32[2]{0}', space=sflag, size = 0x8, scoped, tag = 'scoped memory for tpu_custom_call.1']
    #allocation4 [shape = 's32[2]{0}', space=sflag, size = 0x8, scoped, tag = 'scoped memory for tpu_custom_call.1']
    #allocation5 [shape = 'u8[1048576]{0}', space=vmem, size = 0x100000, scoped, tag = 'input window, operand 5, single buffered']
    #allocation6 [shape = 's32[1]{0}', space=sflag, size = 0x4, scoped, tag = 'scoped memory for tpu_custom_call.1']
    #allocation7 [shape = 'u8[262144]{0}', space=vmem, size = 0x40000, scoped, tag = 'input window, operand 7, single buffered']
    #allocation8 [shape = 'u8[16384]{0}', space=vmem, size = 0x4000, scoped, tag = 'output window, operand 0']
    %14 = vsyncpa [#allocation3], 0
    %15 = vsyncpa [#allocation6], 0
    %16 = vsyncpa [#allocation4], 0
    %s17 = scalar_lea.sflag [#allocation4], 1
    %18 = vsyncpa %s17, 0
    loop: start=0, step=1, limit=4
    $region2: #{tpu_custom_call.1} parent=1 // loop_pre_header
      _
    $region3: #{tpu_custom_call.1} parent=1 // loop_header
      %s20 = sphi 0, %s24
      %p21 = scmp.ge.s32.totalorder %s20, 4
      %s30 = sphi 0, %s32
      %s33 = sphi 0, %s30
      %s34 = sphi 0, %s33
      %s50 = sphi 0, %s34
      %s54 = sphi 0, %s54
      %s56 = sphi 0, %s54
      %s57 = sphi 0, %s56
      %s71 = sphi 0, %s57
      %s75 = sphi 0, %s75
      %s77 = sphi 0, %s75
      %s78 = sphi 0, %s77
      %s92 = sphi 0, %s78
      %s96 = sphi 0, %s96
      %s98 = sphi 0, %s96
      %s99 = sphi 0, %s98
      %s113 = sphi 0, %s99
      %s117 = sphi 0, %s117
      %s119 = sphi 0, %s117
      %s120 = sphi 0, %s119
      %s134 = sphi 0, %s120
      %s138 = sphi 0, %s138
      %s140 = sphi 0, %s138
      %s141 = sphi 0, %s140
      %s155 = sphi 0, %s141
      %s159 = sphi 0, %s159
      %s161 = sphi 0, %s159
      %s162 = sphi 0, %s161
      %s176 = sphi 0, %s162
      %s180 = sphi 0, %s180
      %s182 = sphi 0, %s180
      %s183 = sphi 0, %s182
      %s197 = sphi 0, %s183
      %s201 = sphi 0, %s201
      %s203 = sphi 0, %s201
      %s204 = sphi 0, %s203
      %s218 = sphi 0, %s204
      %s224 = sphi 0, %s226
      %s227 = sphi 0, %s224
      %s228 = sphi 0, %s227
      %s244 = sphi 0, %s228
    $region4: #{tpu_custom_call.1} parent=1 // loop_header_branch
      %23 = sbr.rel (%p21) target = $region8
    $region5: #{tpu_custom_call.1} parent=1 // loop_body
      %s25 = ssub.s32 %s20, 1
      %s26 = ssub.s32 %s20, 2
      %s27 = sadd.s32 %s20, 1
      %s28 = ssub.s32 %s20, %s27
      %p29 = scmp.eq.s32.totalorder %s28, 0
      %s31 = sadd.s32 %s30, 1
      %s32 = scalar_select %p29, %s30, %s31
      %p35 = pneg %p29
      %p36 = scmp.eq.s32.totalorder %s20, 1
      %p37 = por %p35, %p36
      %p38 = scmp.ne.s32.totalorder %s30, %s33
      %p39 = scmp.eq.s32.totalorder %s20, 0
      %p40 = por %p38, %p39
      %p41 = scmp.ne.s32.totalorder %s30, %s33
      %p42 = scmp.eq.s32.totalorder %s25, 1
      %p43 = por %p41, %p42
      %p44 = scmp.ne.s32.totalorder %s33, %s34
      %p45 = scmp.eq.s32.totalorder %s25, 0
      %p46 = por %p44, %p45
      %p47 = scmp.ne.s32.totalorder %s33, %s34
      %p48 = scmp.eq.s32.totalorder %s26, 1
      %p49 = por %p47, %p48
      %p51 = scmp.ne.s32.totalorder %s34, %s50
      %p52 = scmp.eq.s32.totalorder %s26, 0
      %p53 = por %p51, %p52
      %s55 = sadd.s32 %s54, 1
      %p58 = scmp.eq.s32.totalorder %s20, 1
      %p59 = scmp.ne.s32.totalorder %s54, %s56
      %p60 = scmp.eq.s32.totalorder %s20, 0
      %p61 = por %p59, %p60
      %p62 = scmp.ne.s32.totalorder %s54, %s56
      %p63 = scmp.eq.s32.totalorder %s25, 1
      %p64 = por %p62, %p63
      %p65 = scmp.ne.s32.totalorder %s56, %s57
      %p66 = scmp.eq.s32.totalorder %s25, 0
      %p67 = por %p65, %p66
      %p68 = scmp.ne.s32.totalorder %s56, %s57
      %p69 = scmp.eq.s32.totalorder %s26, 1
      %p70 = por %p68, %p69
      %p72 = scmp.ne.s32.totalorder %s57, %s71
      %p73 = scmp.eq.s32.totalorder %s26, 0
      %p74 = por %p72, %p73
      %s76 = sadd.s32 %s75, 1
      %p79 = scmp.eq.s32.totalorder %s20, 1
      %p80 = scmp.ne.s32.totalorder %s75, %s77
      %p81 = scmp.eq.s32.totalorder %s20, 0
      %p82 = por %p80, %p81
      %p83 = scmp.ne.s32.totalorder %s75, %s77
      %p84 = scmp.eq.s32.totalorder %s25, 1
      %p85 = por %p83, %p84
      %p86 = scmp.ne.s32.totalorder %s77, %s78
      %p87 = scmp.eq.s32.totalorder %s25, 0
      %p88 = por %p86, %p87
      %p89 = scmp.ne.s32.totalorder %s77, %s78
      %p90 = scmp.eq.s32.totalorder %s26, 1
      %p91 = por %p89, %p90
      %p93 = scmp.ne.s32.totalorder %s78, %s92
      %p94 = scmp.eq.s32.totalorder %s26, 0
      %p95 = por %p93, %p94
      %s97 = sadd.s32 %s96, 1
      %p100 = scmp.eq.s32.totalorder %s20, 1
      %p101 = scmp.ne.s32.totalorder %s96, %s98
      %p102 = scmp.eq.s32.totalorder %s20, 0
      %p103 = por %p101, %p102
      %p104 = scmp.ne.s32.totalorder %s96, %s98
      %p105 = scmp.eq.s32.totalorder %s25, 1
      %p106 = por %p104, %p105
      %p107 = scmp.ne.s32.totalorder %s98, %s99
      %p108 = scmp.eq.s32.totalorder %s25, 0
      %p109 = por %p107, %p108
      %p110 = scmp.ne.s32.totalorder %s98, %s99
      %p111 = scmp.eq.s32.totalorder %s26, 1
      %p112 = por %p110, %p111
      %p114 = scmp.ne.s32.totalorder %s99, %s113
      %p115 = scmp.eq.s32.totalorder %s26, 0
      %p116 = por %p114, %p115
      %s118 = sadd.s32 %s117, 1
      %p121 = scmp.eq.s32.totalorder %s20, 1
      %p122 = scmp.ne.s32.totalorder %s117, %s119
      %p123 = scmp.eq.s32.totalorder %s20, 0
      %p124 = por %p122, %p123
      %p125 = scmp.ne.s32.totalorder %s117, %s119
      %p126 = scmp.eq.s32.totalorder %s25, 1
      %p127 = por %p125, %p126
      %p128 = scmp.ne.s32.totalorder %s119, %s120
      %p129 = scmp.eq.s32.totalorder %s25, 0
      %p130 = por %p128, %p129
      %p131 = scmp.ne.s32.totalorder %s119, %s120
      %p132 = scmp.eq.s32.totalorder %s26, 1
      %p133 = por %p131, %p132
      %p135 = scmp.ne.s32.totalorder %s120, %s134
      %p136 = scmp.eq.s32.totalorder %s26, 0
      %p137 = por %p135, %p136
      %s139 = sadd.s32 %s138, 1
      %p142 = scmp.eq.s32.totalorder %s20, 1
      %p143 = scmp.ne.s32.totalorder %s138, %s140
      %p144 = scmp.eq.s32.totalorder %s20, 0
      %p145 = por %p143, %p144
      %p146 = scmp.ne.s32.totalorder %s138, %s140
      %p147 = scmp.eq.s32.totalorder %s25, 1
      %p148 = por %p146, %p147
      %p149 = scmp.ne.s32.totalorder %s140, %s141
      %p150 = scmp.eq.s32.totalorder %s25, 0
      %p151 = por %p149, %p150
      %p152 = scmp.ne.s32.totalorder %s140, %s141
      %p153 = scmp.eq.s32.totalorder %s26, 1
      %p154 = por %p152, %p153
      %p156 = scmp.ne.s32.totalorder %s141, %s155
      %p157 = scmp.eq.s32.totalorder %s26, 0
      %p158 = por %p156, %p157
      %s160 = sadd.s32 %s159, 1
      %p163 = scmp.eq.s32.totalorder %s20, 1
      %p164 = scmp.ne.s32.totalorder %s159, %s161
      %p165 = scmp.eq.s32.totalorder %s20, 0
      %p166 = por %p164, %p165
      %p167 = scmp.ne.s32.totalorder %s159, %s161
      %p168 = scmp.eq.s32.totalorder %s25, 1
      %p169 = por %p167, %p168
      %p170 = scmp.ne.s32.totalorder %s161, %s162
      %p171 = scmp.eq.s32.totalorder %s25, 0
      %p172 = por %p170, %p171
      %p173 = scmp.ne.s32.totalorder %s161, %s162
      %p174 = scmp.eq.s32.totalorder %s26, 1
      %p175 = por %p173, %p174
      %p177 = scmp.ne.s32.totalorder %s162, %s176
      %p178 = scmp.eq.s32.totalorder %s26, 0
      %p179 = por %p177, %p178
      %s181 = sadd.s32 %s180, 1
      %p184 = scmp.eq.s32.totalorder %s20, 1
      %p185 = scmp.ne.s32.totalorder %s180, %s182
      %p186 = scmp.eq.s32.totalorder %s20, 0
      %p187 = por %p185, %p186
      %p188 = scmp.ne.s32.totalorder %s180, %s182
      %p189 = scmp.eq.s32.totalorder %s25, 1
      %p190 = por %p188, %p189
      %p191 = scmp.ne.s32.totalorder %s182, %s183
      %p192 = scmp.eq.s32.totalorder %s25, 0
      %p193 = por %p191, %p192
      %p194 = scmp.ne.s32.totalorder %s182, %s183
      %p195 = scmp.eq.s32.totalorder %s26, 1
      %p196 = por %p194, %p195
      %p198 = scmp.ne.s32.totalorder %s183, %s197
      %p199 = scmp.eq.s32.totalorder %s26, 0
      %p200 = por %p198, %p199
      %s202 = sadd.s32 %s201, 1
      %p205 = scmp.eq.s32.totalorder %s20, 1
      %p206 = scmp.ne.s32.totalorder %s201, %s203
      %p207 = scmp.eq.s32.totalorder %s20, 0
      %p208 = por %p206, %p207
      %p209 = scmp.ne.s32.totalorder %s201, %s203
      %p210 = scmp.eq.s32.totalorder %s25, 1
      %p211 = por %p209, %p210
      %p212 = scmp.ne.s32.totalorder %s203, %s204
      %p213 = scmp.eq.s32.totalorder %s25, 0
      %p214 = por %p212, %p213
      %p215 = scmp.ne.s32.totalorder %s203, %s204
      %p216 = scmp.eq.s32.totalorder %s26, 1
      %p217 = por %p215, %p216
      %p219 = scmp.ne.s32.totalorder %s204, %s218
      %p220 = scmp.eq.s32.totalorder %s26, 0
      %p221 = por %p219, %p220
      %s222 = ssub.s32 %s20, %s27
      %p223 = scmp.eq.s32.totalorder %s222, 0
      %s225 = sadd.s32 %s224, 1
      %s226 = scalar_select %p223, %s224, %s225
      %p229 = pneg %p223
      %p230 = scmp.eq.s32.totalorder %s20, 1
      %p231 = por %p229, %p230
      %p232 = scmp.ne.s32.totalorder %s224, %s227
      %p233 = scmp.eq.s32.totalorder %s20, 0
      %p234 = por %p232, %p233
      %p235 = scmp.ne.s32.totalorder %s224, %s227
      %p236 = scmp.eq.s32.totalorder %s25, 1
      %p237 = por %p235, %p236
      %p238 = scmp.ne.s32.totalorder %s227, %s228
      %p239 = scmp.eq.s32.totalorder %s25, 0
      %p240 = por %p238, %p239
      %p241 = scmp.ne.s32.totalorder %s227, %s228
      %p242 = scmp.eq.s32.totalorder %s26, 1
      %p243 = por %p241, %p242
      %p245 = scmp.ne.s32.totalorder %s228, %s244
      %p246 = scmp.eq.s32.totalorder %s26, 0
      %p247 = por %p245, %p246
      %p248 = scmp.le.s32.totalorder 1, %s20
      %p249 = scmp.lt.s32.totalorder %s20, 3
      %p250 = pnand %p248, %p249
      %p251 = pneg %p250
      // Predicated region
      $region9: #{tpu_custom_call.1} parent=5 // pred_check
        _
      $region10: #{tpu_custom_call.1} parent=5 // pred_check_branch
        %253 = sbr.rel (%p250) target = $region12
      $region11: #{tpu_custom_call.1} parent=5 // pred_region
        %s254 = ssub.s32 %s20, 1
        // Predicated region
        $region13: #{tpu_custom_call.1} parent=11 // pred_check
          %p255 = pneg %p67
        $region14: #{tpu_custom_call.1} parent=11 // pred_check_branch
          %257 = sbr.rel (%p255) target = $region16
        $region15: #{tpu_custom_call.1} parent=11 // pred_region
          _
        $region16: #{tpu_custom_call.1} parent=11 // pred_fallthru
          _
        // Predicated region
        $region17: #{tpu_custom_call.1} parent=11 // pred_check
          %p258 = pneg %p88
        $region18: #{tpu_custom_call.1} parent=11 // pred_check_branch
          %260 = sbr.rel (%p258) target = $region20
        $region19: #{tpu_custom_call.1} parent=11 // pred_region
          _
        $region20: #{tpu_custom_call.1} parent=11 // pred_fallthru
          _
        // Predicated region
        $region21: #{tpu_custom_call.1} parent=11 // pred_check
          %p261 = pneg %p109
        $region22: #{tpu_custom_call.1} parent=11 // pred_check_branch
          %263 = sbr.rel (%p261) target = $region24
        $region23: #{tpu_custom_call.1} parent=11 // pred_region
          %s265 = ssub.s32 4096, 4096
          %266 = vsyncadd [#allocation3], %s265
          %s267 = sshll.u32 [#allocation2], 4
          %s268 = int_to_ptr.vmem [resolvable:$true] %s267
          %273 = dma.hbm_to_vmem [thread:$0]  %s3, 4096, %s268, [#allocation3], 256, 256, 16
        $region24: #{tpu_custom_call.1} parent=11 // pred_fallthru
          _
        // Predicated region
        $region25: #{tpu_custom_call.1} parent=11 // pred_check
          %p274 = pneg %p130
        $region26: #{tpu_custom_call.1} parent=11 // pred_check_branch
          %276 = sbr.rel (%p274) target = $region28
        $region27: #{tpu_custom_call.1} parent=11 // pred_region
          _
        $region28: #{tpu_custom_call.1} parent=11 // pred_fallthru
          _
        // Predicated region
        $region29: #{tpu_custom_call.1} parent=11 // pred_check
          %p277 = pneg %p151
        $region30: #{tpu_custom_call.1} parent=11 // pred_check_branch
          %279 = sbr.rel (%p277) target = $region32
        $region31: #{tpu_custom_call.1} parent=11 // pred_region
          %s281 = ssub.s32 32768, 32768
          %282 = vsyncadd [#allocation6], %s281
          %s283 = sshll.u32 [#allocation5], 4
          %s284 = int_to_ptr.vmem [resolvable:$true] %s283
          %289 = dma.hbm_to_vmem [thread:$0]  %s5, 32768, %s284, [#allocation6], 512, 512, 32
        $region32: #{tpu_custom_call.1} parent=11 // pred_fallthru
          _
        // Predicated region
        $region33: #{tpu_custom_call.1} parent=11 // pred_check
          %p290 = pneg %p172
        $region34: #{tpu_custom_call.1} parent=11 // pred_check_branch
          %292 = sbr.rel (%p290) target = $region36
        $region35: #{tpu_custom_call.1} parent=11 // pred_region
          _
        $region36: #{tpu_custom_call.1} parent=11 // pred_fallthru
          _
        // Predicated region
        $region37: #{tpu_custom_call.1} parent=11 // pred_check
          %p293 = pneg %p193
        $region38: #{tpu_custom_call.1} parent=11 // pred_check_branch
          %295 = sbr.rel (%p293) target = $region40
        $region39: #{tpu_custom_call.1} parent=11 // pred_region
          %s297 = ssub.s32 8192, 8192
          %298 = vsyncadd [#allocation6], %s297
          %s299 = sshll.u32 [#allocation7], 4
          %s300 = int_to_ptr.vmem [resolvable:$true] %s299
          %305 = dma.hbm_to_vmem [thread:$0]  %s7, 8192, %s300, [#allocation6], 64, 64, 4
        $region40: #{tpu_custom_call.1} parent=11 // pred_fallthru
          _
        // Predicated region
        $region41: #{tpu_custom_call.1} parent=11 // pred_check
          %p306 = pneg %p214
        $region42: #{tpu_custom_call.1} parent=11 // pred_check_branch
          %308 = sbr.rel (%p306) target = $region44
        $region43: #{tpu_custom_call.1} parent=11 // pred_region
          _
        $region44: #{tpu_custom_call.1} parent=11 // pred_fallthru
          _
      $region12: #{tpu_custom_call.1} parent=5 // pred_fallthru
        _
      %p309 = scmp.lt.s32.totalorder %s20, 2
      // Predicated region
      $region45: #{tpu_custom_call.1} parent=5 // pred_check
        %p310 = pneg %p309
      $region46: #{tpu_custom_call.1} parent=5 // pred_check_branch
        %312 = sbr.rel (%p310) target = $region48
      $region47: #{tpu_custom_call.1} parent=5 // pred_region
        // Predicated region
        $region49: #{tpu_custom_call.1} parent=47 // pred_check
          %p313 = pneg %p40
        $region50: #{tpu_custom_call.1} parent=47 // pred_check_branch
          %315 = sbr.rel (%p313) target = $region52
        $region51: #{tpu_custom_call.1} parent=47 // pred_region
          %s316 = smul.u32 2, %s20
          %p317 = scmp.lt.s32.totalorder %s316, 3
          %s318 = scalar_select %p317, %s316, 3
          %s319 = smul.addr %s318, 8
          %s320 = scalar_lea.vmem %s0, %s319
          %s321 = smul.u32 2, %s20
        $region52: #{tpu_custom_call.1} parent=47 // pred_fallthru
          _
      $region48: #{tpu_custom_call.1} parent=5 // pred_fallthru
        _
      %p322 = scmp.le.s32.totalorder 1, %s20
      %p323 = scmp.lt.s32.totalorder %s20, 3
      %p324 = pnand %p322, %p323
      %p325 = pneg %p324
      // Predicated region
      $region53: #{tpu_custom_call.1} parent=5 // pred_check
        _
      $region54: #{tpu_custom_call.1} parent=5 // pred_check_branch
        %327 = sbr.rel (%p324) target = $region56
      $region55: #{tpu_custom_call.1} parent=5 // pred_region
        %s328 = ssub.s32 %s20, 1
        // Predicated region
        $region57: #{tpu_custom_call.1} parent=55 // pred_check
          %p329 = pneg %p109
        $region58: #{tpu_custom_call.1} parent=55 // pred_check_branch
          %331 = sbr.rel (%p329) target = $region60
        $region59: #{tpu_custom_call.1} parent=55 // pred_region
          %332 = dma.done [#allocation3], 4096
        $region60: #{tpu_custom_call.1} parent=55 // pred_fallthru
          _
        // Predicated region
        $region61: #{tpu_custom_call.1} parent=55 // pred_check
          %p333 = pneg %p151
        $region62: #{tpu_custom_call.1} parent=55 // pred_check_branch
          %335 = sbr.rel (%p333) target = $region64
        $region63: #{tpu_custom_call.1} parent=55 // pred_region
          %336 = dma.done [#allocation6], 32768
        $region64: #{tpu_custom_call.1} parent=55 // pred_fallthru
          _
        // Predicated region
        $region65: #{tpu_custom_call.1} parent=55 // pred_check
          %p337 = pneg %p193
        $region66: #{tpu_custom_call.1} parent=55 // pred_check_branch
          %339 = sbr.rel (%p337) target = $region68
        $region67: #{tpu_custom_call.1} parent=55 // pred_region
          %340 = dma.done [#allocation6], 8192
        $region68: #{tpu_custom_call.1} parent=55 // pred_fallthru
          _
        %s341 = smul.u32 2, %s25
        %p342 = scmp.lt.s32.totalorder %s341, 3
        %s343 = scalar_select %p342, %s341, 3
        %s344 = smul.addr %s343, 8
        %s345 = scalar_lea.vmem %s0, %s344
        %p346 = pneg %p46
        %p347 = pneg %p43
        %p348 = pneg %p67
        %p349 = pneg %p64
        %p350 = pneg %p88
        %p351 = pneg %p85
        %p352 = pneg %p109
        %p353 = pneg %p106
        %p354 = pneg %p130
        %p355 = pneg %p127
        %p356 = pneg %p151
        %p357 = pneg %p148
        %p358 = pneg %p172
        %p359 = pneg %p169
        %p360 = pneg %p193
        %p361 = pneg %p190
        %p362 = pneg %p214
        %p363 = pneg %p211
        %p364 = pneg %p240
        %p365 = pneg %p237
        %s366 = sand.u32 %s227, 1
        %s367 = scalar_lea.sflag [#allocation4], %s366
        %s368 = sand.u32 %s227, 1
        %s369 = smul.addr %s368, 16
        %s370 = scalar_lea.vmem [#allocation8], %s369
        %s371 = smul.u32 2, %s25
        %p372 = scmp.lt.s32.totalorder %s371, 3
        %s373 = scalar_select %p372, %s371, 3
        %s374 = smul.addr %s373, 8
        %s375 = scalar_lea.vmem %s0, %s374
        %s376 = smul.u32 2, %s25
        %s377 = smul.u32 2, %s25
        %v379 = vld [vmem:[%s375] sm:$0xff]
        %v380 = vld [vmem:[%s375 + $0x8] sm:$0xff]
        %v381 = vld [vmem:[%s1] sm:$0xff]
        %383 = vset.pattern.permute.xlu0 0
        %384 = vperm.xlu0 %383, %v379
        %v385 = vpop.permute.xlu0 %384
        %388 = vset.pattern.permute.xlu0 0
        %389 = vperm.xlu0 %388, %v380
        %v390 = vpop.permute.xlu0 %389
        %v392 = vlaneseq
        %v393 = vshrl.u32 %v392, 7
        %v394 = vsub.s32 0, %v393
        %v395 = vrot.slane %v381, %v394
        %v396 = vmul.f32 %v385, %v395
        %v397 = vmul.f32 %v390, %v395
        %398 = vset.pattern.permute.xlu0 1
        %399 = vperm.xlu0 %398, %v379
        %v400 = vpop.permute.xlu0 %399
        %402 = vset.pattern.permute.xlu0 1
        %403 = vperm.xlu0 %402, %v380
        %v404 = vpop.permute.xlu0 %403
        %v406 = vlaneseq
        %v407 = vshrl.u32 %v406, 7
        %v408 = vsub.s32 1, %v407
        %v409 = vrot.slane %v381, %v408
        %v410 = vmul.f32 %v400, %v409
        %v411 = vmul.f32 %v404, %v409
        %v412 = vadd.f32 %v396, %v410
        %v413 = vadd.f32 %v397, %v411
        %414 = vset.pattern.permute.xlu0 2
        %415 = vperm.xlu0 %414, %v379
        %v416 = vpop.permute.xlu0 %415
        %418 = vset.pattern.permute.xlu0 2
        %419 = vperm.xlu0 %418, %v380
        %v420 = vpop.permute.xlu0 %419
        %v422 = vlaneseq
        %v423 = vshrl.u32 %v422, 7
        %v424 = vsub.s32 2, %v423
        %v425 = vrot.slane %v381, %v424
        %v426 = vmul.f32 %v416, %v425
        %v427 = vmul.f32 %v420, %v425
        %v428 = vadd.f32 %v412, %v426
        %v429 = vadd.f32 %v413, %v427
        %430 = vset.pattern.permute.xlu0 3
        %431 = vperm.xlu0 %430, %v379
        %v432 = vpop.permute.xlu0 %431
        %434 = vset.pattern.permute.xlu0 3
        %435 = vperm.xlu0 %434, %v380
        %v436 = vpop.permute.xlu0 %435
        %v438 = vlaneseq
        %v439 = vshrl.u32 %v438, 7
        %v440 = vsub.s32 3, %v439
        %v441 = vrot.slane %v381, %v440
        %v442 = vmul.f32 %v432, %v441
        %v443 = vmul.f32 %v436, %v441
        %v444 = vadd.f32 %v428, %v442
        %v445 = vadd.f32 %v429, %v443
        %446 = vset.pattern.permute.xlu0 4
        %447 = vperm.xlu0 %446, %v379
        %v448 = vpop.permute.xlu0 %447
        %450 = vset.pattern.permute.xlu0 4
        %451 = vperm.xlu0 %450, %v380
        %v452 = vpop.permute.xlu0 %451
        %v454 = vlaneseq
        %v455 = vshrl.u32 %v454, 7
        %v456 = vsub.s32 4, %v455
        %v457 = vrot.slane %v381, %v456
        %v458 = vmul.f32 %v448, %v457
        %v459 = vmul.f32 %v452, %v457
        %v460 = vadd.f32 %v444, %v458
        %v461 = vadd.f32 %v445, %v459
        %462 = vset.pattern.permute.xlu0 5
        %463 = vperm.xlu0 %462, %v379
        %v464 = vpop.permute.xlu0 %463
        %466 = vset.pattern.permute.xlu0 5
        %467 = vperm.xlu0 %466, %v380
        %v468 = vpop.permute.xlu0 %467
        %v470 = vlaneseq
        %v471 = vshrl.u32 %v470, 7
        %v472 = vsub.s32 5, %v471
        %v473 = vrot.slane %v381, %v472
        %v474 = vmul.f32 %v464, %v473
        %v475 = vmul.f32 %v468, %v473
        %v476 = vadd.f32 %v460, %v474
        %v477 = vadd.f32 %v461, %v475
        %478 = vset.pattern.permute.xlu0 6
        %479 = vperm.xlu0 %478, %v379
        %v480 = vpop.permute.xlu0 %479
        %482 = vset.pattern.permute.xlu0 6
        %483 = vperm.xlu0 %482, %v380
        %v484 = vpop.permute.xlu0 %483
        %v486 = vlaneseq
        %v487 = vshrl.u32 %v486, 7
        %v488 = vsub.s32 6, %v487
        %v489 = vrot.slane %v381, %v488
        %v490 = vmul.f32 %v480, %v489
        %v491 = vmul.f32 %v484, %v489
        %v492 = vadd.f32 %v476, %v490
        %v493 = vadd.f32 %v477, %v491
        %494 = vset.pattern.permute.xlu0 7
        %495 = vperm.xlu0 %494, %v379
        %v496 = vpop.permute.xlu0 %495
        %498 = vset.pattern.permute.xlu0 7
        %499 = vperm.xlu0 %498, %v380
        %v500 = vpop.permute.xlu0 %499
        %v502 = vlaneseq
        %v503 = vshrl.u32 %v502, 7
        %v504 = vsub.s32 7, %v503
        %v505 = vrot.slane %v381, %v504
        %v506 = vmul.f32 %v496, %v505
        %v507 = vmul.f32 %v500, %v505
        %v508 = vadd.f32 %v492, %v506
        %v509 = vadd.f32 %v493, %v507
        %v510 = vld [vmem:[%s2] sm:$0x1]
        %v512 = vlaneseq
        %v513 = vshrl.u32 %v512, 7
        %v514 = vsub.s32 0, %v513
        %v515 = vrot.slane %v510, %v514
        %v517 = vadd.f32 %v508, %v515
        %v518 = vadd.f32 %v509, %v515
        %v519 = vmax.f32 %v517, 0.0
        %v520 = vmax.f32 %v518, 0.0
        %v521 = vpack.c.bf16 %v520, %v519
        %v522 = vld [vmem:[#allocation2] sm:$0xff]
        %v523 = vld [vmem:[#allocation2 + $0x8] sm:$0xff]
        %v524 = vld [vmem:[#allocation2 + $0x10] sm:$0xff]
        %v525 = vld [vmem:[#allocation2 + $0x18] sm:$0xff]
        %v526 = vld [vmem:[#allocation2 + $0x20] sm:$0xff]
        %v527 = vld [vmem:[#allocation2 + $0x28] sm:$0xff]
        %v528 = vld [vmem:[#allocation2 + $0x30] sm:$0xff]
        %v529 = vld [vmem:[#allocation2 + $0x38] sm:$0xff]
        %v530 = vld [vmem:[#allocation2 + $0x40] sm:$0xff]
        %v531 = vld [vmem:[#allocation2 + $0x48] sm:$0xff]
        %v532 = vld [vmem:[#allocation2 + $0x50] sm:$0xff]
        %v533 = vld [vmem:[#allocation2 + $0x58] sm:$0xff]
        %v534 = vld [vmem:[#allocation2 + $0x60] sm:$0xff]
        %v535 = vld [vmem:[#allocation2 + $0x68] sm:$0xff]
        %v536 = vld [vmem:[#allocation2 + $0x70] sm:$0xff]
        %v537 = vld [vmem:[#allocation2 + $0x78] sm:$0xff]
        %v538 = vld [vmem:[#allocation2 + $0x80] sm:$0xff]
        %v539 = vld [vmem:[#allocation2 + $0x88] sm:$0xff]
        %v540 = vld [vmem:[#allocation2 + $0x90] sm:$0xff]
        %v541 = vld [vmem:[#allocation2 + $0x98] sm:$0xff]
        %v542 = vld [vmem:[#allocation2 + $0xa0] sm:$0xff]
        %v543 = vld [vmem:[#allocation2 + $0xa8] sm:$0xff]
        %v544 = vld [vmem:[#allocation2 + $0xb0] sm:$0xff]
        %v545 = vld [vmem:[#allocation2 + $0xb8] sm:$0xff]
        %v546 = vld [vmem:[#allocation2 + $0xc0] sm:$0xff]
        %v547 = vld [vmem:[#allocation2 + $0xc8] sm:$0xff]
        %v548 = vld [vmem:[#allocation2 + $0xd0] sm:$0xff]
        %v549 = vld [vmem:[#allocation2 + $0xd8] sm:$0xff]
        %v550 = vld [vmem:[#allocation2 + $0xe0] sm:$0xff]
        %v551 = vld [vmem:[#allocation2 + $0xe8] sm:$0xff]
        %v552 = vld [vmem:[#allocation2 + $0xf0] sm:$0xff]
        %v553 = vld [vmem:[#allocation2 + $0xf8] sm:$0xff]
        %v554 = vld [vmem:[%s4] sm:$0xf]
        %v556 = vlaneseq
        %v557 = vshrl.u32 %v556, 7
        %v558 = vsub.s32 0, %v557
        %v559 = vrot.slane %v554, %v558
        %v560 = vlaneseq
        %v561 = vshrl.u32 %v560, 7
        %v562 = vsub.s32 1, %v561
        %v563 = vrot.slane %v554, %v562
        %v564 = vlaneseq
        %v565 = vshrl.u32 %v564, 7
        %v566 = vsub.s32 2, %v565
        %v567 = vrot.slane %v554, %v566
        %v568 = vlaneseq
        %v569 = vshrl.u32 %v568, 7
        %v570 = vsub.s32 3, %v569
        %v571 = vrot.slane %v554, %v570
        %v608 = vunpack.c.l.b16 %v522
        %v609 = vunpack.c.h.b16 %v522
        %v610 = vunpack.c.l.b16 %v523
        %v611 = vunpack.c.h.b16 %v523
        %v612 = vunpack.c.l.b16 %v524
        %v613 = vunpack.c.h.b16 %v524
        %v614 = vunpack.c.l.b16 %v525
        %v615 = vunpack.c.h.b16 %v525
        %v616 = vunpack.c.l.b16 %v526
        %v617 = vunpack.c.h.b16 %v526
        %v618 = vunpack.c.l.b16 %v527
        %v619 = vunpack.c.h.b16 %v527
        %v620 = vunpack.c.l.b16 %v528
        %v621 = vunpack.c.h.b16 %v528
        %v622 = vunpack.c.l.b16 %v529
        %v623 = vunpack.c.h.b16 %v529
        %v624 = vunpack.c.l.b16 %v530
        %v625 = vunpack.c.h.b16 %v530
        %v626 = vunpack.c.l.b16 %v531
        %v627 = vunpack.c.h.b16 %v531
        %v628 = vunpack.c.l.b16 %v532
        %v629 = vunpack.c.h.b16 %v532
        %v630 = vunpack.c.l.b16 %v533
        %v631 = vunpack.c.h.b16 %v533
        %v632 = vunpack.c.l.b16 %v534
        %v633 = vunpack.c.h.b16 %v534
        %v634 = vunpack.c.l.b16 %v535
        %v635 = vunpack.c.h.b16 %v535
        %v636 = vunpack.c.l.b16 %v536
        %v637 = vunpack.c.h.b16 %v536
        %v638 = vunpack.c.l.b16 %v537
        %v639 = vunpack.c.h.b16 %v537
        %v640 = vunpack.c.l.b16 %v538
        %v641 = vunpack.c.h.b16 %v538
        %v642 = vunpack.c.l.b16 %v539
        %v643 = vunpack.c.h.b16 %v539
        %v644 = vunpack.c.l.b16 %v540
        %v645 = vunpack.c.h.b16 %v540
        %v646 = vunpack.c.l.b16 %v541
        %v647 = vunpack.c.h.b16 %v541
        %v648 = vunpack.c.l.b16 %v542
        %v649 = vunpack.c.h.b16 %v542
        %v650 = vunpack.c.l.b16 %v543
        %v651 = vunpack.c.h.b16 %v543
        %v652 = vunpack.c.l.b16 %v544
        %v653 = vunpack.c.h.b16 %v544
        %v654 = vunpack.c.l.b16 %v545
        %v655 = vunpack.c.h.b16 %v545
        %v656 = vunpack.c.l.b16 %v546
        %v657 = vunpack.c.h.b16 %v546
        %v658 = vunpack.c.l.b16 %v547
        %v659 = vunpack.c.h.b16 %v547
        %v660 = vunpack.c.l.b16 %v548
        %v661 = vunpack.c.h.b16 %v548
        %v662 = vunpack.c.l.b16 %v549
        %v663 = vunpack.c.h.b16 %v549
        %v664 = vunpack.c.l.b16 %v550
        %v665 = vunpack.c.h.b16 %v550
        %v666 = vunpack.c.l.b16 %v551
        %v667 = vunpack.c.h.b16 %v551
        %v668 = vunpack.c.l.b16 %v552
        %v669 = vunpack.c.h.b16 %v552
        %v670 = vunpack.c.l.b16 %v553
        %v671 = vunpack.c.h.b16 %v553
        %v672 = vpack.c.b16 %v612, %v608
        %v673 = vpack.c.b16 %v613, %v609
        %v674 = vpack.c.b16 %v614, %v610
        %v675 = vpack.c.b16 %v615, %v611
        %v676 = vpack.c.b16 %v620, %v616
        %v677 = vpack.c.b16 %v621, %v617
        %v678 = vpack.c.b16 %v622, %v618
        %v679 = vpack.c.b16 %v623, %v619
        %v680 = vpack.c.b16 %v628, %v624
        %v681 = vpack.c.b16 %v629, %v625
        %v682 = vpack.c.b16 %v630, %v626
        %v683 = vpack.c.b16 %v631, %v627
        %v684 = vpack.c.b16 %v636, %v632
        %v685 = vpack.c.b16 %v637, %v633
        %v686 = vpack.c.b16 %v638, %v634
        %v687 = vpack.c.b16 %v639, %v635
        %v688 = vpack.c.b16 %v644, %v640
        %v689 = vpack.c.b16 %v645, %v641
        %v690 = vpack.c.b16 %v646, %v642
        %v691 = vpack.c.b16 %v647, %v643
        %v692 = vpack.c.b16 %v652, %v648
        %v693 = vpack.c.b16 %v653, %v649
        %v694 = vpack.c.b16 %v654, %v650
        %v695 = vpack.c.b16 %v655, %v651
        %v696 = vpack.c.b16 %v660, %v656
        %v697 = vpack.c.b16 %v661, %v657
        %v698 = vpack.c.b16 %v662, %v658
        %v699 = vpack.c.b16 %v663, %v659
        %v700 = vpack.c.b16 %v668, %v664
        %v701 = vpack.c.b16 %v669, %v665
        %v702 = vpack.c.b16 %v670, %v666
        %v703 = vpack.c.b16 %v671, %v667
        %736 = vmatprep.subr.bf16.mxu0 %v673
        %737 = vmatpush1.bf16.msra.mxu0 %v672
        %738 = vmatprep.subr.bf16.mxu0 %v677
        %739 = vmatpush1.bf16.msra.mxu0 %v676
        %740 = vmatprep.subr.bf16.mxu0 %v681
        %741 = vmatpush1.bf16.msra.mxu0 %v680
        %742 = vmatprep.subr.bf16.mxu0 %v685
        %743 = vmatpush1.bf16.msra.mxu0 %v684
        %744 = vmatprep.subr.bf16.mxu0 %v689
        %745 = vmatpush1.bf16.msra.mxu0 %v688
        %746 = vmatprep.subr.bf16.mxu0 %v693
        %747 = vmatpush1.bf16.msra.mxu0 %v692
        %748 = vmatprep.subr.bf16.mxu0 %v697
        %749 = vmatpush1.bf16.msra.mxu0 %v696
        %750 = vmatprep.subr.bf16.mxu0 %v701
        %751 = vmatpush1.bf16.msra.mxu0 %v700
        %752 = vmatprep.subr.bf16.mxu0 0
        %753 = vmatpush1.bf16.msra.mxu0 0
        %754 = vmatprep.subr.bf16.mxu0 0
        %755 = vmatpush1.bf16.msra.mxu0 0
        %756 = vmatprep.subr.bf16.mxu0 0
        %757 = vmatpush1.bf16.msra.mxu0 0
        %758 = vmatprep.subr.bf16.mxu0 0
        %759 = vmatpush1.bf16.msra.mxu0 0
        %760 = vmatprep.subr.bf16.mxu0 0
        %761 = vmatpush1.bf16.msra.mxu0 0
        %762 = vmatprep.subr.bf16.mxu0 0
        %763 = vmatpush1.bf16.msra.mxu0 0
        %764 = vmatprep.subr.bf16.mxu0 0
        %765 = vmatpush1.bf16.msra.mxu0 0
        %766 = vmatprep.subr.bf16.mxu0 0
        %767 = vmatpush1.bf16.msra.mxu0 0
        %768 = vmatprep.mubr.bf16.mxu0 0
        %769 = vmatmul.mubr.bf16.gmra.mrb[0].mxu0 %v521
        %v770 = vpop.f32.mrb[0].mxu0
        %v771 = vadd.f32 %v559, %v770
        %v772 = vpop.f32.mrb[0].mxu0
        %v773 = vadd.f32 %v563, %v772
        %v774 = vpop.f32.mrb[0].mxu0
        %v775 = vadd.f32 %v559, %v774
        %v776 = vpop.f32.mrb[0].mxu0
        %v777 = vadd.f32 %v563, %v776
        %778 = vdwg.mxu0
        %779 = vmatprep.subr.bf16.mxu0 %v675
        %780 = vmatpush1.bf16.msra.mxu0 %v674
        %781 = vmatprep.subr.bf16.mxu0 %v679
        %782 = vmatpush1.bf16.msra.mxu0 %v678
        %783 = vmatprep.subr.bf16.mxu0 %v683
        %784 = vmatpush1.bf16.msra.mxu0 %v682
        %785 = vmatprep.subr.bf16.mxu0 %v687
        %786 = vmatpush1.bf16.msra.mxu0 %v686
        %787 = vmatprep.subr.bf16.mxu0 %v691
        %788 = vmatpush1.bf16.msra.mxu0 %v690
        %789 = vmatprep.subr.bf16.mxu0 %v695
        %790 = vmatpush1.bf16.msra.mxu0 %v694
        %791 = vmatprep.subr.bf16.mxu0 %v699
        %792 = vmatpush1.bf16.msra.mxu0 %v698
        %793 = vmatprep.subr.bf16.mxu0 %v703
        %794 = vmatpush1.bf16.msra.mxu0 %v702
        %795 = vmatprep.subr.bf16.mxu0 0
        %796 = vmatpush1.bf16.msra.mxu0 0
        %797 = vmatprep.subr.bf16.mxu0 0
        %798 = vmatpush1.bf16.msra.mxu0 0
        %799 = vmatprep.subr.bf16.mxu0 0
        %800 = vmatpush1.bf16.msra.mxu0 0
        %801 = vmatprep.subr.bf16.mxu0 0
        %802 = vmatpush1.bf16.msra.mxu0 0
        %803 = vmatprep.subr.bf16.mxu0 0
        %804 = vmatpush1.bf16.msra.mxu0 0
        %805 = vmatprep.subr.bf16.mxu0 0
        %806 = vmatpush1.bf16.msra.mxu0 0
        %807 = vmatprep.subr.bf16.mxu0 0
        %808 = vmatpush1.bf16.msra.mxu0 0
        %809 = vmatprep.subr.bf16.mxu0 0
        %810 = vmatpush1.bf16.msra.mxu0 0
        %811 = vmatprep.mubr.bf16.mxu0 0
        %812 = vmatmul.mubr.bf16.gmra.mrb[0].mxu0 %v521
        %v813 = vpop.f32.mrb[0].mxu0
        %v814 = vadd.f32 %v567, %v813
        %v815 = vpop.f32.mrb[0].mxu0
        %v816 = vadd.f32 %v571, %v815
        %v817 = vpop.f32.mrb[0].mxu0
        %v818 = vadd.f32 %v567, %v817
        %v819 = vpop.f32.mrb[0].mxu0
        %v820 = vadd.f32 %v571, %v819
        %821 = vdwg.mxu0
        %v822 = vmax.f32 %v771, 0.0
        %v823 = vmax.f32 %v773, 0.0
        %v824 = vmax.f32 %v814, 0.0
        %v825 = vmax.f32 %v816, 0.0
        %v826 = vmax.f32 %v775, 0.0
        %v827 = vmax.f32 %v777, 0.0
        %v828 = vmax.f32 %v818, 0.0
        %v829 = vmax.f32 %v820, 0.0
        %v830 = vpack.c.bf16 %v826, %v822
        %v831 = vpack.c.bf16 %v827, %v823
        %v832 = vpack.c.bf16 %v828, %v824
        %v833 = vpack.c.bf16 %v829, %v825
        %v834 = vld [vmem:[#allocation5] sm:$0xff]
        %v835 = vld [vmem:[#allocation5 + $0x8] sm:$0xff]
        %v836 = vld [vmem:[#allocation5 + $0x10] sm:$0xff]
        %v837 = vld [vmem:[#allocation5 + $0x18] sm:$0xff]
        %v838 = vld [vmem:[#allocation5 + $0x20] sm:$0xff]
        %v839 = vld [vmem:[#allocation5 + $0x28] sm:$0xff]
        %v840 = vld [vmem:[#allocation5 + $0x30] sm:$0xff]
        %v841 = vld [vmem:[#allocation5 + $0x38] sm:$0xff]
        %v842 = vld [vmem:[#allocation5 + $0x40] sm:$0xff]
        %v843 = vld [vmem:[#allocation5 + $0x48] sm:$0xff]
        %v844 = vld [vmem:[#allocation5 + $0x50] sm:$0xff]
        %v845 = vld [vmem:[#allocation5 + $0x58] sm:$0xff]
        %v846 = vld [vmem:[#allocation5 + $0x60] sm:$0xff]
        %v847 = vld [vmem:[#allocation5 + $0x68] sm:$0xff]
        %v848 = vld [vmem:[#allocation5 + $0x70] sm:$0xff]
        %v849 = vld [vmem:[#allocation5 + $0x78] sm:$0xff]
        %v850 = vld [vmem:[#allocation5 + $0x80] sm:$0xff]
        %v851 = vld [vmem:[#allocation5 + $0x88] sm:$0xff]
        %v852 = vld [vmem:[#allocation5 + $0x90] sm:$0xff]
        %v853 = vld [vmem:[#allocation5 + $0x98] sm:$0xff]
        %v854 = vld [vmem:[#allocation5 + $0xa0] sm:$0xff]
        %v855 = vld [vmem:[#allocation5 + $0xa8] sm:$0xff]
        %v856 = vld [vmem:[#allocation5 + $0xb0] sm:$0xff]
        %v857 = vld [vmem:[#allocation5 + $0xb8] sm:$0xff]
        %v858 = vld [vmem:[#allocation5 + $0xc0] sm:$0xff]
        %v859 = vld [vmem:[#allocation5 + $0xc8] sm:$0xff]
        %v860 = vld [vmem:[#allocation5 + $0xd0] sm:$0xff]
        %v861 = vld [vmem:[#allocation5 + $0xd8] sm:$0xff]
        %v862 = vld [vmem:[#allocation5 + $0xe0] sm:$0xff]
        %v863 = vld [vmem:[#allocation5 + $0xe8] sm:$0xff]
        %v864 = vld [vmem:[#allocation5 + $0xf0] sm:$0xff]
        %v865 = vld [vmem:[#allocation5 + $0xf8] sm:$0xff]
        %v866 = vld [vmem:[#allocation5 + $0x100] sm:$0xff]
        %v867 = vld [vmem:[#allocation5 + $0x108] sm:$0xff]
        %v868 = vld [vmem:[#allocation5 + $0x110] sm:$0xff]
        %v869 = vld [vmem:[#allocation5 + $0x118] sm:$0xff]
        %v870 = vld [vmem:[#allocation5 + $0x120] sm:$0xff]
        %v871 = vld [vmem:[#allocation5 + $0x128] sm:$0xff]
        %v872 = vld [vmem:[#allocation5 + $0x130] sm:$0xff]
        %v873 = vld [vmem:[#allocation5 + $0x138] sm:$0xff]
        %v874 = vld [vmem:[#allocation5 + $0x140] sm:$0xff]
        %v875 = vld [vmem:[#allocation5 + $0x148] sm:$0xff]
        %v876 = vld [vmem:[#allocation5 + $0x150] sm:$0xff]
        %v877 = vld [vmem:[#allocation5 + $0x158] sm:$0xff]
        %v878 = vld [vmem:[#allocation5 + $0x160] sm:$0xff]
        %v879 = vld [vmem:[#allocation5 + $0x168] sm:$0xff]
        %v880 = vld [vmem:[#allocation5 + $0x170] sm:$0xff]
        %v881 = vld [vmem:[#allocation5 + $0x178] sm:$0xff]
        %v882 = vld [vmem:[#allocation5 + $0x180] sm:$0xff]
        %v883 = vld [vmem:[#allocation5 + $0x188] sm:$0xff]
        %v884 = vld [vmem:[#allocation5 + $0x190] sm:$0xff]
        %v885 = vld [vmem:[#allocation5 + $0x198] sm:$0xff]
        %v886 = vld [vmem:[#allocation5 + $0x1a0] sm:$0xff]
        %v887 = vld [vmem:[#allocation5 + $0x1a8] sm:$0xff]
        %v888 = vld [vmem:[#allocation5 + $0x1b0] sm:$0xff]
        %v889 = vld [vmem:[#allocation5 + $0x1b8] sm:$0xff]
        %v890 = vld [vmem:[#allocation5 + $0x1c0] sm:$0xff]
        %v891 = vld [vmem:[#allocation5 + $0x1c8] sm:$0xff]
        %v892 = vld [vmem:[#allocation5 + $0x1d0] sm:$0xff]
        %v893 = vld [vmem:[#allocation5 + $0x1d8] sm:$0xff]
        %v894 = vld [vmem:[#allocation5 + $0x1e0] sm:$0xff]
        %v895 = vld [vmem:[#allocation5 + $0x1e8] sm:$0xff]
        %v896 = vld [vmem:[#allocation5 + $0x1f0] sm:$0xff]
        %v897 = vld [vmem:[#allocation5 + $0x1f8] sm:$0xff]
        %v898 = vld [vmem:[#allocation5 + $0x200] sm:$0xff]
        %v899 = vld [vmem:[#allocation5 + $0x208] sm:$0xff]
        %v900 = vld [vmem:[#allocation5 + $0x210] sm:$0xff]
        %v901 = vld [vmem:[#allocation5 + $0x218] sm:$0xff]
        %v902 = vld [vmem:[#allocation5 + $0x220] sm:$0xff]
        %v903 = vld [vmem:[#allocation5 + $0x228] sm:$0xff]
        %v904 = vld [vmem:[#allocation5 + $0x230] sm:$0xff]
        %v905 = vld [vmem:[#allocation5 + $0x238] sm:$0xff]
        %v906 = vld [vmem:[#allocation5 + $0x240] sm:$0xff]
        %v907 = vld [vmem:[#allocation5 + $0x248] sm:$0xff]
        %v908 = vld [vmem:[#allocation5 + $0x250] sm:$0xff]
        %v909 = vld [vmem:[#allocation5 + $0x258] sm:$0xff]
        %v910 = vld [vmem:[#allocation5 + $0x260] sm:$0xff]
        %v911 = vld [vmem:[#allocation5 + $0x268] sm:$0xff]
        %v912 = vld [vmem:[#allocation5 + $0x270] sm:$0xff]
        %v913 = vld [vmem:[#allocation5 + $0x278] sm:$0xff]
        %v914 = vld [vmem:[#allocation5 + $0x280] sm:$0xff]
        %v915 = vld [vmem:[#allocation5 + $0x288] sm:$0xff]
        %v916 = vld [vmem:[#allocation5 + $0x290] sm:$0xff]
        %v917 = vld [vmem:[#allocation5 + $0x298] sm:$0xff]
        %v918 = vld [vmem:[#allocation5 + $0x2a0] sm:$0xff]
        %v919 = vld [vmem:[#allocation5 + $0x2a8] sm:$0xff]
        %v920 = vld [vmem:[#allocation5 + $0x2b0] sm:$0xff]
        %v921 = vld [vmem:[#allocation5 + $0x2b8] sm:$0xff]
        %v922 = vld [vmem:[#allocation5 + $0x2c0] sm:$0xff]
        %v923 = vld [vmem:[#allocation5 + $0x2c8] sm:$0xff]
        %v924 = vld [vmem:[#allocation5 + $0x2d0] sm:$0xff]
        %v925 = vld [vmem:[#allocation5 + $0x2d8] sm:$0xff]
        %v926 = vld [vmem:[#allocation5 + $0x2e0] sm:$0xff]
        %v927 = vld [vmem:[#allocation5 + $0x2e8] sm:$0xff]
        %v928 = vld [vmem:[#allocation5 + $0x2f0] sm:$0xff]
        %v929 = vld [vmem:[#allocation5 + $0x2f8] sm:$0xff]
        %v930 = vld [vmem:[#allocation5 + $0x300] sm:$0xff]
        %v931 = vld [vmem:[#allocation5 + $0x308] sm:$0xff]
        %v932 = vld [vmem:[#allocation5 + $0x310] sm:$0xff]
        %v933 = vld [vmem:[#allocation5 + $0x318] sm:$0xff]
        %v934 = vld [vmem:[#allocation5 + $0x320] sm:$0xff]
        %v935 = vld [vmem:[#allocation5 + $0x328] sm:$0xff]
        %v936 = vld [vmem:[#allocation5 + $0x330] sm:$0xff]
        %v937 = vld [vmem:[#allocation5 + $0x338] sm:$0xff]
        %v938 = vld [vmem:[#allocation5 + $0x340] sm:$0xff]
        %v939 = vld [vmem:[#allocation5 + $0x348] sm:$0xff]
        %v940 = vld [vmem:[#allocation5 + $0x350] sm:$0xff]
        %v941 = vld [vmem:[#allocation5 + $0x358] sm:$0xff]
        %v942 = vld [vmem:[#allocation5 + $0x360] sm:$0xff]
        %v943 = vld [vmem:[#allocation5 + $0x368] sm:$0xff]
        %v944 = vld [vmem:[#allocation5 + $0x370] sm:$0xff]
        %v945 = vld [vmem:[#allocation5 + $0x378] sm:$0xff]
        %v946 = vld [vmem:[#allocation5 + $0x380] sm:$0xff]
        %v947 = vld [vmem:[#allocation5 + $0x388] sm:$0xff]
        %v948 = vld [vmem:[#allocation5 + $0x390] sm:$0xff]
        %v949 = vld [vmem:[#allocation5 + $0x398] sm:$0xff]
        %v950 = vld [vmem:[#allocation5 + $0x3a0] sm:$0xff]
        %v951 = vld [vmem:[#allocation5 + $0x3a8] sm:$0xff]
        %v952 = vld [vmem:[#allocation5 + $0x3b0] sm:$0xff]
        %v953 = vld [vmem:[#allocation5 + $0x3b8] sm:$0xff]
        %v954 = vld [vmem:[#allocation5 + $0x3c0] sm:$0xff]
        %v955 = vld [vmem:[#allocation5 + $0x3c8] sm:$0xff]
        %v956 = vld [vmem:[#allocation5 + $0x3d0] sm:$0xff]
        %v957 = vld [vmem:[#allocation5 + $0x3d8] sm:$0xff]
        %v958 = vld [vmem:[#allocation5 + $0x3e0] sm:$0xff]
        %v959 = vld [vmem:[#allocation5 + $0x3e8] sm:$0xff]
        %v960 = vld [vmem:[#allocation5 + $0x3f0] sm:$0xff]
        %v961 = vld [vmem:[#allocation5 + $0x3f8] sm:$0xff]
        %v962 = vld [vmem:[#allocation5 + $0x400] sm:$0xff]
        %v963 = vld [vmem:[#allocation5 + $0x408] sm:$0xff]
        %v964 = vld [vmem:[#allocation5 + $0x410] sm:$0xff]
        %v965 = vld [vmem:[#allocation5 + $0x418] sm:$0xff]
        %v966 = vld [vmem:[#allocation5 + $0x420] sm:$0xff]
        %v967 = vld [vmem:[#allocation5 + $0x428] sm:$0xff]
        %v968 = vld [vmem:[#allocation5 + $0x430] sm:$0xff]
        %v969 = vld [vmem:[#allocation5 + $0x438] sm:$0xff]
        %v970 = vld [vmem:[#allocation5 + $0x440] sm:$0xff]
        %v971 = vld [vmem:[#allocation5 + $0x448] sm:$0xff]
        %v972 = vld [vmem:[#allocation5 + $0x450] sm:$0xff]
        %v973 = vld [vmem:[#allocation5 + $0x458] sm:$0xff]
        %v974 = vld [vmem:[#allocation5 + $0x460] sm:$0xff]
        %v975 = vld [vmem:[#allocation5 + $0x468] sm:$0xff]
        %v976 = vld [vmem:[#allocation5 + $0x470] sm:$0xff]
        %v977 = vld [vmem:[#allocation5 + $0x478] sm:$0xff]
        %v978 = vld [vmem:[#allocation5 + $0x480] sm:$0xff]
        %v979 = vld [vmem:[#allocation5 + $0x488] sm:$0xff]
        %v980 = vld [vmem:[#allocation5 + $0x490] sm:$0xff]
        %v981 = vld [vmem:[#allocation5 + $0x498] sm:$0xff]
        %v982 = vld [vmem:[#allocation5 + $0x4a0] sm:$0xff]
        %v983 = vld [vmem:[#allocation5 + $0x4a8] sm:$0xff]
        %v984 = vld [vmem:[#allocation5 + $0x4b0] sm:$0xff]
        %v985 = vld [vmem:[#allocation5 + $0x4b8] sm:$0xff]
        %v986 = vld [vmem:[#allocation5 + $0x4c0] sm:$0xff]
        %v987 = vld [vmem:[#allocation5 + $0x4c8] sm:$0xff]
        %v988 = vld [vmem:[#allocation5 + $0x4d0] sm:$0xff]
        %v989 = vld [vmem:[#allocation5 + $0x4d8] sm:$0xff]
        %v990 = vld [vmem:[#allocation5 + $0x4e0] sm:$0xff]
        %v991 = vld [vmem:[#allocation5 + $0x4e8] sm:$0xff]
        %v992 = vld [vmem:[#allocation5 + $0x4f0] sm:$0xff]
        %v993 = vld [vmem:[#allocation5 + $0x4f8] sm:$0xff]
        %v994 = vld [vmem:[#allocation5 + $0x500] sm:$0xff]
        %v995 = vld [vmem:[#allocation5 + $0x508] sm:$0xff]
        %v996 = vld [vmem:[#allocation5 + $0x510] sm:$0xff]
        %v997 = vld [vmem:[#allocation5 + $0x518] sm:$0xff]
        %v998 = vld [vmem:[#allocation5 + $0x520] sm:$0xff]
        %v999 = vld [vmem:[#allocation5 + $0x528] sm:$0xff]
        %v1000 = vld [vmem:[#allocation5 + $0x530] sm:$0xff]
        %v1001 = vld [vmem:[#allocation5 + $0x538] sm:$0xff]
        %v1002 = vld [vmem:[#allocation5 + $0x540] sm:$0xff]
        %v1003 = vld [vmem:[#allocation5 + $0x548] sm:$0xff]
        %v1004 = vld [vmem:[#allocation5 + $0x550] sm:$0xff]
        %v1005 = vld [vmem:[#allocation5 + $0x558] sm:$0xff]
        %v1006 = vld [vmem:[#allocation5 + $0x560] sm:$0xff]
        %v1007 = vld [vmem:[#allocation5 + $0x568] sm:$0xff]
        %v1008 = vld [vmem:[#allocation5 + $0x570] sm:$0xff]
        %v1009 = vld [vmem:[#allocation5 + $0x578] sm:$0xff]
        %v1010 = vld [vmem:[#allocation5 + $0x580] sm:$0xff]
        %v1011 = vld [vmem:[#allocation5 + $0x588] sm:$0xff]
        %v1012 = vld [vmem:[#allocation5 + $0x590] sm:$0xff]
        %v1013 = vld [vmem:[#allocation5 + $0x598] sm:$0xff]
        %v1014 = vld [vmem:[#allocation5 + $0x5a0] sm:$0xff]
        %v1015 = vld [vmem:[#allocation5 + $0x5a8] sm:$0xff]
        %v1016 = vld [vmem:[#allocation5 + $0x5b0] sm:$0xff]
        %v1017 = vld [vmem:[#allocation5 + $0x5b8] sm:$0xff]
        %v1018 = vld [vmem:[#allocation5 + $0x5c0] sm:$0xff]
        %v1019 = vld [vmem:[#allocation5 + $0x5c8] sm:$0xff]
        %v1020 = vld [vmem:[#allocation5 + $0x5d0] sm:$0xff]
        %v1021 = vld [vmem:[#allocation5 + $0x5d8] sm:$0xff]
        %v1022 = vld [vmem:[#allocation5 + $0x5e0] sm:$0xff]
        %v1023 = vld [vmem:[#allocation5 + $0x5e8] sm:$0xff]
        %v1024 = vld [vmem:[#allocation5 + $0x5f0] sm:$0xff]
        %v1025 = vld [vmem:[#allocation5 + $0x5f8] sm:$0xff]
        %v1026 = vld [vmem:[#allocation5 + $0x600] sm:$0xff]
        %v1027 = vld [vmem:[#allocation5 + $0x608] sm:$0xff]
        %v1028 = vld [vmem:[#allocation5 + $0x610] sm:$0xff]
        %v1029 = vld [vmem:[#allocation5 + $0x618] sm:$0xff]
        %v1030 = vld [vmem:[#allocation5 + $0x620] sm:$0xff]
        %v1031 = vld [vmem:[#allocation5 + $0x628] sm:$0xff]
        %v1032 = vld [vmem:[#allocation5 + $0x630] sm:$0xff]
        %v1033 = vld [vmem:[#allocation5 + $0x638] sm:$0xff]
        %v1034 = vld [vmem:[#allocation5 + $0x640] sm:$0xff]
        %v1035 = vld [vmem:[#allocation5 + $0x648] sm:$0xff]
        %v1036 = vld [vmem:[#allocation5 + $0x650] sm:$0xff]
        %v1037 = vld [vmem:[#allocation5 + $0x658] sm:$0xff]
        %v1038 = vld [vmem:[#allocation5 + $0x660] sm:$0xff]
        %v1039 = vld [vmem:[#allocation5 + $0x668] sm:$0xff]
        %v1040 = vld [vmem:[#allocation5 + $0x670] sm:$0xff]
        %v1041 = vld [vmem:[#allocation5 + $0x678] sm:$0xff]
        %v1042 = vld [vmem:[#allocation5 + $0x680] sm:$0xff]
        %v1043 = vld [vmem:[#allocation5 + $0x688] sm:$0xff]
        %v1044 = vld [vmem:[#allocation5 + $0x690] sm:$0xff]
        %v1045 = vld [vmem:[#allocation5 + $0x698] sm:$0xff]
        %v1046 = vld [vmem:[#allocation5 + $0x6a0] sm:$0xff]
        %v1047 = vld [vmem:[#allocation5 + $0x6a8] sm:$0xff]
        %v1048 = vld [vmem:[#allocation5 + $0x6b0] sm:$0xff]
        %v1049 = vld [vmem:[#allocation5 + $0x6b8] sm:$0xff]
        %v1050 = vld [vmem:[#allocation5 + $0x6c0] sm:$0xff]
        %v1051 = vld [vmem:[#allocation5 + $0x6c8] sm:$0xff]
        %v1052 = vld [vmem:[#allocation5 + $0x6d0] sm:$0xff]
        %v1053 = vld [vmem:[#allocation5 + $0x6d8] sm:$0xff]
        %v1054 = vld [vmem:[#allocation5 + $0x6e0] sm:$0xff]
        %v1055 = vld [vmem:[#allocation5 + $0x6e8] sm:$0xff]
        %v1056 = vld [vmem:[#allocation5 + $0x6f0] sm:$0xff]
        %v1057 = vld [vmem:[#allocation5 + $0x6f8] sm:$0xff]
        %v1058 = vld [vmem:[#allocation5 + $0x700] sm:$0xff]
        %v1059 = vld [vmem:[#allocation5 + $0x708] sm:$0xff]
        %v1060 = vld [vmem:[#allocation5 + $0x710] sm:$0xff]
        %v1061 = vld [vmem:[#allocation5 + $0x718] sm:$0xff]
        %v1062 = vld [vmem:[#allocation5 + $0x720] sm:$0xff]
        %v1063 = vld [vmem:[#allocation5 + $0x728] sm:$0xff]
        %v1064 = vld [vmem:[#allocation5 + $0x730] sm:$0xff]
        %v1065 = vld [vmem:[#allocation5 + $0x738] sm:$0xff]
        %v1066 = vld [vmem:[#allocation5 + $0x740] sm:$0xff]
        %v1067 = vld [vmem:[#allocation5 + $0x748] sm:$0xff]
        %v1068 = vld [vmem:[#allocation5 + $0x750] sm:$0xff]
        %v1069 = vld [vmem:[#allocation5 + $0x758] sm:$0xff]
        %v1070 = vld [vmem:[#allocation5 + $0x760] sm:$0xff]
        %v1071 = vld [vmem:[#allocation5 + $0x768] sm:$0xff]
        %v1072 = vld [vmem:[#allocation5 + $0x770] sm:$0xff]
        %v1073 = vld [vmem:[#allocation5 + $0x778] sm:$0xff]
        %v1074 = vld [vmem:[#allocation5 + $0x780] sm:$0xff]
        %v1075 = vld [vmem:[#allocation5 + $0x788] sm:$0xff]
        %v1076 = vld [vmem:[#allocation5 + $0x790] sm:$0xff]
        %v1077 = vld [vmem:[#allocation5 + $0x798] sm:$0xff]
        %v1078 = vld [vmem:[#allocation5 + $0x7a0] sm:$0xff]
        %v1079 = vld [vmem:[#allocation5 + $0x7a8] sm:$0xff]
        %v1080 = vld [vmem:[#allocation5 + $0x7b0] sm:$0xff]
        %v1081 = vld [vmem:[#allocation5 + $0x7b8] sm:$0xff]
        %v1082 = vld [vmem:[#allocation5 + $0x7c0] sm:$0xff]
        %v1083 = vld [vmem:[#allocation5 + $0x7c8] sm:$0xff]
        %v1084 = vld [vmem:[#allocation5 + $0x7d0] sm:$0xff]
        %v1085 = vld [vmem:[#allocation5 + $0x7d8] sm:$0xff]
        %v1086 = vld [vmem:[#allocation5 + $0x7e0] sm:$0xff]
        %v1087 = vld [vmem:[#allocation5 + $0x7e8] sm:$0xff]
        %v1088 = vld [vmem:[#allocation5 + $0x7f0] sm:$0xff]
        %v1089 = vld [vmem:[#allocation5 + $0x7f8] sm:$0xff]
        %v1090 = vld [vmem:[%s6] sm:$0xff]
        %v1092 = vlaneseq
        %v1093 = vshrl.u32 %v1092, 7
        %v1094 = vsub.s32 0, %v1093
        %v1095 = vrot.slane %v1090, %v1094
        %v1096 = vlaneseq
        %v1097 = vshrl.u32 %v1096, 7
        %v1098 = vsub.s32 1, %v1097
        %v1099 = vrot.slane %v1090, %v1098
        %v1100 = vlaneseq
        %v1101 = vshrl.u32 %v1100, 7
        %v1102 = vsub.s32 2, %v1101
        %v1103 = vrot.slane %v1090, %v1102
        %v1104 = vlaneseq
        %v1105 = vshrl.u32 %v1104, 7
        %v1106 = vsub.s32 3, %v1105
        %v1107 = vrot.slane %v1090, %v1106
        %v1108 = vlaneseq
        %v1109 = vshrl.u32 %v1108, 7
        %v1110 = vsub.s32 4, %v1109
        %v1111 = vrot.slane %v1090, %v1110
        %v1112 = vlaneseq
        %v1113 = vshrl.u32 %v1112, 7
        %v1114 = vsub.s32 5, %v1113
        %v1115 = vrot.slane %v1090, %v1114
        %v1116 = vlaneseq
        %v1117 = vshrl.u32 %v1116, 7
        %v1118 = vsub.s32 6, %v1117
        %v1119 = vrot.slane %v1090, %v1118
        %v1120 = vlaneseq
        %v1121 = vshrl.u32 %v1120, 7
        %v1122 = vsub.s32 7, %v1121
        %v1123 = vrot.slane %v1090, %v1122
        %v1388 = vunpack.c.l.b16 %v834
        %v1389 = vunpack.c.h.b16 %v834
        %v1390 = vunpack.c.l.b16 %v835
        %v1391 = vunpack.c.h.b16 %v835
        %v1392 = vunpack.c.l.b16 %v836
        %v1393 = vunpack.c.h.b16 %v836
        %v1394 = vunpack.c.l.b16 %v837
        %v1395 = vunpack.c.h.b16 %v837
        %v1396 = vunpack.c.l.b16 %v838
        %v1397 = vunpack.c.h.b16 %v838
        %v1398 = vunpack.c.l.b16 %v839
        %v1399 = vunpack.c.h.b16 %v839
        %v1400 = vunpack.c.l.b16 %v840
        %v1401 = vunpack.c.h.b16 %v840
        %v1402 = vunpack.c.l.b16 %v841
        %v1403 = vunpack.c.h.b16 %v841
        %v1404 = vunpack.c.l.b16 %v842
        %v1405 = vunpack.c.h.b16 %v842
        %v1406 = vunpack.c.l.b16 %v843
        %v1407 = vunpack.c.h.b16 %v843
        %v1408 = vunpack.c.l.b16 %v844
        %v1409 = vunpack.c.h.b16 %v844
        %v1410 = vunpack.c.l.b16 %v845
        %v1411 = vunpack.c.h.b16 %v845
        %v1412 = vunpack.c.l.b16 %v846
        %v1413 = vunpack.c.h.b16 %v846
        %v1414 = vunpack.c.l.b16 %v847
        %v1415 = vunpack.c.h.b16 %v847
        %v1416 = vunpack.c.l.b16 %v848
        %v1417 = vunpack.c.h.b16 %v848
        %v1418 = vunpack.c.l.b16 %v849
        %v1419 = vunpack.c.h.b16 %v849
        %v1420 = vunpack.c.l.b16 %v850
        %v1421 = vunpack.c.h.b16 %v850
        %v1422 = vunpack.c.l.b16 %v851
        %v1423 = vunpack.c.h.b16 %v851
        %v1424 = vunpack.c.l.b16 %v852
        %v1425 = vunpack.c.h.b16 %v852
        %v1426 = vunpack.c.l.b16 %v853
        %v1427 = vunpack.c.h.b16 %v853
        %v1428 = vunpack.c.l.b16 %v854
        %v1429 = vunpack.c.h.b16 %v854
        %v1430 = vunpack.c.l.b16 %v855
        %v1431 = vunpack.c.h.b16 %v855
        %v1432 = vunpack.c.l.b16 %v856
        %v1433 = vunpack.c.h.b16 %v856
        %v1434 = vunpack.c.l.b16 %v857
        %v1435 = vunpack.c.h.b16 %v857
        %v1436 = vunpack.c.l.b16 %v858
        %v1437 = vunpack.c.h.b16 %v858
        %v1438 = vunpack.c.l.b16 %v859
        %v1439 = vunpack.c.h.b16 %v859
        %v1440 = vunpack.c.l.b16 %v860
        %v1441 = vunpack.c.h.b16 %v860
        %v1442 = vunpack.c.l.b16 %v861
        %v1443 = vunpack.c.h.b16 %v861
        %v1444 = vunpack.c.l.b16 %v862
        %v1445 = vunpack.c.h.b16 %v862
        %v1446 = vunpack.c.l.b16 %v863
        %v1447 = vunpack.c.h.b16 %v863
        %v1448 = vunpack.c.l.b16 %v864
        %v1449 = vunpack.c.h.b16 %v864
        %v1450 = vunpack.c.l.b16 %v865
        %v1451 = vunpack.c.h.b16 %v865
        %v1452 = vunpack.c.l.b16 %v866
        %v1453 = vunpack.c.h.b16 %v866
        %v1454 = vunpack.c.l.b16 %v867
        %v1455 = vunpack.c.h.b16 %v867
        %v1456 = vunpack.c.l.b16 %v868
        %v1457 = vunpack.c.h.b16 %v868
        %v1458 = vunpack.c.l.b16 %v869
        %v1459 = vunpack.c.h.b16 %v869
        %v1460 = vunpack.c.l.b16 %v870
        %v1461 = vunpack.c.h.b16 %v870
        %v1462 = vunpack.c.l.b16 %v871
        %v1463 = vunpack.c.h.b16 %v871
        %v1464 = vunpack.c.l.b16 %v872
        %v1465 = vunpack.c.h.b16 %v872
        %v1466 = vunpack.c.l.b16 %v873
        %v1467 = vunpack.c.h.b16 %v873
        %v1468 = vunpack.c.l.b16 %v874
        %v1469 = vunpack.c.h.b16 %v874
        %v1470 = vunpack.c.l.b16 %v875
        %v1471 = vunpack.c.h.b16 %v875
        %v1472 = vunpack.c.l.b16 %v876
        %v1473 = vunpack.c.h.b16 %v876
        %v1474 = vunpack.c.l.b16 %v877
        %v1475 = vunpack.c.h.b16 %v877
        %v1476 = vunpack.c.l.b16 %v878
        %v1477 = vunpack.c.h.b16 %v878
        %v1478 = vunpack.c.l.b16 %v879
        %v1479 = vunpack.c.h.b16 %v879
        %v1480 = vunpack.c.l.b16 %v880
        %v1481 = vunpack.c.h.b16 %v880
        %v1482 = vunpack.c.l.b16 %v881
        %v1483 = vunpack.c.h.b16 %v881
        %v1484 = vunpack.c.l.b16 %v882
        %v1485 = vunpack.c.h.b16 %v882
        %v1486 = vunpack.c.l.b16 %v883
        %v1487 = vunpack.c.h.b16 %v883
        %v1488 = vunpack.c.l.b16 %v884
        %v1489 = vunpack.c.h.b16 %v884
        %v1490 = vunpack.c.l.b16 %v885
        %v1491 = vunpack.c.h.b16 %v885
        %v1492 = vunpack.c.l.b16 %v886
        %v1493 = vunpack.c.h.b16 %v886
        %v1494 = vunpack.c.l.b16 %v887
        %v1495 = vunpack.c.h.b16 %v887
        %v1496 = vunpack.c.l.b16 %v888
        %v1497 = vunpack.c.h.b16 %v888
        %v1498 = vunpack.c.l.b16 %v889
        %v1499 = vunpack.c.h.b16 %v889
        %v1500 = vunpack.c.l.b16 %v890
        %v1501 = vunpack.c.h.b16 %v890
        %v1502 = vunpack.c.l.b16 %v891
        %v1503 = vunpack.c.h.b16 %v891
        %v1504 = vunpack.c.l.b16 %v892
        %v1505 = vunpack.c.h.b16 %v892
        %v1506 = vunpack.c.l.b16 %v893
        %v1507 = vunpack.c.h.b16 %v893
        %v1508 = vunpack.c.l.b16 %v894
        %v1509 = vunpack.c.h.b16 %v894
        %v1510 = vunpack.c.l.b16 %v895
        %v1511 = vunpack.c.h.b16 %v895
        %v1512 = vunpack.c.l.b16 %v896
        %v1513 = vunpack.c.h.b16 %v896
        %v1514 = vunpack.c.l.b16 %v897
        %v1515 = vunpack.c.h.b16 %v897
        %v1516 = vunpack.c.l.b16 %v898
        %v1517 = vunpack.c.h.b16 %v898
        %v1518 = vunpack.c.l.b16 %v899
        %v1519 = vunpack.c.h.b16 %v899
        %v1520 = vunpack.c.l.b16 %v900
        %v1521 = vunpack.c.h.b16 %v900
        %v1522 = vunpack.c.l.b16 %v901
        %v1523 = vunpack.c.h.b16 %v901
        %v1524 = vunpack.c.l.b16 %v902
        %v1525 = vunpack.c.h.b16 %v902
        %v1526 = vunpack.c.l.b16 %v903
        %v1527 = vunpack.c.h.b16 %v903
        %v1528 = vunpack.c.l.b16 %v904
        %v1529 = vunpack.c.h.b16 %v904
        %v1530 = vunpack.c.l.b16 %v905
        %v1531 = vunpack.c.h.b16 %v905
        %v1532 = vunpack.c.l.b16 %v906
        %v1533 = vunpack.c.h.b16 %v906
        %v1534 = vunpack.c.l.b16 %v907
        %v1535 = vunpack.c.h.b16 %v907
        %v1536 = vunpack.c.l.b16 %v908
        %v1537 = vunpack.c.h.b16 %v908
        %v1538 = vunpack.c.l.b16 %v909
        %v1539 = vunpack.c.h.b16 %v909
        %v1540 = vunpack.c.l.b16 %v910
        %v1541 = vunpack.c.h.b16 %v910
        %v1542 = vunpack.c.l.b16 %v911
        %v1543 = vunpack.c.h.b16 %v911
        %v1544 = vunpack.c.l.b16 %v912
        %v1545 = vunpack.c.h.b16 %v912
        %v1546 = vunpack.c.l.b16 %v913
        %v1547 = vunpack.c.h.b16 %v913
        %v1548 = vunpack.c.l.b16 %v914
        %v1549 = vunpack.c.h.b16 %v914
        %v1550 = vunpack.c.l.b16 %v915
        %v1551 = vunpack.c.h.b16 %v915
        %v1552 = vunpack.c.l.b16 %v916
        %v1553 = vunpack.c.h.b16 %v916
        %v1554 = vunpack.c.l.b16 %v917
        %v1555 = vunpack.c.h.b16 %v917
        %v1556 = vunpack.c.l.b16 %v918
        %v1557 = vunpack.c.h.b16 %v918
        %v1558 = vunpack.c.l.b16 %v919
        %v1559 = vunpack.c.h.b16 %v919
        %v1560 = vunpack.c.l.b16 %v920
        %v1561 = vunpack.c.h.b16 %v920
        %v1562 = vunpack.c.l.b16 %v921
        %v1563 = vunpack.c.h.b16 %v921
        %v1564 = vunpack.c.l.b16 %v922
        %v1565 = vunpack.c.h.b16 %v922
        %v1566 = vunpack.c.l.b16 %v923
        %v1567 = vunpack.c.h.b16 %v923
        %v1568 = vunpack.c.l.b16 %v924
        %v1569 = vunpack.c.h.b16 %v924
        %v1570 = vunpack.c.l.b16 %v925
        %v1571 = vunpack.c.h.b16 %v925
        %v1572 = vunpack.c.l.b16 %v926
        %v1573 = vunpack.c.h.b16 %v926
        %v1574 = vunpack.c.l.b16 %v927
        %v1575 = vunpack.c.h.b16 %v927
        %v1576 = vunpack.c.l.b16 %v928
        %v1577 = vunpack.c.h.b16 %v928
        %v1578 = vunpack.c.l.b16 %v929
        %v1579 = vunpack.c.h.b16 %v929
        %v1580 = vunpack.c.l.b16 %v930
        %v1581 = vunpack.c.h.b16 %v930
        %v1582 = vunpack.c.l.b16 %v931
        %v1583 = vunpack.c.h.b16 %v931
        %v1584 = vunpack.c.l.b16 %v932
        %v1585 = vunpack.c.h.b16 %v932
        %v1586 = vunpack.c.l.b16 %v933
        %v1587 = vunpack.c.h.b16 %v933
        %v1588 = vunpack.c.l.b16 %v934
        %v1589 = vunpack.c.h.b16 %v934
        %v1590 = vunpack.c.l.b16 %v935
        %v1591 = vunpack.c.h.b16 %v935
        %v1592 = vunpack.c.l.b16 %v936
        %v1593 = vunpack.c.h.b16 %v936
        %v1594 = vunpack.c.l.b16 %v937
        %v1595 = vunpack.c.h.b16 %v937
        %v1596 = vunpack.c.l.b16 %v938
        %v1597 = vunpack.c.h.b16 %v938
        %v1598 = vunpack.c.l.b16 %v939
        %v1599 = vunpack.c.h.b16 %v939
        %v1600 = vunpack.c.l.b16 %v940
        %v1601 = vunpack.c.h.b16 %v940
        %v1602 = vunpack.c.l.b16 %v941
        %v1603 = vunpack.c.h.b16 %v941
        %v1604 = vunpack.c.l.b16 %v942
        %v1605 = vunpack.c.h.b16 %v942
        %v1606 = vunpack.c.l.b16 %v943
        %v1607 = vunpack.c.h.b16 %v943
        %v1608 = vunpack.c.l.b16 %v944
        %v1609 = vunpack.c.h.b16 %v944
        %v1610 = vunpack.c.l.b16 %v945
        %v1611 = vunpack.c.h.b16 %v945
        %v1612 = vunpack.c.l.b16 %v946
        %v1613 = vunpack.c.h.b16 %v946
        %v1614 = vunpack.c.l.b16 %v947
        %v1615 = vunpack.c.h.b16 %v947
        %v1616 = vunpack.c.l.b16 %v948
        %v1617 = vunpack.c.h.b16 %v948
        %v1618 = vunpack.c.l.b16 %v949
        %v1619 = vunpack.c.h.b16 %v949
        %v1620 = vunpack.c.l.b16 %v950
        %v1621 = vunpack.c.h.b16 %v950
        %v1622 = vunpack.c.l.b16 %v951
        %v1623 = vunpack.c.h.b16 %v951
        %v1624 = vunpack.c.l.b16 %v952
        %v1625 = vunpack.c.h.b16 %v952
        %v1626 = vunpack.c.l.b16 %v953
        %v1627 = vunpack.c.h.b16 %v953
        %v1628 = vunpack.c.l.b16 %v954
        %v1629 = vunpack.c.h.b16 %v954
        %v1630 = vunpack.c.l.b16 %v955
        %v1631 = vunpack.c.h.b16 %v955
        %v1632 = vunpack.c.l.b16 %v956
        %v1633 = vunpack.c.h.b16 %v956
        %v1634 = vunpack.c.l.b16 %v957
        %v1635 = vunpack.c.h.b16 %v957
        %v1636 = vunpack.c.l.b16 %v958
        %v1637 = vunpack.c.h.b16 %v958
        %v1638 = vunpack.c.l.b16 %v959
        %v1639 = vunpack.c.h.b16 %v959
        %v1640 = vunpack.c.l.b16 %v960
        %v1641 = vunpack.c.h.b16 %v960
        %v1642 = vunpack.c.l.b16 %v961
        %v1643 = vunpack.c.h.b16 %v961
        %v1644 = vunpack.c.l.b16 %v962
        %v1645 = vunpack.c.h.b16 %v962
        %v1646 = vunpack.c.l.b16 %v963
        %v1647 = vunpack.c.h.b16 %v963
        %v1648 = vunpack.c.l.b16 %v964
        %v1649 = vunpack.c.h.b16 %v964
        %v1650 = vunpack.c.l.b16 %v965
        %v1651 = vunpack.c.h.b16 %v965
        %v1652 = vunpack.c.l.b16 %v966
        %v1653 = vunpack.c.h.b16 %v966
        %v1654 = vunpack.c.l.b16 %v967
        %v1655 = vunpack.c.h.b16 %v967
        %v1656 = vunpack.c.l.b16 %v968
        %v1657 = vunpack.c.h.b16 %v968
        %v1658 = vunpack.c.l.b16 %v969
        %v1659 = vunpack.c.h.b16 %v969
        %v1660 = vunpack.c.l.b16 %v970
        %v1661 = vunpack.c.h.b16 %v970
        %v1662 = vunpack.c.l.b16 %v971
        %v1663 = vunpack.c.h.b16 %v971
        %v1664 = vunpack.c.l.b16 %v972
        %v1665 = vunpack.c.h.b16 %v972
        %v1666 = vunpack.c.l.b16 %v973
        %v1667 = vunpack.c.h.b16 %v973
        %v1668 = vunpack.c.l.b16 %v974
        %v1669 = vunpack.c.h.b16 %v974
        %v1670 = vunpack.c.l.b16 %v975
        %v1671 = vunpack.c.h.b16 %v975
        %v1672 = vunpack.c.l.b16 %v976
        %v1673 = vunpack.c.h.b16 %v976
        %v1674 = vunpack.c.l.b16 %v977
        %v1675 = vunpack.c.h.b16 %v977
        %v1676 = vunpack.c.l.b16 %v978
        %v1677 = vunpack.c.h.b16 %v978
        %v1678 = vunpack.c.l.b16 %v979
        %v1679 = vunpack.c.h.b16 %v979
        %v1680 = vunpack.c.l.b16 %v980
        %v1681 = vunpack.c.h.b16 %v980
        %v1682 = vunpack.c.l.b16 %v981
        %v1683 = vunpack.c.h.b16 %v981
        %v1684 = vunpack.c.l.b16 %v982
        %v1685 = vunpack.c.h.b16 %v982
        %v1686 = vunpack.c.l.b16 %v983
        %v1687 = vunpack.c.h.b16 %v983
        %v1688 = vunpack.c.l.b16 %v984
        %v1689 = vunpack.c.h.b16 %v984
        %v1690 = vunpack.c.l.b16 %v985
        %v1691 = vunpack.c.h.b16 %v985
        %v1692 = vunpack.c.l.b16 %v986
        %v1693 = vunpack.c.h.b16 %v986
        %v1694 = vunpack.c.l.b16 %v987
        %v1695 = vunpack.c.h.b16 %v987
        %v1696 = vunpack.c.l.b16 %v988
        %v1697 = vunpack.c.h.b16 %v988
        %v1698 = vunpack.c.l.b16 %v989
        %v1699 = vunpack.c.h.b16 %v989
        %v1700 = vunpack.c.l.b16 %v990
        %v1701 = vunpack.c.h.b16 %v990
        %v1702 = vunpack.c.l.b16 %v991
        %v1703 = vunpack.c.h.b16 %v991
        %v1704 = vunpack.c.l.b16 %v992
        %v1705 = vunpack.c.h.b16 %v992
        %v1706 = vunpack.c.l.b16 %v993
        %v1707 = vunpack.c.h.b16 %v993
        %v1708 = vunpack.c.l.b16 %v994
        %v1709 = vunpack.c.h.b16 %v994
        %v1710 = vunpack.c.l.b16 %v995
        %v1711 = vunpack.c.h.b16 %v995
        %v1712 = vunpack.c.l.b16 %v996
        %v1713 = vunpack.c.h.b16 %v996
        %v1714 = vunpack.c.l.b16 %v997
        %v1715 = vunpack.c.h.b16 %v997
        %v1716 = vunpack.c.l.b16 %v998
        %v1717 = vunpack.c.h.b16 %v998
        %v1718 = vunpack.c.l.b16 %v999
        %v1719 = vunpack.c.h.b16 %v999
        %v1720 = vunpack.c.l.b16 %v1000
        %v1721 = vunpack.c.h.b16 %v1000
        %v1722 = vunpack.c.l.b16 %v1001
        %v1723 = vunpack.c.h.b16 %v1001
        %v1724 = vunpack.c.l.b16 %v1002
        %v1725 = vunpack.c.h.b16 %v1002
        %v1726 = vunpack.c.l.b16 %v1003
        %v1727 = vunpack.c.h.b16 %v1003
        %v1728 = vunpack.c.l.b16 %v1004
        %v1729 = vunpack.c.h.b16 %v1004
        %v1730 = vunpack.c.l.b16 %v1005
        %v1731 = vunpack.c.h.b16 %v1005
        %v1732 = vunpack.c.l.b16 %v1006
        %v1733 = vunpack.c.h.b16 %v1006
        %v1734 = vunpack.c.l.b16 %v1007
        %v1735 = vunpack.c.h.b16 %v1007
        %v1736 = vunpack.c.l.b16 %v1008
        %v1737 = vunpack.c.h.b16 %v1008
        %v1738 = vunpack.c.l.b16 %v1009
        %v1739 = vunpack.c.h.b16 %v1009
        %v1740 = vunpack.c.l.b16 %v1010
        %v1741 = vunpack.c.h.b16 %v1010
        %v1742 = vunpack.c.l.b16 %v1011
        %v1743 = vunpack.c.h.b16 %v1011
        %v1744 = vunpack.c.l.b16 %v1012
        %v1745 = vunpack.c.h.b16 %v1012
        %v1746 = vunpack.c.l.b16 %v1013
        %v1747 = vunpack.c.h.b16 %v1013
        %v1748 = vunpack.c.l.b16 %v1014
        %v1749 = vunpack.c.h.b16 %v1014
        %v1750 = vunpack.c.l.b16 %v1015
        %v1751 = vunpack.c.h.b16 %v1015
        %v1752 = vunpack.c.l.b16 %v1016
        %v1753 = vunpack.c.h.b16 %v1016
        %v1754 = vunpack.c.l.b16 %v1017
        %v1755 = vunpack.c.h.b16 %v1017
        %v1756 = vunpack.c.l.b16 %v1018
        %v1757 = vunpack.c.h.b16 %v1018
        %v1758 = vunpack.c.l.b16 %v1019
        %v1759 = vunpack.c.h.b16 %v1019
        %v1760 = vunpack.c.l.b16 %v1020
        %v1761 = vunpack.c.h.b16 %v1020
        %v1762 = vunpack.c.l.b16 %v1021
        %v1763 = vunpack.c.h.b16 %v1021
        %v1764 = vunpack.c.l.b16 %v1022
        %v1765 = vunpack.c.h.b16 %v1022
        %v1766 = vunpack.c.l.b16 %v1023
        %v1767 = vunpack.c.h.b16 %v1023
        %v1768 = vunpack.c.l.b16 %v1024
        %v1769 = vunpack.c.h.b16 %v1024
        %v1770 = vunpack.c.l.b16 %v1025
        %v1771 = vunpack.c.h.b16 %v1025
        %v1772 = vunpack.c.l.b16 %v1026
        %v1773 = vunpack.c.h.b16 %v1026
        %v1774 = vunpack.c.l.b16 %v1027
        %v1775 = vunpack.c.h.b16 %v1027
        %v1776 = vunpack.c.l.b16 %v1028
        %v1777 = vunpack.c.h.b16 %v1028
        %v1778 = vunpack.c.l.b16 %v1029
        %v1779 = vunpack.c.h.b16 %v1029
        %v1780 = vunpack.c.l.b16 %v1030
        %v1781 = vunpack.c.h.b16 %v1030
        %v1782 = vunpack.c.l.b16 %v1031
        %v1783 = vunpack.c.h.b16 %v1031
        %v1784 = vunpack.c.l.b16 %v1032
        %v1785 = vunpack.c.h.b16 %v1032
        %v1786 = vunpack.c.l.b16 %v1033
        %v1787 = vunpack.c.h.b16 %v1033
        %v1788 = vunpack.c.l.b16 %v1034
        %v1789 = vunpack.c.h.b16 %v1034
        %v1790 = vunpack.c.l.b16 %v1035
        %v1791 = vunpack.c.h.b16 %v1035
        %v1792 = vunpack.c.l.b16 %v1036
        %v1793 = vunpack.c.h.b16 %v1036
        %v1794 = vunpack.c.l.b16 %v1037
        %v1795 = vunpack.c.h.b16 %v1037
        %v1796 = vunpack.c.l.b16 %v1038
        %v1797 = vunpack.c.h.b16 %v1038
        %v1798 = vunpack.c.l.b16 %v1039
        %v1799 = vunpack.c.h.b16 %v1039
        %v1800 = vunpack.c.l.b16 %v1040
        %v1801 = vunpack.c.h.b16 %v1040
        %v1802 = vunpack.c.l.b16 %v1041
        %v1803 = vunpack.c.h.b16 %v1041
        %v1804 = vunpack.c.l.b16 %v1042
        %v1805 = vunpack.c.h.b16 %v1042
        %v1806 = vunpack.c.l.b16 %v1043
        %v1807 = vunpack.c.h.b16 %v1043
        %v1808 = vunpack.c.l.b16 %v1044
        %v1809 = vunpack.c.h.b16 %v1044
        %v1810 = vunpack.c.l.b16 %v1045
        %v1811 = vunpack.c.h.b16 %v1045
        %v1812 = vunpack.c.l.b16 %v1046
        %v1813 = vunpack.c.h.b16 %v1046
        %v1814 = vunpack.c.l.b16 %v1047
        %v1815 = vunpack.c.h.b16 %v1047
        %v1816 = vunpack.c.l.b16 %v1048
        %v1817 = vunpack.c.h.b16 %v1048
        %v1818 = vunpack.c.l.b16 %v1049
        %v1819 = vunpack.c.h.b16 %v1049
        %v1820 = vunpack.c.l.b16 %v1050
        %v1821 = vunpack.c.h.b16 %v1050
        %v1822 = vunpack.c.l.b16 %v1051
        %v1823 = vunpack.c.h.b16 %v1051
        %v1824 = vunpack.c.l.b16 %v1052
        %v1825 = vunpack.c.h.b16 %v1052
        %v1826 = vunpack.c.l.b16 %v1053
        %v1827 = vunpack.c.h.b16 %v1053
        %v1828 = vunpack.c.l.b16 %v1054
        %v1829 = vunpack.c.h.b16 %v1054
        %v1830 = vunpack.c.l.b16 %v1055
        %v1831 = vunpack.c.h.b16 %v1055
        %v1832 = vunpack.c.l.b16 %v1056
        %v1833 = vunpack.c.h.b16 %v1056
        %v1834 = vunpack.c.l.b16 %v1057
        %v1835 = vunpack.c.h.b16 %v1057
        %v1836 = vunpack.c.l.b16 %v1058
        %v1837 = vunpack.c.h.b16 %v1058
        %v1838 = vunpack.c.l.b16 %v1059
        %v1839 = vunpack.c.h.b16 %v1059
        %v1840 = vunpack.c.l.b16 %v1060
        %v1841 = vunpack.c.h.b16 %v1060
        %v1842 = vunpack.c.l.b16 %v1061
        %v1843 = vunpack.c.h.b16 %v1061
        %v1844 = vunpack.c.l.b16 %v1062
        %v1845 = vunpack.c.h.b16 %v1062
        %v1846 = vunpack.c.l.b16 %v1063
        %v1847 = vunpack.c.h.b16 %v1063
        %v1848 = vunpack.c.l.b16 %v1064
        %v1849 = vunpack.c.h.b16 %v1064
        %v1850 = vunpack.c.l.b16 %v1065
        %v1851 = vunpack.c.h.b16 %v1065
        %v1852 = vunpack.c.l.b16 %v1066
        %v1853 = vunpack.c.h.b16 %v1066
        %v1854 = vunpack.c.l.b16 %v1067
        %v1855 = vunpack.c.h.b16 %v1067
        %v1856 = vunpack.c.l.b16 %v1068
        %v1857 = vunpack.c.h.b16 %v1068
        %v1858 = vunpack.c.l.b16 %v1069
        %v1859 = vunpack.c.h.b16 %v1069
        %v1860 = vunpack.c.l.b16 %v1070
        %v1861 = vunpack.c.h.b16 %v1070
        %v1862 = vunpack.c.l.b16 %v1071
        %v1863 = vunpack.c.h.b16 %v1071
        %v1864 = vunpack.c.l.b16 %v1072
        %v1865 = vunpack.c.h.b16 %v1072
        %v1866 = vunpack.c.l.b16 %v1073
        %v1867 = vunpack.c.h.b16 %v1073
        %v1868 = vunpack.c.l.b16 %v1074
        %v1869 = vunpack.c.h.b16 %v1074
        %v1870 = vunpack.c.l.b16 %v1075
        %v1871 = vunpack.c.h.b16 %v1075
        %v1872 = vunpack.c.l.b16 %v1076
        %v1873 = vunpack.c.h.b16 %v1076
        %v1874 = vunpack.c.l.b16 %v1077
        %v1875 = vunpack.c.h.b16 %v1077
        %v1876 = vunpack.c.l.b16 %v1078
        %v1877 = vunpack.c.h.b16 %v1078
        %v1878 = vunpack.c.l.b16 %v1079
        %v1879 = vunpack.c.h.b16 %v1079
        %v1880 = vunpack.c.l.b16 %v1080
        %v1881 = vunpack.c.h.b16 %v1080
        %v1882 = vunpack.c.l.b16 %v1081
        %v1883 = vunpack.c.h.b16 %v1081
        %v1884 = vunpack.c.l.b16 %v1082
        %v1885 = vunpack.c.h.b16 %v1082
        %v1886 = vunpack.c.l.b16 %v1083
        %v1887 = vunpack.c.h.b16 %v1083
        %v1888 = vunpack.c.l.b16 %v1084
        %v1889 = vunpack.c.h.b16 %v1084
        %v1890 = vunpack.c.l.b16 %v1085
        %v1891 = vunpack.c.h.b16 %v1085
        %v1892 = vunpack.c.l.b16 %v1086
        %v1893 = vunpack.c.h.b16 %v1086
        %v1894 = vunpack.c.l.b16 %v1087
        %v1895 = vunpack.c.h.b16 %v1087
        %v1896 = vunpack.c.l.b16 %v1088
        %v1897 = vunpack.c.h.b16 %v1088
        %v1898 = vunpack.c.l.b16 %v1089
        %v1899 = vunpack.c.h.b16 %v1089
        %v1900 = vpack.c.b16 %v1396, %v1388
        %v1901 = vpack.c.b16 %v1397, %v1389
        %v1902 = vpack.c.b16 %v1398, %v1390
        %v1903 = vpack.c.b16 %v1399, %v1391
        %v1904 = vpack.c.b16 %v1400, %v1392
        %v1905 = vpack.c.b16 %v1401, %v1393
        %v1906 = vpack.c.b16 %v1402, %v1394
        %v1907 = vpack.c.b16 %v1403, %v1395
        %v1908 = vpack.c.b16 %v1412, %v1404
        %v1909 = vpack.c.b16 %v1413, %v1405
        %v1910 = vpack.c.b16 %v1414, %v1406
        %v1911 = vpack.c.b16 %v1415, %v1407
        %v1912 = vpack.c.b16 %v1416, %v1408
        %v1913 = vpack.c.b16 %v1417, %v1409
        %v1914 = vpack.c.b16 %v1418, %v1410
        %v1915 = vpack.c.b16 %v1419, %v1411
        %v1916 = vpack.c.b16 %v1428, %v1420
        %v1917 = vpack.c.b16 %v1429, %v1421
        %v1918 = vpack.c.b16 %v1430, %v1422
        %v1919 = vpack.c.b16 %v1431, %v1423
        %v1920 = vpack.c.b16 %v1432, %v1424
        %v1921 = vpack.c.b16 %v1433, %v1425
        %v1922 = vpack.c.b16 %v1434, %v1426
        %v1923 = vpack.c.b16 %v1435, %v1427
        %v1924 = vpack.c.b16 %v1444, %v1436
        %v1925 = vpack.c.b16 %v1445, %v1437
        %v1926 = vpack.c.b16 %v1446, %v1438
        %v1927 = vpack.c.b16 %v1447, %v1439
        %v1928 = vpack.c.b16 %v1448, %v1440
        %v1929 = vpack.c.b16 %v1449, %v1441
        %v1930 = vpack.c.b16 %v1450, %v1442
        %v1931 = vpack.c.b16 %v1451, %v1443
        %v1932 = vpack.c.b16 %v1460, %v1452
        %v1933 = vpack.c.b16 %v1461, %v1453
        %v1934 = vpack.c.b16 %v1462, %v1454
        %v1935 = vpack.c.b16 %v1463, %v1455
        %v1936 = vpack.c.b16 %v1464, %v1456
        %v1937 = vpack.c.b16 %v1465, %v1457
        %v1938 = vpack.c.b16 %v1466, %v1458
        %v1939 = vpack.c.b16 %v1467, %v1459
        %v1940 = vpack.c.b16 %v1476, %v1468
        %v1941 = vpack.c.b16 %v1477, %v1469
        %v1942 = vpack.c.b16 %v1478, %v1470
        %v1943 = vpack.c.b16 %v1479, %v1471
        %v1944 = vpack.c.b16 %v1480, %v1472
        %v1945 = vpack.c.b16 %v1481, %v1473
        %v1946 = vpack.c.b16 %v1482, %v1474
        %v1947 = vpack.c.b16 %v1483, %v1475
        %v1948 = vpack.c.b16 %v1492, %v1484
        %v1949 = vpack.c.b16 %v1493, %v1485
        %v1950 = vpack.c.b16 %v1494, %v1486
        %v1951 = vpack.c.b16 %v1495, %v1487
        %v1952 = vpack.c.b16 %v1496, %v1488
        %v1953 = vpack.c.b16 %v1497, %v1489
        %v1954 = vpack.c.b16 %v1498, %v1490
        %v1955 = vpack.c.b16 %v1499, %v1491
        %v1956 = vpack.c.b16 %v1508, %v1500
        %v1957 = vpack.c.b16 %v1509, %v1501
        %v1958 = vpack.c.b16 %v1510, %v1502
        %v1959 = vpack.c.b16 %v1511, %v1503
        %v1960 = vpack.c.b16 %v1512, %v1504
        %v1961 = vpack.c.b16 %v1513, %v1505
        %v1962 = vpack.c.b16 %v1514, %v1506
        %v1963 = vpack.c.b16 %v1515, %v1507
        %v1964 = vpack.c.b16 %v1524, %v1516
        %v1965 = vpack.c.b16 %v1525, %v1517
        %v1966 = vpack.c.b16 %v1526, %v1518
        %v1967 = vpack.c.b16 %v1527, %v1519
        %v1968 = vpack.c.b16 %v1528, %v1520
        %v1969 = vpack.c.b16 %v1529, %v1521
        %v1970 = vpack.c.b16 %v1530, %v1522
        %v1971 = vpack.c.b16 %v1531, %v1523
        %v1972 = vpack.c.b16 %v1540, %v1532
        %v1973 = vpack.c.b16 %v1541, %v1533
        %v1974 = vpack.c.b16 %v1542, %v1534
        %v1975 = vpack.c.b16 %v1543, %v1535
        %v1976 = vpack.c.b16 %v1544, %v1536
        %v1977 = vpack.c.b16 %v1545, %v1537
        %v1978 = vpack.c.b16 %v1546, %v1538
        %v1979 = vpack.c.b16 %v1547, %v1539
        %v1980 = vpack.c.b16 %v1556, %v1548
        %v1981 = vpack.c.b16 %v1557, %v1549
        %v1982 = vpack.c.b16 %v1558, %v1550
        %v1983 = vpack.c.b16 %v1559, %v1551
        %v1984 = vpack.c.b16 %v1560, %v1552
        %v1985 = vpack.c.b16 %v1561, %v1553
        %v1986 = vpack.c.b16 %v1562, %v1554
        %v1987 = vpack.c.b16 %v1563, %v1555
        %v1988 = vpack.c.b16 %v1572, %v1564
        %v1989 = vpack.c.b16 %v1573, %v1565
        %v1990 = vpack.c.b16 %v1574, %v1566
        %v1991 = vpack.c.b16 %v1575, %v1567
        %v1992 = vpack.c.b16 %v1576, %v1568
        %v1993 = vpack.c.b16 %v1577, %v1569
        %v1994 = vpack.c.b16 %v1578, %v1570
        %v1995 = vpack.c.b16 %v1579, %v1571
        %v1996 = vpack.c.b16 %v1588, %v1580
        %v1997 = vpack.c.b16 %v1589, %v1581
        %v1998 = vpack.c.b16 %v1590, %v1582
        %v1999 = vpack.c.b16 %v1591, %v1583
        %v2000 = vpack.c.b16 %v1592, %v1584
        %v2001 = vpack.c.b16 %v1593, %v1585
        %v2002 = vpack.c.b16 %v1594, %v1586
        %v2003 = vpack.c.b16 %v1595, %v1587
        %v2004 = vpack.c.b16 %v1604, %v1596
        %v2005 = vpack.c.b16 %v1605, %v1597
        %v2006 = vpack.c.b16 %v1606, %v1598
        %v2007 = vpack.c.b16 %v1607, %v1599
        %v2008 = vpack.c.b16 %v1608, %v1600
        %v2009 = vpack.c.b16 %v1609, %v1601
        %v2010 = vpack.c.b16 %v1610, %v1602
        %v2011 = vpack.c.b16 %v1611, %v1603
        %v2012 = vpack.c.b16 %v1620, %v1612
        %v2013 = vpack.c.b16 %v1621, %v1613
        %v2014 = vpack.c.b16 %v1622, %v1614
        %v2015 = vpack.c.b16 %v1623, %v1615
        %v2016 = vpack.c.b16 %v1624, %v1616
        %v2017 = vpack.c.b16 %v1625, %v1617
        %v2018 = vpack.c.b16 %v1626, %v1618
        %v2019 = vpack.c.b16 %v1627, %v1619
        %v2020 = vpack.c.b16 %v1636, %v1628
        %v2021 = vpack.c.b16 %v1637, %v1629
        %v2022 = vpack.c.b16 %v1638, %v1630
        %v2023 = vpack.c.b16 %v1639, %v1631
        %v2024 = vpack.c.b16 %v1640, %v1632
        %v2025 = vpack.c.b16 %v1641, %v1633
        %v2026 = vpack.c.b16 %v1642, %v1634
        %v2027 = vpack.c.b16 %v1643, %v1635
        %v2028 = vpack.c.b16 %v1652, %v1644
        %v2029 = vpack.c.b16 %v1653, %v1645
        %v2030 = vpack.c.b16 %v1654, %v1646
        %v2031 = vpack.c.b16 %v1655, %v1647
        %v2032 = vpack.c.b16 %v1656, %v1648
        %v2033 = vpack.c.b16 %v1657, %v1649
        %v2034 = vpack.c.b16 %v1658, %v1650
        %v2035 = vpack.c.b16 %v1659, %v1651
        %v2036 = vpack.c.b16 %v1668, %v1660
        %v2037 = vpack.c.b16 %v1669, %v1661
        %v2038 = vpack.c.b16 %v1670, %v1662
        %v2039 = vpack.c.b16 %v1671, %v1663
        %v2040 = vpack.c.b16 %v1672, %v1664
        %v2041 = vpack.c.b16 %v1673, %v1665
        %v2042 = vpack.c.b16 %v1674, %v1666
        %v2043 = vpack.c.b16 %v1675, %v1667
        %v2044 = vpack.c.b16 %v1684, %v1676
        %v2045 = vpack.c.b16 %v1685, %v1677
        %v2046 = vpack.c.b16 %v1686, %v1678
        %v2047 = vpack.c.b16 %v1687, %v1679
        %v2048 = vpack.c.b16 %v1688, %v1680
        %v2049 = vpack.c.b16 %v1689, %v1681
        %v2050 = vpack.c.b16 %v1690, %v1682
        %v2051 = vpack.c.b16 %v1691, %v1683
        %v2052 = vpack.c.b16 %v1700, %v1692
        %v2053 = vpack.c.b16 %v1701, %v1693
        %v2054 = vpack.c.b16 %v1702, %v1694
        %v2055 = vpack.c.b16 %v1703, %v1695
        %v2056 = vpack.c.b16 %v1704, %v1696
        %v2057 = vpack.c.b16 %v1705, %v1697
        %v2058 = vpack.c.b16 %v1706, %v1698
        %v2059 = vpack.c.b16 %v1707, %v1699
        %v2060 = vpack.c.b16 %v1716, %v1708
        %v2061 = vpack.c.b16 %v1717, %v1709
        %v2062 = vpack.c.b16 %v1718, %v1710
        %v2063 = vpack.c.b16 %v1719, %v1711
        %v2064 = vpack.c.b16 %v1720, %v1712
        %v2065 = vpack.c.b16 %v1721, %v1713
        %v2066 = vpack.c.b16 %v1722, %v1714
        %v2067 = vpack.c.b16 %v1723, %v1715
        %v2068 = vpack.c.b16 %v1732, %v1724
        %v2069 = vpack.c.b16 %v1733, %v1725
        %v2070 = vpack.c.b16 %v1734, %v1726
        %v2071 = vpack.c.b16 %v1735, %v1727
        %v2072 = vpack.c.b16 %v1736, %v1728
        %v2073 = vpack.c.b16 %v1737, %v1729
        %v2074 = vpack.c.b16 %v1738, %v1730
        %v2075 = vpack.c.b16 %v1739, %v1731
        %v2076 = vpack.c.b16 %v1748, %v1740
        %v2077 = vpack.c.b16 %v1749, %v1741
        %v2078 = vpack.c.b16 %v1750, %v1742
        %v2079 = vpack.c.b16 %v1751, %v1743
        %v2080 = vpack.c.b16 %v1752, %v1744
        %v2081 = vpack.c.b16 %v1753, %v1745
        %v2082 = vpack.c.b16 %v1754, %v1746
        %v2083 = vpack.c.b16 %v1755, %v1747
        %v2084 = vpack.c.b16 %v1764, %v1756
        %v2085 = vpack.c.b16 %v1765, %v1757
        %v2086 = vpack.c.b16 %v1766, %v1758
        %v2087 = vpack.c.b16 %v1767, %v1759
        %v2088 = vpack.c.b16 %v1768, %v1760
        %v2089 = vpack.c.b16 %v1769, %v1761
        %v2090 = vpack.c.b16 %v1770, %v1762
        %v2091 = vpack.c.b16 %v1771, %v1763
        %v2092 = vpack.c.b16 %v1780, %v1772
        %v2093 = vpack.c.b16 %v1781, %v1773
        %v2094 = vpack.c.b16 %v1782, %v1774
        %v2095 = vpack.c.b16 %v1783, %v1775
        %v2096 = vpack.c.b16 %v1784, %v1776
        %v2097 = vpack.c.b16 %v1785, %v1777
        %v2098 = vpack.c.b16 %v1786, %v1778
        %v2099 = vpack.c.b16 %v1787, %v1779
        %v2100 = vpack.c.b16 %v1796, %v1788
        %v2101 = vpack.c.b16 %v1797, %v1789
        %v2102 = vpack.c.b16 %v1798, %v1790
        %v2103 = vpack.c.b16 %v1799, %v1791
        %v2104 = vpack.c.b16 %v1800, %v1792
        %v2105 = vpack.c.b16 %v1801, %v1793
        %v2106 = vpack.c.b16 %v1802, %v1794
        %v2107 = vpack.c.b16 %v1803, %v1795
        %v2108 = vpack.c.b16 %v1812, %v1804
        %v2109 = vpack.c.b16 %v1813, %v1805
        %v2110 = vpack.c.b16 %v1814, %v1806
        %v2111 = vpack.c.b16 %v1815, %v1807
        %v2112 = vpack.c.b16 %v1816, %v1808
        %v2113 = vpack.c.b16 %v1817, %v1809
        %v2114 = vpack.c.b16 %v1818, %v1810
        %v2115 = vpack.c.b16 %v1819, %v1811
        %v2116 = vpack.c.b16 %v1828, %v1820
        %v2117 = vpack.c.b16 %v1829, %v1821
        %v2118 = vpack.c.b16 %v1830, %v1822
        %v2119 = vpack.c.b16 %v1831, %v1823
        %v2120 = vpack.c.b16 %v1832, %v1824
        %v2121 = vpack.c.b16 %v1833, %v1825
        %v2122 = vpack.c.b16 %v1834, %v1826
        %v2123 = vpack.c.b16 %v1835, %v1827
        %v2124 = vpack.c.b16 %v1844, %v1836
        %v2125 = vpack.c.b16 %v1845, %v1837
        %v2126 = vpack.c.b16 %v1846, %v1838
        %v2127 = vpack.c.b16 %v1847, %v1839
        %v2128 = vpack.c.b16 %v1848, %v1840
        %v2129 = vpack.c.b16 %v1849, %v1841
        %v2130 = vpack.c.b16 %v1850, %v1842
        %v2131 = vpack.c.b16 %v1851, %v1843
        %v2132 = vpack.c.b16 %v1860, %v1852
        %v2133 = vpack.c.b16 %v1861, %v1853
        %v2134 = vpack.c.b16 %v1862, %v1854
        %v2135 = vpack.c.b16 %v1863, %v1855
        %v2136 = vpack.c.b16 %v1864, %v1856
        %v2137 = vpack.c.b16 %v1865, %v1857
        %v2138 = vpack.c.b16 %v1866, %v1858
        %v2139 = vpack.c.b16 %v1867, %v1859
        %v2140 = vpack.c.b16 %v1876, %v1868
        %v2141 = vpack.c.b16 %v1877, %v1869
        %v2142 = vpack.c.b16 %v1878, %v1870
        %v2143 = vpack.c.b16 %v1879, %v1871
        %v2144 = vpack.c.b16 %v1880, %v1872
        %v2145 = vpack.c.b16 %v1881, %v1873
        %v2146 = vpack.c.b16 %v1882, %v1874
        %v2147 = vpack.c.b16 %v1883, %v1875
        %v2148 = vpack.c.b16 %v1892, %v1884
        %v2149 = vpack.c.b16 %v1893, %v1885
        %v2150 = vpack.c.b16 %v1894, %v1886
        %v2151 = vpack.c.b16 %v1895, %v1887
        %v2152 = vpack.c.b16 %v1896, %v1888
        %v2153 = vpack.c.b16 %v1897, %v1889
        %v2154 = vpack.c.b16 %v1898, %v1890
        %v2155 = vpack.c.b16 %v1899, %v1891
        %2412 = vmatprep.subr.bf16.mxu0 %v1901
        %2413 = vmatpush1.bf16.msra.mxu0 %v1900
        %2414 = vmatprep.subr.bf16.mxu0 %v1909
        %2415 = vmatpush1.bf16.msra.mxu0 %v1908
        %2416 = vmatprep.subr.bf16.mxu0 %v1917
        %2417 = vmatpush1.bf16.msra.mxu0 %v1916
        %2418 = vmatprep.subr.bf16.mxu0 %v1925
        %2419 = vmatpush1.bf16.msra.mxu0 %v1924
        %2420 = vmatprep.subr.bf16.mxu0 %v1933
        %2421 = vmatpush1.bf16.msra.mxu0 %v1932
        %2422 = vmatprep.subr.bf16.mxu0 %v1941
        %2423 = vmatpush1.bf16.msra.mxu0 %v1940
        %2424 = vmatprep.subr.bf16.mxu0 %v1949
        %2425 = vmatpush1.bf16.msra.mxu0 %v1948
        %2426 = vmatprep.subr.bf16.mxu0 %v1957
        %2427 = vmatpush1.bf16.msra.mxu0 %v1956
        %2428 = vmatprep.subr.bf16.mxu0 %v1965
        %2429 = vmatpush1.bf16.msra.mxu0 %v1964
        %2430 = vmatprep.subr.bf16.mxu0 %v1973
        %2431 = vmatpush1.bf16.msra.mxu0 %v1972
        %2432 = vmatprep.subr.bf16.mxu0 %v1981
        %2433 = vmatpush1.bf16.msra.mxu0 %v1980
        %2434 = vmatprep.subr.bf16.mxu0 %v1989
        %2435 = vmatpush1.bf16.msra.mxu0 %v1988
        %2436 = vmatprep.subr.bf16.mxu0 %v1997
        %2437 = vmatpush1.bf16.msra.mxu0 %v1996
        %2438 = vmatprep.subr.bf16.mxu0 %v2005
        %2439 = vmatpush1.bf16.msra.mxu0 %v2004
        %2440 = vmatprep.subr.bf16.mxu0 %v2013
        %2441 = vmatpush1.bf16.msra.mxu0 %v2012
        %2442 = vmatprep.subr.bf16.mxu0 %v2021
        %2443 = vmatpush1.bf16.msra.mxu0 %v2020
        %2444 = vmatprep.mubr.bf16.mxu0 %v831
        %2445 = vmatmul.mubr.bf16.gmra.mrb[0].mxu0 %v830
        %v2446 = vpop.f32.mrb[0].mxu0
        %v2447 = vadd.f32 %v1095, %v2446
        %v2448 = vpop.f32.mrb[0].mxu0
        %v2449 = vadd.f32 %v1099, %v2448
        %v2450 = vpop.f32.mrb[0].mxu0
        %v2451 = vadd.f32 %v1095, %v2450
        %v2452 = vpop.f32.mrb[0].mxu0
        %v2453 = vadd.f32 %v1099, %v2452
        %2454 = vdwg.mxu0
        %2455 = vmatprep.subr.bf16.mxu0 %v2029
        %2456 = vmatpush1.bf16.msra.mxu0 %v2028
        %2457 = vmatprep.subr.bf16.mxu0 %v2037
        %2458 = vmatpush1.bf16.msra.mxu0 %v2036
        %2459 = vmatprep.subr.bf16.mxu0 %v2045
        %2460 = vmatpush1.bf16.msra.mxu0 %v2044
        %2461 = vmatprep.subr.bf16.mxu0 %v2053
        %2462 = vmatpush1.bf16.msra.mxu0 %v2052
        %2463 = vmatprep.subr.bf16.mxu0 %v2061
        %2464 = vmatpush1.bf16.msra.mxu0 %v2060
        %2465 = vmatprep.subr.bf16.mxu0 %v2069
        %2466 = vmatpush1.bf16.msra.mxu0 %v2068
        %2467 = vmatprep.subr.bf16.mxu0 %v2077
        %2468 = vmatpush1.bf16.msra.mxu0 %v2076
        %2469 = vmatprep.subr.bf16.mxu0 %v2085
        %2470 = vmatpush1.bf16.msra.mxu0 %v2084
        %2471 = vmatprep.subr.bf16.mxu0 %v2093
        %2472 = vmatpush1.bf16.msra.mxu0 %v2092
        %2473 = vmatprep.subr.bf16.mxu0 %v2101
        %2474 = vmatpush1.bf16.msra.mxu0 %v2100
        %2475 = vmatprep.subr.bf16.mxu0 %v2109
        %2476 = vmatpush1.bf16.msra.mxu0 %v2108
        %2477 = vmatprep.subr.bf16.mxu0 %v2117
        %2478 = vmatpush1.bf16.msra.mxu0 %v2116
        %2479 = vmatprep.subr.bf16.mxu0 %v2125
        %2480 = vmatpush1.bf16.msra.mxu0 %v2124
        %2481 = vmatprep.subr.bf16.mxu0 %v2133
        %2482 = vmatpush1.bf16.msra.mxu0 %v2132
        %2483 = vmatprep.subr.bf16.mxu0 %v2141
        %2484 = vmatpush1.bf16.msra.mxu0 %v2140
        %2485 = vmatprep.subr.bf16.mxu0 %v2149
        %2486 = vmatpush1.bf16.msra.mxu0 %v2148
        %2487 = vmatprep.mubr.bf16.mxu0 %v833
        %2488 = vmatmul.mubr.bf16.gmra.mrb[0].mxu0 %v832
        %v2489 = vpop.f32.mrb[0].mxu0
        %v2490 = vadd.f32 %v2447, %v2489
        %v2491 = vpop.f32.mrb[0].mxu0
        %v2492 = vadd.f32 %v2449, %v2491
        %v2493 = vpop.f32.mrb[0].mxu0
        %v2494 = vadd.f32 %v2451, %v2493
        %v2495 = vpop.f32.mrb[0].mxu0
        %v2496 = vadd.f32 %v2453, %v2495
        %2497 = vdwg.mxu0
        %2498 = vmatprep.subr.bf16.mxu0 %v1903
        %2499 = vmatpush1.bf16.msra.mxu0 %v1902
        %2500 = vmatprep.subr.bf16.mxu0 %v1911
        %2501 = vmatpush1.bf16.msra.mxu0 %v1910
        %2502 = vmatprep.subr.bf16.mxu0 %v1919
        %2503 = vmatpush1.bf16.msra.mxu0 %v1918
        %2504 = vmatprep.subr.bf16.mxu0 %v1927
        %2505 = vmatpush1.bf16.msra.mxu0 %v1926
        %2506 = vmatprep.subr.bf16.mxu0 %v1935
        %2507 = vmatpush1.bf16.msra.mxu0 %v1934
        %2508 = vmatprep.subr.bf16.mxu0 %v1943
        %2509 = vmatpush1.bf16.msra.mxu0 %v1942
        %2510 = vmatprep.subr.bf16.mxu0 %v1951
        %2511 = vmatpush1.bf16.msra.mxu0 %v1950
        %2512 = vmatprep.subr.bf16.mxu0 %v1959
        %2513 = vmatpush1.bf16.msra.mxu0 %v1958
        %2514 = vmatprep.subr.bf16.mxu0 %v1967
        %2515 = vmatpush1.bf16.msra.mxu0 %v1966
        %2516 = vmatprep.subr.bf16.mxu0 %v1975
        %2517 = vmatpush1.bf16.msra.mxu0 %v1974
        %2518 = vmatprep.subr.bf16.mxu0 %v1983
        %2519 = vmatpush1.bf16.msra.mxu0 %v1982
        %2520 = vmatprep.subr.bf16.mxu0 %v1991
        %2521 = vmatpush1.bf16.msra.mxu0 %v1990
        %2522 = vmatprep.subr.bf16.mxu0 %v1999
        %2523 = vmatpush1.bf16.msra.mxu0 %v1998
        %2524 = vmatprep.subr.bf16.mxu0 %v2007
        %2525 = vmatpush1.bf16.msra.mxu0 %v2006
        %2526 = vmatprep.subr.bf16.mxu0 %v2015
        %2527 = vmatpush1.bf16.msra.mxu0 %v2014
        %2528 = vmatprep.subr.bf16.mxu0 %v2023
        %2529 = vmatpush1.bf16.msra.mxu0 %v2022
        %2530 = vmatprep.mubr.bf16.mxu0 %v831
        %2531 = vmatmul.mubr.bf16.gmra.mrb[0].mxu0 %v830
        %v2532 = vpop.f32.mrb[0].mxu0
        %v2533 = vadd.f32 %v1103, %v2532
        %v2534 = vpop.f32.mrb[0].mxu0
        %v2535 = vadd.f32 %v1107, %v2534
        %v2536 = vpop.f32.mrb[0].mxu0
        %v2537 = vadd.f32 %v1103, %v2536
        %v2538 = vpop.f32.mrb[0].mxu0
        %v2539 = vadd.f32 %v1107, %v2538
        %2540 = vdwg.mxu0
        %2541 = vmatprep.subr.bf16.mxu0 %v2031
        %2542 = vmatpush1.bf16.msra.mxu0 %v2030
        %2543 = vmatprep.subr.bf16.mxu0 %v2039
        %2544 = vmatpush1.bf16.msra.mxu0 %v2038
        %2545 = vmatprep.subr.bf16.mxu0 %v2047
        %2546 = vmatpush1.bf16.msra.mxu0 %v2046
        %2547 = vmatprep.subr.bf16.mxu0 %v2055
        %2548 = vmatpush1.bf16.msra.mxu0 %v2054
        %2549 = vmatprep.subr.bf16.mxu0 %v2063
        %2550 = vmatpush1.bf16.msra.mxu0 %v2062
        %2551 = vmatprep.subr.bf16.mxu0 %v2071
        %2552 = vmatpush1.bf16.msra.mxu0 %v2070
        %2553 = vmatprep.subr.bf16.mxu0 %v2079
        %2554 = vmatpush1.bf16.msra.mxu0 %v2078
        %2555 = vmatprep.subr.bf16.mxu0 %v2087
        %2556 = vmatpush1.bf16.msra.mxu0 %v2086
        %2557 = vmatprep.subr.bf16.mxu0 %v2095
        %2558 = vmatpush1.bf16.msra.mxu0 %v2094
        %2559 = vmatprep.subr.bf16.mxu0 %v2103
        %2560 = vmatpush1.bf16.msra.mxu0 %v2102
        %2561 = vmatprep.subr.bf16.mxu0 %v2111
        %2562 = vmatpush1.bf16.msra.mxu0 %v2110
        %2563 = vmatprep.subr.bf16.mxu0 %v2119
        %2564 = vmatpush1.bf16.msra.mxu0 %v2118
        %2565 = vmatprep.subr.bf16.mxu0 %v2127
        %2566 = vmatpush1.bf16.msra.mxu0 %v2126
        %2567 = vmatprep.subr.bf16.mxu0 %v2135
        %2568 = vmatpush1.bf16.msra.mxu0 %v2134
        %2569 = vmatprep.subr.bf16.mxu0 %v2143
        %2570 = vmatpush1.bf16.msra.mxu0 %v2142
        %2571 = vmatprep.subr.bf16.mxu0 %v2151
        %2572 = vmatpush1.bf16.msra.mxu0 %v2150
        %2573 = vmatprep.mubr.bf16.mxu0 %v833
        %2574 = vmatmul.mubr.bf16.gmra.mrb[0].mxu0 %v832
        %v2575 = vpop.f32.mrb[0].mxu0
        %v2576 = vadd.f32 %v2533, %v2575
        %v2577 = vpop.f32.mrb[0].mxu0
        %v2578 = vadd.f32 %v2535, %v2577
        %v2579 = vpop.f32.mrb[0].mxu0
        %v2580 = vadd.f32 %v2537, %v2579
        %v2581 = vpop.f32.mrb[0].mxu0
        %v2582 = vadd.f32 %v2539, %v2581
        %2583 = vdwg.mxu0
        %2584 = vmatprep.subr.bf16.mxu0 %v1905
        %2585 = vmatpush1.bf16.msra.mxu0 %v1904
        %2586 = vmatprep.subr.bf16.mxu0 %v1913
        %2587 = vmatpush1.bf16.msra.mxu0 %v1912
        %2588 = vmatprep.subr.bf16.mxu0 %v1921
        %2589 = vmatpush1.bf16.msra.mxu0 %v1920
        %2590 = vmatprep.subr.bf16.mxu0 %v1929
        %2591 = vmatpush1.bf16.msra.mxu0 %v1928
        %2592 = vmatprep.subr.bf16.mxu0 %v1937
        %2593 = vmatpush1.bf16.msra.mxu0 %v1936
        %2594 = vmatprep.subr.bf16.mxu0 %v1945
        %2595 = vmatpush1.bf16.msra.mxu0 %v1944
        %2596 = vmatprep.subr.bf16.mxu0 %v1953
        %2597 = vmatpush1.bf16.msra.mxu0 %v1952
        %2598 = vmatprep.subr.bf16.mxu0 %v1961
        %2599 = vmatpush1.bf16.msra.mxu0 %v1960
        %2600 = vmatprep.subr.bf16.mxu0 %v1969
        %2601 = vmatpush1.bf16.msra.mxu0 %v1968
        %2602 = vmatprep.subr.bf16.mxu0 %v1977
        %2603 = vmatpush1.bf16.msra.mxu0 %v1976
        %2604 = vmatprep.subr.bf16.mxu0 %v1985
        %2605 = vmatpush1.bf16.msra.mxu0 %v1984
        %2606 = vmatprep.subr.bf16.mxu0 %v1993
        %2607 = vmatpush1.bf16.msra.mxu0 %v1992
        %2608 = vmatprep.subr.bf16.mxu0 %v2001
        %2609 = vmatpush1.bf16.msra.mxu0 %v2000
        %2610 = vmatprep.subr.bf16.mxu0 %v2009
        %2611 = vmatpush1.bf16.msra.mxu0 %v2008
        %2612 = vmatprep.subr.bf16.mxu0 %v2017
        %2613 = vmatpush1.bf16.msra.mxu0 %v2016
        %2614 = vmatprep.subr.bf16.mxu0 %v2025
        %2615 = vmatpush1.bf16.msra.mxu0 %v2024
        %2616 = vmatprep.mubr.bf16.mxu0 %v831
        %2617 = vmatmul.mubr.bf16.gmra.mrb[0].mxu0 %v830
        %v2618 = vpop.f32.mrb[0].mxu0
        %v2619 = vadd.f32 %v1111, %v2618
        %v2620 = vpop.f32.mrb[0].mxu0
        %v2621 = vadd.f32 %v1115, %v2620
        %v2622 = vpop.f32.mrb[0].mxu0
        %v2623 = vadd.f32 %v1111, %v2622
        %v2624 = vpop.f32.mrb[0].mxu0
        %v2625 = vadd.f32 %v1115, %v2624
        %2626 = vdwg.mxu0
        %2627 = vmatprep.subr.bf16.mxu0 %v2033
        %2628 = vmatpush1.bf16.msra.mxu0 %v2032
        %2629 = vmatprep.subr.bf16.mxu0 %v2041
        %2630 = vmatpush1.bf16.msra.mxu0 %v2040
        %2631 = vmatprep.subr.bf16.mxu0 %v2049
        %2632 = vmatpush1.bf16.msra.mxu0 %v2048
        %2633 = vmatprep.subr.bf16.mxu0 %v2057
        %2634 = vmatpush1.bf16.msra.mxu0 %v2056
        %2635 = vmatprep.subr.bf16.mxu0 %v2065
        %2636 = vmatpush1.bf16.msra.mxu0 %v2064
        %2637 = vmatprep.subr.bf16.mxu0 %v2073
        %2638 = vmatpush1.bf16.msra.mxu0 %v2072
        %2639 = vmatprep.subr.bf16.mxu0 %v2081
        %2640 = vmatpush1.bf16.msra.mxu0 %v2080
        %2641 = vmatprep.subr.bf16.mxu0 %v2089
        %2642 = vmatpush1.bf16.msra.mxu0 %v2088
        %2643 = vmatprep.subr.bf16.mxu0 %v2097
        %2644 = vmatpush1.bf16.msra.mxu0 %v2096
        %2645 = vmatprep.subr.bf16.mxu0 %v2105
        %2646 = vmatpush1.bf16.msra.mxu0 %v2104
        %2647 = vmatprep.subr.bf16.mxu0 %v2113
        %2648 = vmatpush1.bf16.msra.mxu0 %v2112
        %2649 = vmatprep.subr.bf16.mxu0 %v2121
        %2650 = vmatpush1.bf16.msra.mxu0 %v2120
        %2651 = vmatprep.subr.bf16.mxu0 %v2129
        %2652 = vmatpush1.bf16.msra.mxu0 %v2128
        %2653 = vmatprep.subr.bf16.mxu0 %v2137
        %2654 = vmatpush1.bf16.msra.mxu0 %v2136
        %2655 = vmatprep.subr.bf16.mxu0 %v2145
        %2656 = vmatpush1.bf16.msra.mxu0 %v2144
        %2657 = vmatprep.subr.bf16.mxu0 %v2153
        %2658 = vmatpush1.bf16.msra.mxu0 %v2152
        %2659 = vmatprep.mubr.bf16.mxu0 %v833
        %2660 = vmatmul.mubr.bf16.gmra.mrb[0].mxu0 %v832
        %v2661 = vpop.f32.mrb[0].mxu0
        %v2662 = vadd.f32 %v2619, %v2661
        %v2663 = vpop.f32.mrb[0].mxu0
        %v2664 = vadd.f32 %v2621, %v2663
        %v2665 = vpop.f32.mrb[0].mxu0
        %v2666 = vadd.f32 %v2623, %v2665
        %v2667 = vpop.f32.mrb[0].mxu0
        %v2668 = vadd.f32 %v2625, %v2667
        %2669 = vdwg.mxu0
        %2670 = vmatprep.subr.bf16.mxu0 %v1907
        %2671 = vmatpush1.bf16.msra.mxu0 %v1906
        %2672 = vmatprep.subr.bf16.mxu0 %v1915
        %2673 = vmatpush1.bf16.msra.mxu0 %v1914
        %2674 = vmatprep.subr.bf16.mxu0 %v1923
        %2675 = vmatpush1.bf16.msra.mxu0 %v1922
        %2676 = vmatprep.subr.bf16.mxu0 %v1931
        %2677 = vmatpush1.bf16.msra.mxu0 %v1930
        %2678 = vmatprep.subr.bf16.mxu0 %v1939
        %2679 = vmatpush1.bf16.msra.mxu0 %v1938
        %2680 = vmatprep.subr.bf16.mxu0 %v1947
        %2681 = vmatpush1.bf16.msra.mxu0 %v1946
        %2682 = vmatprep.subr.bf16.mxu0 %v1955
        %2683 = vmatpush1.bf16.msra.mxu0 %v1954
        %2684 = vmatprep.subr.bf16.mxu0 %v1963
        %2685 = vmatpush1.bf16.msra.mxu0 %v1962
        %2686 = vmatprep.subr.bf16.mxu0 %v1971
        %2687 = vmatpush1.bf16.msra.mxu0 %v1970
        %2688 = vmatprep.subr.bf16.mxu0 %v1979
        %2689 = vmatpush1.bf16.msra.mxu0 %v1978
        %2690 = vmatprep.subr.bf16.mxu0 %v1987
        %2691 = vmatpush1.bf16.msra.mxu0 %v1986
        %2692 = vmatprep.subr.bf16.mxu0 %v1995
        %2693 = vmatpush1.bf16.msra.mxu0 %v1994
        %2694 = vmatprep.subr.bf16.mxu0 %v2003
        %2695 = vmatpush1.bf16.msra.mxu0 %v2002
        %2696 = vmatprep.subr.bf16.mxu0 %v2011
        %2697 = vmatpush1.bf16.msra.mxu0 %v2010
        %2698 = vmatprep.subr.bf16.mxu0 %v2019
        %2699 = vmatpush1.bf16.msra.mxu0 %v2018
        %2700 = vmatprep.subr.bf16.mxu0 %v2027
        %2701 = vmatpush1.bf16.msra.mxu0 %v2026
        %2702 = vmatprep.mubr.bf16.mxu0 %v831
        %2703 = vmatmul.mubr.bf16.gmra.mrb[0].mxu0 %v830
        %v2704 = vpop.f32.mrb[0].mxu0
        %v2705 = vadd.f32 %v1119, %v2704
        %v2706 = vpop.f32.mrb[0].mxu0
        %v2707 = vadd.f32 %v1123, %v2706
        %v2708 = vpop.f32.mrb[0].mxu0
        %v2709 = vadd.f32 %v1119, %v2708
        %v2710 = vpop.f32.mrb[0].mxu0
        %v2711 = vadd.f32 %v1123, %v2710
        %2712 = vdwg.mxu0
        %2713 = vmatprep.subr.bf16.mxu0 %v2035
        %2714 = vmatpush1.bf16.msra.mxu0 %v2034
        %2715 = vmatprep.subr.bf16.mxu0 %v2043
        %2716 = vmatpush1.bf16.msra.mxu0 %v2042
        %2717 = vmatprep.subr.bf16.mxu0 %v2051
        %2718 = vmatpush1.bf16.msra.mxu0 %v2050
        %2719 = vmatprep.subr.bf16.mxu0 %v2059
        %2720 = vmatpush1.bf16.msra.mxu0 %v2058
        %2721 = vmatprep.subr.bf16.mxu0 %v2067
        %2722 = vmatpush1.bf16.msra.mxu0 %v2066
        %2723 = vmatprep.subr.bf16.mxu0 %v2075
        %2724 = vmatpush1.bf16.msra.mxu0 %v2074
        %2725 = vmatprep.subr.bf16.mxu0 %v2083
        %2726 = vmatpush1.bf16.msra.mxu0 %v2082
        %2727 = vmatprep.subr.bf16.mxu0 %v2091
        %2728 = vmatpush1.bf16.msra.mxu0 %v2090
        %2729 = vmatprep.subr.bf16.mxu0 %v2099
        %2730 = vmatpush1.bf16.msra.mxu0 %v2098
        %2731 = vmatprep.subr.bf16.mxu0 %v2107
        %2732 = vmatpush1.bf16.msra.mxu0 %v2106
        %2733 = vmatprep.subr.bf16.mxu0 %v2115
        %2734 = vmatpush1.bf16.msra.mxu0 %v2114
        %2735 = vmatprep.subr.bf16.mxu0 %v2123
        %2736 = vmatpush1.bf16.msra.mxu0 %v2122
        %2737 = vmatprep.subr.bf16.mxu0 %v2131
        %2738 = vmatpush1.bf16.msra.mxu0 %v2130
        %2739 = vmatprep.subr.bf16.mxu0 %v2139
        %2740 = vmatpush1.bf16.msra.mxu0 %v2138
        %2741 = vmatprep.subr.bf16.mxu0 %v2147
        %2742 = vmatpush1.bf16.msra.mxu0 %v2146
        %2743 = vmatprep.subr.bf16.mxu0 %v2155
        %2744 = vmatpush1.bf16.msra.mxu0 %v2154
        %2745 = vmatprep.mubr.bf16.mxu0 %v833
        %2746 = vmatmul.mubr.bf16.gmra.mrb[0].mxu0 %v832
        %v2747 = vpop.f32.mrb[0].mxu0
        %v2748 = vadd.f32 %v2705, %v2747
        %v2749 = vpop.f32.mrb[0].mxu0
        %v2750 = vadd.f32 %v2707, %v2749
        %v2751 = vpop.f32.mrb[0].mxu0
        %v2752 = vadd.f32 %v2709, %v2751
        %v2753 = vpop.f32.mrb[0].mxu0
        %v2754 = vadd.f32 %v2711, %v2753
        %2755 = vdwg.mxu0
        %v2756 = vmax.f32 %v2490, 0.0
        %v2757 = vmax.f32 %v2492, 0.0
        %v2758 = vmax.f32 %v2576, 0.0
        %v2759 = vmax.f32 %v2578, 0.0
        %v2760 = vmax.f32 %v2662, 0.0
        %v2761 = vmax.f32 %v2664, 0.0
        %v2762 = vmax.f32 %v2748, 0.0
        %v2763 = vmax.f32 %v2750, 0.0
        %v2764 = vmax.f32 %v2494, 0.0
        %v2765 = vmax.f32 %v2496, 0.0
        %v2766 = vmax.f32 %v2580, 0.0
        %v2767 = vmax.f32 %v2582, 0.0
        %v2768 = vmax.f32 %v2666, 0.0
        %v2769 = vmax.f32 %v2668, 0.0
        %v2770 = vmax.f32 %v2752, 0.0
        %v2771 = vmax.f32 %v2754, 0.0
        %v2772 = vpack.c.bf16 %v2764, %v2756
        %v2773 = vpack.c.bf16 %v2765, %v2757
        %v2774 = vpack.c.bf16 %v2766, %v2758
        %v2775 = vpack.c.bf16 %v2767, %v2759
        %v2776 = vpack.c.bf16 %v2768, %v2760
        %v2777 = vpack.c.bf16 %v2769, %v2761
        %v2778 = vpack.c.bf16 %v2770, %v2762
        %v2779 = vpack.c.bf16 %v2771, %v2763
        %v2780 = vld [vmem:[#allocation7] sm:$0xf]
        %v2781 = vld [vmem:[#allocation7 + $0x4] sm:$0xf]
        %v2782 = vld [vmem:[#allocation7 + $0x8] sm:$0xf]
        %v2783 = vld [vmem:[#allocation7 + $0xc] sm:$0xf]
        %v2784 = vld [vmem:[#allocation7 + $0x10] sm:$0xf]
        %v2785 = vld [vmem:[#allocation7 + $0x14] sm:$0xf]
        %v2786 = vld [vmem:[#allocation7 + $0x18] sm:$0xf]
        %v2787 = vld [vmem:[#allocation7 + $0x1c] sm:$0xf]
        %v2788 = vld [vmem:[#allocation7 + $0x20] sm:$0xf]
        %v2789 = vld [vmem:[#allocation7 + $0x24] sm:$0xf]
        %v2790 = vld [vmem:[#allocation7 + $0x28] sm:$0xf]
        %v2791 = vld [vmem:[#allocation7 + $0x2c] sm:$0xf]
        %v2792 = vld [vmem:[#allocation7 + $0x30] sm:$0xf]
        %v2793 = vld [vmem:[#allocation7 + $0x34] sm:$0xf]
        %v2794 = vld [vmem:[#allocation7 + $0x38] sm:$0xf]
        %v2795 = vld [vmem:[#allocation7 + $0x3c] sm:$0xf]
        %v2796 = vld [vmem:[#allocation7 + $0x40] sm:$0xf]
        %v2797 = vld [vmem:[#allocation7 + $0x44] sm:$0xf]
        %v2798 = vld [vmem:[#allocation7 + $0x48] sm:$0xf]
        %v2799 = vld [vmem:[#allocation7 + $0x4c] sm:$0xf]
        %v2800 = vld [vmem:[#allocation7 + $0x50] sm:$0xf]
        %v2801 = vld [vmem:[#allocation7 + $0x54] sm:$0xf]
        %v2802 = vld [vmem:[#allocation7 + $0x58] sm:$0xf]
        %v2803 = vld [vmem:[#allocation7 + $0x5c] sm:$0xf]
        %v2804 = vld [vmem:[#allocation7 + $0x60] sm:$0xf]
        %v2805 = vld [vmem:[#allocation7 + $0x64] sm:$0xf]
        %v2806 = vld [vmem:[#allocation7 + $0x68] sm:$0xf]
        %v2807 = vld [vmem:[#allocation7 + $0x6c] sm:$0xf]
        %v2808 = vld [vmem:[#allocation7 + $0x70] sm:$0xf]
        %v2809 = vld [vmem:[#allocation7 + $0x74] sm:$0xf]
        %v2810 = vld [vmem:[#allocation7 + $0x78] sm:$0xf]
        %v2811 = vld [vmem:[#allocation7 + $0x7c] sm:$0xf]
        %v2812 = vld [vmem:[#allocation7 + $0x80] sm:$0xf]
        %v2813 = vld [vmem:[#allocation7 + $0x84] sm:$0xf]
        %v2814 = vld [vmem:[#allocation7 + $0x88] sm:$0xf]
        %v2815 = vld [vmem:[#allocation7 + $0x8c] sm:$0xf]
        %v2816 = vld [vmem:[#allocation7 + $0x90] sm:$0xf]
        %v2817 = vld [vmem:[#allocation7 + $0x94] sm:$0xf]
        %v2818 = vld [vmem:[#allocation7 + $0x98] sm:$0xf]
        %v2819 = vld [vmem:[#allocation7 + $0x9c] sm:$0xf]
        %v2820 = vld [vmem:[#allocation7 + $0xa0] sm:$0xf]
        %v2821 = vld [vmem:[#allocation7 + $0xa4] sm:$0xf]
        %v2822 = vld [vmem:[#allocation7 + $0xa8] sm:$0xf]
        %v2823 = vld [vmem:[#allocation7 + $0xac] sm:$0xf]
        %v2824 = vld [vmem:[#allocation7 + $0xb0] sm:$0xf]
        %v2825 = vld [vmem:[#allocation7 + $0xb4] sm:$0xf]
        %v2826 = vld [vmem:[#allocation7 + $0xb8] sm:$0xf]
        %v2827 = vld [vmem:[#allocation7 + $0xbc] sm:$0xf]
        %v2828 = vld [vmem:[#allocation7 + $0xc0] sm:$0xf]
        %v2829 = vld [vmem:[#allocation7 + $0xc4] sm:$0xf]
        %v2830 = vld [vmem:[#allocation7 + $0xc8] sm:$0xf]
        %v2831 = vld [vmem:[#allocation7 + $0xcc] sm:$0xf]
        %v2832 = vld [vmem:[#allocation7 + $0xd0] sm:$0xf]
        %v2833 = vld [vmem:[#allocation7 + $0xd4] sm:$0xf]
        %v2834 = vld [vmem:[#allocation7 + $0xd8] sm:$0xf]
        %v2835 = vld [vmem:[#allocation7 + $0xdc] sm:$0xf]
        %v2836 = vld [vmem:[#allocation7 + $0xe0] sm:$0xf]
        %v2837 = vld [vmem:[#allocation7 + $0xe4] sm:$0xf]
        %v2838 = vld [vmem:[#allocation7 + $0xe8] sm:$0xf]
        %v2839 = vld [vmem:[#allocation7 + $0xec] sm:$0xf]
        %v2840 = vld [vmem:[#allocation7 + $0xf0] sm:$0xf]
        %v2841 = vld [vmem:[#allocation7 + $0xf4] sm:$0xf]
        %v2842 = vld [vmem:[#allocation7 + $0xf8] sm:$0xf]
        %v2843 = vld [vmem:[#allocation7 + $0xfc] sm:$0xf]
        %v2844 = vld [vmem:[#allocation7 + $0x100] sm:$0xf]
        %v2845 = vld [vmem:[#allocation7 + $0x104] sm:$0xf]
        %v2846 = vld [vmem:[#allocation7 + $0x108] sm:$0xf]
        %v2847 = vld [vmem:[#allocation7 + $0x10c] sm:$0xf]
        %v2848 = vld [vmem:[#allocation7 + $0x110] sm:$0xf]
        %v2849 = vld [vmem:[#allocation7 + $0x114] sm:$0xf]
        %v2850 = vld [vmem:[#allocation7 + $0x118] sm:$0xf]
        %v2851 = vld [vmem:[#allocation7 + $0x11c] sm:$0xf]
        %v2852 = vld [vmem:[#allocation7 + $0x120] sm:$0xf]
        %v2853 = vld [vmem:[#allocation7 + $0x124] sm:$0xf]
        %v2854 = vld [vmem:[#allocation7 + $0x128] sm:$0xf]
        %v2855 = vld [vmem:[#allocation7 + $0x12c] sm:$0xf]
        %v2856 = vld [vmem:[#allocation7 + $0x130] sm:$0xf]
        %v2857 = vld [vmem:[#allocation7 + $0x134] sm:$0xf]
        %v2858 = vld [vmem:[#allocation7 + $0x138] sm:$0xf]
        %v2859 = vld [vmem:[#allocation7 + $0x13c] sm:$0xf]
        %v2860 = vld [vmem:[#allocation7 + $0x140] sm:$0xf]
        %v2861 = vld [vmem:[#allocation7 + $0x144] sm:$0xf]
        %v2862 = vld [vmem:[#allocation7 + $0x148] sm:$0xf]
        %v2863 = vld [vmem:[#allocation7 + $0x14c] sm:$0xf]
        %v2864 = vld [vmem:[#allocation7 + $0x150] sm:$0xf]
        %v2865 = vld [vmem:[#allocation7 + $0x154] sm:$0xf]
        %v2866 = vld [vmem:[#allocation7 + $0x158] sm:$0xf]
        %v2867 = vld [vmem:[#allocation7 + $0x15c] sm:$0xf]
        %v2868 = vld [vmem:[#allocation7 + $0x160] sm:$0xf]
        %v2869 = vld [vmem:[#allocation7 + $0x164] sm:$0xf]
        %v2870 = vld [vmem:[#allocation7 + $0x168] sm:$0xf]
        %v2871 = vld [vmem:[#allocation7 + $0x16c] sm:$0xf]
        %v2872 = vld [vmem:[#allocation7 + $0x170] sm:$0xf]
        %v2873 = vld [vmem:[#allocation7 + $0x174] sm:$0xf]
        %v2874 = vld [vmem:[#allocation7 + $0x178] sm:$0xf]
        %v2875 = vld [vmem:[#allocation7 + $0x17c] sm:$0xf]
        %v2876 = vld [vmem:[#allocation7 + $0x180] sm:$0xf]
        %v2877 = vld [vmem:[#allocation7 + $0x184] sm:$0xf]
        %v2878 = vld [vmem:[#allocation7 + $0x188] sm:$0xf]
        %v2879 = vld [vmem:[#allocation7 + $0x18c] sm:$0xf]
        %v2880 = vld [vmem:[#allocation7 + $0x190] sm:$0xf]
        %v2881 = vld [vmem:[#allocation7 + $0x194] sm:$0xf]
        %v2882 = vld [vmem:[#allocation7 + $0x198] sm:$0xf]
        %v2883 = vld [vmem:[#allocation7 + $0x19c] sm:$0xf]
        %v2884 = vld [vmem:[#allocation7 + $0x1a0] sm:$0xf]
        %v2885 = vld [vmem:[#allocation7 + $0x1a4] sm:$0xf]
        %v2886 = vld [vmem:[#allocation7 + $0x1a8] sm:$0xf]
        %v2887 = vld [vmem:[#allocation7 + $0x1ac] sm:$0xf]
        %v2888 = vld [vmem:[#allocation7 + $0x1b0] sm:$0xf]
        %v2889 = vld [vmem:[#allocation7 + $0x1b4] sm:$0xf]
        %v2890 = vld [vmem:[#allocation7 + $0x1b8] sm:$0xf]
        %v2891 = vld [vmem:[#allocation7 + $0x1bc] sm:$0xf]
        %v2892 = vld [vmem:[#allocation7 + $0x1c0] sm:$0xf]
        %v2893 = vld [vmem:[#allocation7 + $0x1c4] sm:$0xf]
        %v2894 = vld [vmem:[#allocation7 + $0x1c8] sm:$0xf]
        %v2895 = vld [vmem:[#allocation7 + $0x1cc] sm:$0xf]
        %v2896 = vld [vmem:[#allocation7 + $0x1d0] sm:$0xf]
        %v2897 = vld [vmem:[#allocation7 + $0x1d4] sm:$0xf]
        %v2898 = vld [vmem:[#allocation7 + $0x1d8] sm:$0xf]
        %v2899 = vld [vmem:[#allocation7 + $0x1dc] sm:$0xf]
        %v2900 = vld [vmem:[#allocation7 + $0x1e0] sm:$0xf]
        %v2901 = vld [vmem:[#allocation7 + $0x1e4] sm:$0xf]
        %v2902 = vld [vmem:[#allocation7 + $0x1e8] sm:$0xf]
        %v2903 = vld [vmem:[#allocation7 + $0x1ec] sm:$0xf]
        %v2904 = vld [vmem:[#allocation7 + $0x1f0] sm:$0xf]
        %v2905 = vld [vmem:[#allocation7 + $0x1f4] sm:$0xf]
        %v2906 = vld [vmem:[#allocation7 + $0x1f8] sm:$0xf]
        %v2907 = vld [vmem:[#allocation7 + $0x1fc] sm:$0xf]
        %v2908 = vld [vmem:[%s8] sm:$0x1]
        %v2910 = vlaneseq
        %v2911 = vshrl.u32 %v2910, 7
        %v2912 = vsub.s32 0, %v2911
        %v2913 = vrot.slane %v2908, %v2912
        %v3043 = vunpack.c.l.b16 %v2780
        %v3044 = vunpack.c.l.b16 %v2781
        %v3045 = vunpack.c.l.b16 %v2782
        %v3046 = vunpack.c.l.b16 %v2783
        %v3047 = vunpack.c.l.b16 %v2784
        %v3048 = vunpack.c.l.b16 %v2785
        %v3049 = vunpack.c.l.b16 %v2786
        %v3050 = vunpack.c.l.b16 %v2787
        %v3051 = vunpack.c.l.b16 %v2788
        %v3052 = vunpack.c.l.b16 %v2789
        %v3053 = vunpack.c.l.b16 %v2790
        %v3054 = vunpack.c.l.b16 %v2791
        %v3055 = vunpack.c.l.b16 %v2792
        %v3056 = vunpack.c.l.b16 %v2793
        %v3057 = vunpack.c.l.b16 %v2794
        %v3058 = vunpack.c.l.b16 %v2795
        %v3059 = vunpack.c.l.b16 %v2796
        %v3060 = vunpack.c.l.b16 %v2797
        %v3061 = vunpack.c.l.b16 %v2798
        %v3062 = vunpack.c.l.b16 %v2799
        %v3063 = vunpack.c.l.b16 %v2800
        %v3064 = vunpack.c.l.b16 %v2801
        %v3065 = vunpack.c.l.b16 %v2802
        %v3066 = vunpack.c.l.b16 %v2803
        %v3067 = vunpack.c.l.b16 %v2804
        %v3068 = vunpack.c.l.b16 %v2805
        %v3069 = vunpack.c.l.b16 %v2806
        %v3070 = vunpack.c.l.b16 %v2807
        %v3071 = vunpack.c.l.b16 %v2808
        %v3072 = vunpack.c.l.b16 %v2809
        %v3073 = vunpack.c.l.b16 %v2810
        %v3074 = vunpack.c.l.b16 %v2811
        %v3075 = vunpack.c.l.b16 %v2812
        %v3076 = vunpack.c.l.b16 %v2813
        %v3077 = vunpack.c.l.b16 %v2814
        %v3078 = vunpack.c.l.b16 %v2815
        %v3079 = vunpack.c.l.b16 %v2816
        %v3080 = vunpack.c.l.b16 %v2817
        %v3081 = vunpack.c.l.b16 %v2818
        %v3082 = vunpack.c.l.b16 %v2819
        %v3083 = vunpack.c.l.b16 %v2820
        %v3084 = vunpack.c.l.b16 %v2821
        %v3085 = vunpack.c.l.b16 %v2822
        %v3086 = vunpack.c.l.b16 %v2823
        %v3087 = vunpack.c.l.b16 %v2824
        %v3088 = vunpack.c.l.b16 %v2825
        %v3089 = vunpack.c.l.b16 %v2826
        %v3090 = vunpack.c.l.b16 %v2827
        %v3091 = vunpack.c.l.b16 %v2828
        %v3092 = vunpack.c.l.b16 %v2829
        %v3093 = vunpack.c.l.b16 %v2830
        %v3094 = vunpack.c.l.b16 %v2831
        %v3095 = vunpack.c.l.b16 %v2832
        %v3096 = vunpack.c.l.b16 %v2833
        %v3097 = vunpack.c.l.b16 %v2834
        %v3098 = vunpack.c.l.b16 %v2835
        %v3099 = vunpack.c.l.b16 %v2836
        %v3100 = vunpack.c.l.b16 %v2837
        %v3101 = vunpack.c.l.b16 %v2838
        %v3102 = vunpack.c.l.b16 %v2839
        %v3103 = vunpack.c.l.b16 %v2840
        %v3104 = vunpack.c.l.b16 %v2841
        %v3105 = vunpack.c.l.b16 %v2842
        %v3106 = vunpack.c.l.b16 %v2843
        %v3107 = vunpack.c.l.b16 %v2844
        %v3108 = vunpack.c.l.b16 %v2845
        %v3109 = vunpack.c.l.b16 %v2846
        %v3110 = vunpack.c.l.b16 %v2847
        %v3111 = vunpack.c.l.b16 %v2848
        %v3112 = vunpack.c.l.b16 %v2849
        %v3113 = vunpack.c.l.b16 %v2850
        %v3114 = vunpack.c.l.b16 %v2851
        %v3115 = vunpack.c.l.b16 %v2852
        %v3116 = vunpack.c.l.b16 %v2853
        %v3117 = vunpack.c.l.b16 %v2854
        %v3118 = vunpack.c.l.b16 %v2855
        %v3119 = vunpack.c.l.b16 %v2856
        %v3120 = vunpack.c.l.b16 %v2857
        %v3121 = vunpack.c.l.b16 %v2858
        %v3122 = vunpack.c.l.b16 %v2859
        %v3123 = vunpack.c.l.b16 %v2860
        %v3124 = vunpack.c.l.b16 %v2861
        %v3125 = vunpack.c.l.b16 %v2862
        %v3126 = vunpack.c.l.b16 %v2863
        %v3127 = vunpack.c.l.b16 %v2864
        %v3128 = vunpack.c.l.b16 %v2865
        %v3129 = vunpack.c.l.b16 %v2866
        %v3130 = vunpack.c.l.b16 %v2867
        %v3131 = vunpack.c.l.b16 %v2868
        %v3132 = vunpack.c.l.b16 %v2869
        %v3133 = vunpack.c.l.b16 %v2870
        %v3134 = vunpack.c.l.b16 %v2871
        %v3135 = vunpack.c.l.b16 %v2872
        %v3136 = vunpack.c.l.b16 %v2873
        %v3137 = vunpack.c.l.b16 %v2874
        %v3138 = vunpack.c.l.b16 %v2875
        %v3139 = vunpack.c.l.b16 %v2876
        %v3140 = vunpack.c.l.b16 %v2877
        %v3141 = vunpack.c.l.b16 %v2878
        %v3142 = vunpack.c.l.b16 %v2879
        %v3143 = vunpack.c.l.b16 %v2880
        %v3144 = vunpack.c.l.b16 %v2881
        %v3145 = vunpack.c.l.b16 %v2882
        %v3146 = vunpack.c.l.b16 %v2883
        %v3147 = vunpack.c.l.b16 %v2884
        %v3148 = vunpack.c.l.b16 %v2885
        %v3149 = vunpack.c.l.b16 %v2886
        %v3150 = vunpack.c.l.b16 %v2887
        %v3151 = vunpack.c.l.b16 %v2888
        %v3152 = vunpack.c.l.b16 %v2889
        %v3153 = vunpack.c.l.b16 %v2890
        %v3154 = vunpack.c.l.b16 %v2891
        %v3155 = vunpack.c.l.b16 %v2892
        %v3156 = vunpack.c.l.b16 %v2893
        %v3157 = vunpack.c.l.b16 %v2894
        %v3158 = vunpack.c.l.b16 %v2895
        %v3159 = vunpack.c.l.b16 %v2896
        %v3160 = vunpack.c.l.b16 %v2897
        %v3161 = vunpack.c.l.b16 %v2898
        %v3162 = vunpack.c.l.b16 %v2899
        %v3163 = vunpack.c.l.b16 %v2900
        %v3164 = vunpack.c.l.b16 %v2901
        %v3165 = vunpack.c.l.b16 %v2902
        %v3166 = vunpack.c.l.b16 %v2903
        %v3167 = vunpack.c.l.b16 %v2904
        %v3168 = vunpack.c.l.b16 %v2905
        %v3169 = vunpack.c.l.b16 %v2906
        %v3170 = vunpack.c.l.b16 %v2907
        %v3171 = vpack.c.b16 %v3044, %v3043
        %v3172 = vpack.c.b16 %v3046, %v3045
        %v3173 = vpack.c.b16 %v3048, %v3047
        %v3174 = vpack.c.b16 %v3050, %v3049
        %v3175 = vpack.c.b16 %v3052, %v3051
        %v3176 = vpack.c.b16 %v3054, %v3053
        %v3177 = vpack.c.b16 %v3056, %v3055
        %v3178 = vpack.c.b16 %v3058, %v3057
        %v3179 = vpack.c.b16 %v3060, %v3059
        %v3180 = vpack.c.b16 %v3062, %v3061
        %v3181 = vpack.c.b16 %v3064, %v3063
        %v3182 = vpack.c.b16 %v3066, %v3065
        %v3183 = vpack.c.b16 %v3068, %v3067
        %v3184 = vpack.c.b16 %v3070, %v3069
        %v3185 = vpack.c.b16 %v3072, %v3071
        %v3186 = vpack.c.b16 %v3074, %v3073
        %v3187 = vpack.c.b16 %v3076, %v3075
        %v3188 = vpack.c.b16 %v3078, %v3077
        %v3189 = vpack.c.b16 %v3080, %v3079
        %v3190 = vpack.c.b16 %v3082, %v3081
        %v3191 = vpack.c.b16 %v3084, %v3083
        %v3192 = vpack.c.b16 %v3086, %v3085
        %v3193 = vpack.c.b16 %v3088, %v3087
        %v3194 = vpack.c.b16 %v3090, %v3089
        %v3195 = vpack.c.b16 %v3092, %v3091
        %v3196 = vpack.c.b16 %v3094, %v3093
        %v3197 = vpack.c.b16 %v3096, %v3095
        %v3198 = vpack.c.b16 %v3098, %v3097
        %v3199 = vpack.c.b16 %v3100, %v3099
        %v3200 = vpack.c.b16 %v3102, %v3101
        %v3201 = vpack.c.b16 %v3104, %v3103
        %v3202 = vpack.c.b16 %v3106, %v3105
        %v3203 = vpack.c.b16 %v3108, %v3107
        %v3204 = vpack.c.b16 %v3110, %v3109
        %v3205 = vpack.c.b16 %v3112, %v3111
        %v3206 = vpack.c.b16 %v3114, %v3113
        %v3207 = vpack.c.b16 %v3116, %v3115
        %v3208 = vpack.c.b16 %v3118, %v3117
        %v3209 = vpack.c.b16 %v3120, %v3119
        %v3210 = vpack.c.b16 %v3122, %v3121
        %v3211 = vpack.c.b16 %v3124, %v3123
        %v3212 = vpack.c.b16 %v3126, %v3125
        %v3213 = vpack.c.b16 %v3128, %v3127
        %v3214 = vpack.c.b16 %v3130, %v3129
        %v3215 = vpack.c.b16 %v3132, %v3131
        %v3216 = vpack.c.b16 %v3134, %v3133
        %v3217 = vpack.c.b16 %v3136, %v3135
        %v3218 = vpack.c.b16 %v3138, %v3137
        %v3219 = vpack.c.b16 %v3140, %v3139
        %v3220 = vpack.c.b16 %v3142, %v3141
        %v3221 = vpack.c.b16 %v3144, %v3143
        %v3222 = vpack.c.b16 %v3146, %v3145
        %v3223 = vpack.c.b16 %v3148, %v3147
        %v3224 = vpack.c.b16 %v3150, %v3149
        %v3225 = vpack.c.b16 %v3152, %v3151
        %v3226 = vpack.c.b16 %v3154, %v3153
        %v3227 = vpack.c.b16 %v3156, %v3155
        %v3228 = vpack.c.b16 %v3158, %v3157
        %v3229 = vpack.c.b16 %v3160, %v3159
        %v3230 = vpack.c.b16 %v3162, %v3161
        %v3231 = vpack.c.b16 %v3164, %v3163
        %v3232 = vpack.c.b16 %v3166, %v3165
        %v3233 = vpack.c.b16 %v3168, %v3167
        %v3234 = vpack.c.b16 %v3170, %v3169
        %3299 = vmatprep.subr.bf16.mxu0 0
        %3300 = vmatpush1.bf16.msra.mxu0 %v3171
        %3301 = vmatprep.subr.bf16.mxu0 0
        %3302 = vmatpush1.bf16.msra.mxu0 %v3172
        %3303 = vmatprep.subr.bf16.mxu0 0
        %3304 = vmatpush1.bf16.msra.mxu0 %v3173
        %3305 = vmatprep.subr.bf16.mxu0 0
        %3306 = vmatpush1.bf16.msra.mxu0 %v3174
        %3307 = vmatprep.subr.bf16.mxu0 0
        %3308 = vmatpush1.bf16.msra.mxu0 %v3175
        %3309 = vmatprep.subr.bf16.mxu0 0
        %3310 = vmatpush1.bf16.msra.mxu0 %v3176
        %3311 = vmatprep.subr.bf16.mxu0 0
        %3312 = vmatpush1.bf16.msra.mxu0 %v3177
        %3313 = vmatprep.subr.bf16.mxu0 0
        %3314 = vmatpush1.bf16.msra.mxu0 %v3178
        %3315 = vmatprep.subr.bf16.mxu0 0
        %3316 = vmatpush1.bf16.msra.mxu0 %v3179
        %3317 = vmatprep.subr.bf16.mxu0 0
        %3318 = vmatpush1.bf16.msra.mxu0 %v3180
        %3319 = vmatprep.subr.bf16.mxu0 0
        %3320 = vmatpush1.bf16.msra.mxu0 %v3181
        %3321 = vmatprep.subr.bf16.mxu0 0
        %3322 = vmatpush1.bf16.msra.mxu0 %v3182
        %3323 = vmatprep.subr.bf16.mxu0 0
        %3324 = vmatpush1.bf16.msra.mxu0 %v3183
        %3325 = vmatprep.subr.bf16.mxu0 0
        %3326 = vmatpush1.bf16.msra.mxu0 %v3184
        %3327 = vmatprep.subr.bf16.mxu0 0
        %3328 = vmatpush1.bf16.msra.mxu0 %v3185
        %3329 = vmatprep.subr.bf16.mxu0 0
        %3330 = vmatpush1.bf16.msra.mxu0 %v3186
        %3331 = vmatprep.mubr.bf16.mxu0 %v2773
        %3332 = vmatmul.mubr.bf16.gmra.mrb[0].mxu0 %v2772
        %v3333 = vpop.f32.mrb[0].mxu0
        %v3334 = vadd.f32 %v2913, %v3333
        %v3335 = vpop.f32.mrb[0].mxu0
        %v3336 = vpop.f32.mrb[0].mxu0
        %v3337 = vadd.f32 %v2913, %v3336
        %v3338 = vpop.f32.mrb[0].mxu0
        %3339 = vdwg.mxu0
        %3340 = vmatprep.subr.bf16.mxu0 0
        %3341 = vmatpush1.bf16.msra.mxu0 %v3187
        %3342 = vmatprep.subr.bf16.mxu0 0
        %3343 = vmatpush1.bf16.msra.mxu0 %v3188
        %3344 = vmatprep.subr.bf16.mxu0 0
        %3345 = vmatpush1.bf16.msra.mxu0 %v3189
        %3346 = vmatprep.subr.bf16.mxu0 0
        %3347 = vmatpush1.bf16.msra.mxu0 %v3190
        %3348 = vmatprep.subr.bf16.mxu0 0
        %3349 = vmatpush1.bf16.msra.mxu0 %v3191
        %3350 = vmatprep.subr.bf16.mxu0 0
        %3351 = vmatpush1.bf16.msra.mxu0 %v3192
        %3352 = vmatprep.subr.bf16.mxu0 0
        %3353 = vmatpush1.bf16.msra.mxu0 %v3193
        %3354 = vmatprep.subr.bf16.mxu0 0
        %3355 = vmatpush1.bf16.msra.mxu0 %v3194
        %3356 = vmatprep.subr.bf16.mxu0 0
        %3357 = vmatpush1.bf16.msra.mxu0 %v3195
        %3358 = vmatprep.subr.bf16.mxu0 0
        %3359 = vmatpush1.bf16.msra.mxu0 %v3196
        %3360 = vmatprep.subr.bf16.mxu0 0
        %3361 = vmatpush1.bf16.msra.mxu0 %v3197
        %3362 = vmatprep.subr.bf16.mxu0 0
        %3363 = vmatpush1.bf16.msra.mxu0 %v3198
        %3364 = vmatprep.subr.bf16.mxu0 0
        %3365 = vmatpush1.bf16.msra.mxu0 %v3199
        %3366 = vmatprep.subr.bf16.mxu0 0
        %3367 = vmatpush1.bf16.msra.mxu0 %v3200
        %3368 = vmatprep.subr.bf16.mxu0 0
        %3369 = vmatpush1.bf16.msra.mxu0 %v3201
        %3370 = vmatprep.subr.bf16.mxu0 0
        %3371 = vmatpush1.bf16.msra.mxu0 %v3202
        %3372 = vmatprep.mubr.bf16.mxu0 %v2775
        %3373 = vmatmul.mubr.bf16.gmra.mrb[0].mxu0 %v2774
        %v3374 = vpop.f32.mrb[0].mxu0
        %v3375 = vadd.f32 %v3334, %v3374
        %v3376 = vpop.f32.mrb[0].mxu0
        %v3377 = vpop.f32.mrb[0].mxu0
        %v3378 = vadd.f32 %v3337, %v3377
        %v3379 = vpop.f32.mrb[0].mxu0
        %3380 = vdwg.mxu0
        %3381 = vmatprep.subr.bf16.mxu0 0
        %3382 = vmatpush1.bf16.msra.mxu0 %v3203
        %3383 = vmatprep.subr.bf16.mxu0 0
        %3384 = vmatpush1.bf16.msra.mxu0 %v3204
        %3385 = vmatprep.subr.bf16.mxu0 0
        %3386 = vmatpush1.bf16.msra.mxu0 %v3205
        %3387 = vmatprep.subr.bf16.mxu0 0
        %3388 = vmatpush1.bf16.msra.mxu0 %v3206
        %3389 = vmatprep.subr.bf16.mxu0 0
        %3390 = vmatpush1.bf16.msra.mxu0 %v3207
        %3391 = vmatprep.subr.bf16.mxu0 0
        %3392 = vmatpush1.bf16.msra.mxu0 %v3208
        %3393 = vmatprep.subr.bf16.mxu0 0
        %3394 = vmatpush1.bf16.msra.mxu0 %v3209
        %3395 = vmatprep.subr.bf16.mxu0 0
        %3396 = vmatpush1.bf16.msra.mxu0 %v3210
        %3397 = vmatprep.subr.bf16.mxu0 0
        %3398 = vmatpush1.bf16.msra.mxu0 %v3211
        %3399 = vmatprep.subr.bf16.mxu0 0
        %3400 = vmatpush1.bf16.msra.mxu0 %v3212
        %3401 = vmatprep.subr.bf16.mxu0 0
        %3402 = vmatpush1.bf16.msra.mxu0 %v3213
        %3403 = vmatprep.subr.bf16.mxu0 0
        %3404 = vmatpush1.bf16.msra.mxu0 %v3214
        %3405 = vmatprep.subr.bf16.mxu0 0
        %3406 = vmatpush1.bf16.msra.mxu0 %v3215
        %3407 = vmatprep.subr.bf16.mxu0 0
        %3408 = vmatpush1.bf16.msra.mxu0 %v3216
        %3409 = vmatprep.subr.bf16.mxu0 0
        %3410 = vmatpush1.bf16.msra.mxu0 %v3217
        %3411 = vmatprep.subr.bf16.mxu0 0
        %3412 = vmatpush1.bf16.msra.mxu0 %v3218
        %3413 = vmatprep.mubr.bf16.mxu0 %v2777
        %3414 = vmatmul.mubr.bf16.gmra.mrb[0].mxu0 %v2776
        %v3415 = vpop.f32.mrb[0].mxu0
        %v3416 = vadd.f32 %v3375, %v3415
        %v3417 = vpop.f32.mrb[0].mxu0
        %v3418 = vpop.f32.mrb[0].mxu0
        %v3419 = vadd.f32 %v3378, %v3418
        %v3420 = vpop.f32.mrb[0].mxu0
        %3421 = vdwg.mxu0
        %3422 = vmatprep.subr.bf16.mxu0 0
        %3423 = vmatpush1.bf16.msra.mxu0 %v3219
        %3424 = vmatprep.subr.bf16.mxu0 0
        %3425 = vmatpush1.bf16.msra.mxu0 %v3220
        %3426 = vmatprep.subr.bf16.mxu0 0
        %3427 = vmatpush1.bf16.msra.mxu0 %v3221
        %3428 = vmatprep.subr.bf16.mxu0 0
        %3429 = vmatpush1.bf16.msra.mxu0 %v3222
        %3430 = vmatprep.subr.bf16.mxu0 0
        %3431 = vmatpush1.bf16.msra.mxu0 %v3223
        %3432 = vmatprep.subr.bf16.mxu0 0
        %3433 = vmatpush1.bf16.msra.mxu0 %v3224
        %3434 = vmatprep.subr.bf16.mxu0 0
        %3435 = vmatpush1.bf16.msra.mxu0 %v3225
        %3436 = vmatprep.subr.bf16.mxu0 0
        %3437 = vmatpush1.bf16.msra.mxu0 %v3226
        %3438 = vmatprep.subr.bf16.mxu0 0
        %3439 = vmatpush1.bf16.msra.mxu0 %v3227
        %3440 = vmatprep.subr.bf16.mxu0 0
        %3441 = vmatpush1.bf16.msra.mxu0 %v3228
        %3442 = vmatprep.subr.bf16.mxu0 0
        %3443 = vmatpush1.bf16.msra.mxu0 %v3229
        %3444 = vmatprep.subr.bf16.mxu0 0
        %3445 = vmatpush1.bf16.msra.mxu0 %v3230
        %3446 = vmatprep.subr.bf16.mxu0 0
        %3447 = vmatpush1.bf16.msra.mxu0 %v3231
        %3448 = vmatprep.subr.bf16.mxu0 0
        %3449 = vmatpush1.bf16.msra.mxu0 %v3232
        %3450 = vmatprep.subr.bf16.mxu0 0
        %3451 = vmatpush1.bf16.msra.mxu0 %v3233
        %3452 = vmatprep.subr.bf16.mxu0 0
        %3453 = vmatpush1.bf16.msra.mxu0 %v3234
        %3454 = vmatprep.mubr.bf16.mxu0 %v2779
        %3455 = vmatmul.mubr.bf16.gmra.mrb[0].mxu0 %v2778
        %v3456 = vpop.f32.mrb[0].mxu0
        %v3457 = vadd.f32 %v3416, %v3456
        %v3458 = vpop.f32.mrb[0].mxu0
        %v3459 = vpop.f32.mrb[0].mxu0
        %v3460 = vadd.f32 %v3419, %v3459
        %v3461 = vpop.f32.mrb[0].mxu0
        %3462 = vdwg.mxu0
        %3463 = vst [vmem:[%s370] sm:$0xff] %v3457
        %3464 = vst [vmem:[%s370 + $0x8] sm:$0xff] %v3460
        %s3465 = sand.u32 %s227, 1
        %s3466 = scalar_lea.sflag [#allocation4], %s3465
        %s3467 = sand.u32 %s227, 1
        %s3468 = smul.addr %s3467, 16
        %s3469 = scalar_lea.vmem [#allocation8], %s3468
        // Predicated region
        $region69: #{tpu_custom_call.1} parent=55 // pred_check
          %p3470 = pneg %p237
        $region70: #{tpu_custom_call.1} parent=55 // pred_check_branch
          %3472 = sbr.rel (%p3470) target = $region72
        $region71: #{tpu_custom_call.1} parent=55 // pred_region
          %s3473 = smul.u32 2, %s25
          %s3475 = ssub.s32 256, 256
          %3476 = vsyncadd %s3466, %s3475
          %s3477 = smul.addr %s3473, 128
          %s3478 = scalar_lea.hbm %s9, %s3477
          %s3479 = sshll.u32 %s3469, 4
          %s3480 = int_to_ptr.vmem [resolvable:$true] %s3479
          %3485 = dma.vmem_to_hbm [thread:$0]  %s3480, 256, %s3478, %s3466, 128, 128, 8
        $region72: #{tpu_custom_call.1} parent=55 // pred_fallthru
          _
      $region56: #{tpu_custom_call.1} parent=5 // pred_fallthru
        _
      %p3486 = scmp.le.s32.totalorder 2, %s20
      // Predicated region
      $region73: #{tpu_custom_call.1} parent=5 // pred_check
        %p3487 = pneg %p3486
      $region74: #{tpu_custom_call.1} parent=5 // pred_check_branch
        %3489 = sbr.rel (%p3487) target = $region76
      $region75: #{tpu_custom_call.1} parent=5 // pred_region
        %s3490 = ssub.s32 %s20, 2
        // Predicated region
        $region77: #{tpu_custom_call.1} parent=75 // pred_check
          %p3491 = pneg %p243
        $region78: #{tpu_custom_call.1} parent=75 // pred_check_branch
          %3493 = sbr.rel (%p3491) target = $region80
        $region79: #{tpu_custom_call.1} parent=75 // pred_region
          %s3494 = sand.u32 %s228, 1
          %s3495 = scalar_lea.sflag [#allocation4], %s3494
          %s3496 = sand.u32 %s228, 1
          %s3497 = smul.addr %s3496, 16
          %s3498 = scalar_lea.vmem [#allocation8], %s3497
          %3499 = dma.done %s3495, 256
        $region80: #{tpu_custom_call.1} parent=75 // pred_fallthru
          _
      $region76: #{tpu_custom_call.1} parent=5 // pred_fallthru
        _
    $region6: #{tpu_custom_call.1} parent=1 // loop_footer
      %s24 = sadd.s32 1, %s20
    $region7: #{tpu_custom_call.1} parent=1 // loop_footer_branch
      %19 = sbr.rel target = $region3
    $region8: #{tpu_custom_call.1} parent=1 // loop_exit
      _
    %3500 = vsyncpa [#allocation3], 1
    %s3501 = scalar_lea.sflag [#allocation3], 1
    %3502 = vsyncpa %s3501, 1
    %3503 = vsyncpa [#allocation6], 1
    %3504 = vsyncpa [#allocation4], 1
    %s3505 = scalar_lea.sflag [#allocation4], 1
    %3506 = vsyncpa %s3505, 1

// kernel: tpu_custom_call.1
$region0: #{tpu_custom_call.1}
  #allocation0 [shape = 'u32[]', space=smem, size = 0x4, offset = 0x4, fixed_abs, tag = 'smem constant byte address 0x4 - core index']
  #allocation1 [shape = 'u32[144,128]{1,0:T(1,128)}', space=vmem, size = 0x12000, scoped, tag = 'internal scratch']
  %s0 = inlined_call_operand.vmem [shape: f32[32,8], index: 0, kind: input, shape index: {}]
  %s1 = inlined_call_operand.vmem [shape: f32[8,128], index: 1, kind: input, shape index: {}]
  %s2 = inlined_call_operand.vmem [shape: f32[1,128], index: 2, kind: input, shape index: {}]
  %s3 = inlined_call_operand.hbm [shape: bf16[128,512], index: 3, kind: input, shape index: {}]
  %s4 = inlined_call_operand.vmem [shape: f32[1,512], index: 4, kind: input, shape index: {}]
  %s5 = inlined_call_operand.hbm [shape: bf16[512,1024], index: 5, kind: input, shape index: {}]
  %s6 = inlined_call_operand.vmem [shape: f32[1,1024], index: 6, kind: input, shape index: {}]
  %s7 = inlined_call_operand.hbm [shape: bf16[1024,128], index: 7, kind: input, shape index: {}]
  %s8 = inlined_call_operand.vmem [shape: f32[1,128], index: 8, kind: input, shape index: {}]
  %s9 = inlined_call_operand.hbm [shape: f32[32,128], index: 9, kind: output, shape index: {}]
  %s10 = sld [smem:[#allocation0]]
  $region81: #{tpu_custom_call.1} parent=0
    _
  %s12 = ssub.s32 1, %s10
  %s13 = scalar_select 0, %s12, %s10
  $region1: #{tpu_custom_call.1} parent=0
    #allocation2 [shape = 'u8[131072]{0}', space=vmem, size = 0x20000, scoped, tag = 'input window, operand 3, single buffered']
    #allocation3 [shape = 's32[2]{0}', space=sflag, size = 0x8, scoped, tag = 'scoped memory for tpu_custom_call.1']
    #allocation4 [shape = 's32[2]{0}', space=sflag, size = 0x8, scoped, tag = 'scoped memory for tpu_custom_call.1']
    #allocation5 [shape = 'u8[1048576]{0}', space=vmem, size = 0x100000, scoped, tag = 'input window, operand 5, single buffered']
    #allocation6 [shape = 's32[1]{0}', space=sflag, size = 0x4, scoped, tag = 'scoped memory for tpu_custom_call.1']
    #allocation7 [shape = 'u8[262144]{0}', space=vmem, size = 0x40000, scoped, tag = 'input window, operand 7, single buffered']
    #allocation8 [shape = 'u8[16384]{0}', space=vmem, size = 0x4000, scoped, tag = 'output window, operand 0']
    %14 = vsyncpa [#allocation3], 0
    %15 = vsyncpa [#allocation6], 0
    %16 = vsyncpa [#allocation4], 0
    %s17 = scalar_lea.sflag [#allocation4], 1
    %18 = vsyncpa %s17, 0
    loop: start=0, step=1, limit=4
    $region2: #{tpu_custom_call.1} parent=1 // loop_pre_header
      _
    $region3: #{tpu_custom_call.1} parent=1 // loop_header
      %s20 = sphi 0, %s24
      %p21 = scmp.ge.s32.totalorder %s20, 4
      %s30 = sphi 0, %s32
      %s33 = sphi 0, %s30
      %s34 = sphi 0, %s33
      %s50 = sphi 0, %s34
      %s54 = sphi 0, %s54
      %s56 = sphi 0, %s54
      %s57 = sphi 0, %s56
      %s71 = sphi 0, %s57
      %s75 = sphi 0, %s75
      %s77 = sphi 0, %s75
      %s78 = sphi 0, %s77
      %s92 = sphi 0, %s78
      %s96 = sphi 0, %s96
      %s98 = sphi 0, %s96
      %s99 = sphi 0, %s98
      %s113 = sphi 0, %s99
      %s117 = sphi 0, %s117
      %s119 = sphi 0, %s117
      %s120 = sphi 0, %s119
      %s134 = sphi 0, %s120
      %s138 = sphi 0, %s138
      %s140 = sphi 0, %s138
      %s141 = sphi 0, %s140
      %s155 = sphi 0, %s141
      %s159 = sphi 0, %s159
      %s161 = sphi 0, %s159
      %s162 = sphi 0, %s161
      %s176 = sphi 0, %s162
      %s180 = sphi 0, %s180
      %s182 = sphi 0, %s180
      %s183 = sphi 0, %s182
      %s197 = sphi 0, %s183
      %s201 = sphi 0, %s201
      %s203 = sphi 0, %s201
      %s204 = sphi 0, %s203
      %s218 = sphi 0, %s204
      %s224 = sphi 0, %s226
      %s227 = sphi 0, %s224
      %s228 = sphi 0, %s227
      %s244 = sphi 0, %s228
    $region4: #{tpu_custom_call.1} parent=1 // loop_header_branch
      %23 = sbr.rel (%p21) target = $region8
    $region5: #{tpu_custom_call.1} parent=1 // loop_body
      %s25 = ssub.s32 %s20, 1
      %s26 = ssub.s32 %s20, 2
      %s27 = sadd.s32 %s20, 1
      %s28 = ssub.s32 %s20, %s27
      %p29 = scmp.eq.s32.totalorder %s28, 0
      %s31 = sadd.s32 %s30, 1
      %s32 = scalar_select %p29, %s30, %s31
      %p35 = pneg %p29
      %p36 = scmp.eq.s32.totalorder %s20, 1
      %p37 = por %p35, %p36
      %p38 = scmp.ne.s32.totalorder %s30, %s33
      %p39 = scmp.eq.s32.totalorder %s20, 0
      %p40 = por %p38, %p39
      %p41 = scmp.ne.s32.totalorder %s30, %s33
      %p42 = scmp.eq.s32.totalorder %s25, 1
      %p43 = por %p41, %p42
      %p44 = scmp.ne.s32.totalorder %s33, %s34
      %p45 = scmp.eq.s32.totalorder %s25, 0
      %p46 = por %p44, %p45
      %p47 = scmp.ne.s32.totalorder %s33, %s34
      %p48 = scmp.eq.s32.totalorder %s26, 1
      %p49 = por %p47, %p48
      %p51 = scmp.ne.s32.totalorder %s34, %s50
      %p52 = scmp.eq.s32.totalorder %s26, 0
      %p53 = por %p51, %p52
      %s55 = sadd.s32 %s54, 1
      %p58 = scmp.eq.s32.totalorder %s20, 1
      %p59 = scmp.ne.s32.totalorder %s54, %s56
      %p60 = scmp.eq.s32.totalorder %s20, 0
      %p61 = por %p59, %p60
      %p62 = scmp.ne.s32.totalorder %s54, %s56
      %p63 = scmp.eq.s32.totalorder %s25, 1
      %p64 = por %p62, %p63
      %p65 = scmp.ne.s32.totalorder %s56, %s57
      %p66 = scmp.eq.s32.totalorder %s25, 0
      %p67 = por %p65, %p66
      %p68 = scmp.ne.s32.totalorder %s56, %s57
      %p69 = scmp.eq.s32.totalorder %s26, 1
      %p70 = por %p68, %p69
      %p72 = scmp.ne.s32.totalorder %s57, %s71
      %p73 = scmp.eq.s32.totalorder %s26, 0
      %p74 = por %p72, %p73
      %s76 = sadd.s32 %s75, 1
      %p79 = scmp.eq.s32.totalorder %s20, 1
      %p80 = scmp.ne.s32.totalorder %s75, %s77
      %p81 = scmp.eq.s32.totalorder %s20, 0
      %p82 = por %p80, %p81
      %p83 = scmp.ne.s32.totalorder %s75, %s77
      %p84 = scmp.eq.s32.totalorder %s25, 1
      %p85 = por %p83, %p84
      %p86 = scmp.ne.s32.totalorder %s77, %s78
      %p87 = scmp.eq.s32.totalorder %s25, 0
      %p88 = por %p86, %p87
      %p89 = scmp.ne.s32.totalorder %s77, %s78
      %p90 = scmp.eq.s32.totalorder %s26, 1
      %p91 = por %p89, %p90
      %p93 = scmp.ne.s32.totalorder %s78, %s92
      %p94 = scmp.eq.s32.totalorder %s26, 0
      %p95 = por %p93, %p94
      %s97 = sadd.s32 %s96, 1
      %p100 = scmp.eq.s32.totalorder %s20, 1
      %p101 = scmp.ne.s32.totalorder %s96, %s98
      %p102 = scmp.eq.s32.totalorder %s20, 0
      %p103 = por %p101, %p102
      %p104 = scmp.ne.s32.totalorder %s96, %s98
      %p105 = scmp.eq.s32.totalorder %s25, 1
      %p106 = por %p104, %p105
      %p107 = scmp.ne.s32.totalorder %s98, %s99
      %p108 = scmp.eq.s32.totalorder %s25, 0
      %p109 = por %p107, %p108
      %p110 = scmp.ne.s32.totalorder %s98, %s99
      %p111 = scmp.eq.s32.totalorder %s26, 1
      %p112 = por %p110, %p111
      %p114 = scmp.ne.s32.totalorder %s99, %s113
      %p115 = scmp.eq.s32.totalorder %s26, 0
      %p116 = por %p114, %p115
      %s118 = sadd.s32 %s117, 1
      %p121 = scmp.eq.s32.totalorder %s20, 1
      %p122 = scmp.ne.s32.totalorder %s117, %s119
      %p123 = scmp.eq.s32.totalorder %s20, 0
      %p124 = por %p122, %p123
      %p125 = scmp.ne.s32.totalorder %s117, %s119
      %p126 = scmp.eq.s32.totalorder %s25, 1
      %p127 = por %p125, %p126
      %p128 = scmp.ne.s32.totalorder %s119, %s120
      %p129 = scmp.eq.s32.totalorder %s25, 0
      %p130 = por %p128, %p129
      %p131 = scmp.ne.s32.totalorder %s119, %s120
      %p132 = scmp.eq.s32.totalorder %s26, 1
      %p133 = por %p131, %p132
      %p135 = scmp.ne.s32.totalorder %s120, %s134
      %p136 = scmp.eq.s32.totalorder %s26, 0
      %p137 = por %p135, %p136
      %s139 = sadd.s32 %s138, 1
      %p142 = scmp.eq.s32.totalorder %s20, 1
      %p143 = scmp.ne.s32.totalorder %s138, %s140
      %p144 = scmp.eq.s32.totalorder %s20, 0
      %p145 = por %p143, %p144
      %p146 = scmp.ne.s32.totalorder %s138, %s140
      %p147 = scmp.eq.s32.totalorder %s25, 1
      %p148 = por %p146, %p147
      %p149 = scmp.ne.s32.totalorder %s140, %s141
      %p150 = scmp.eq.s32.totalorder %s25, 0
      %p151 = por %p149, %p150
      %p152 = scmp.ne.s32.totalorder %s140, %s141
      %p153 = scmp.eq.s32.totalorder %s26, 1
      %p154 = por %p152, %p153
      %p156 = scmp.ne.s32.totalorder %s141, %s155
      %p157 = scmp.eq.s32.totalorder %s26, 0
      %p158 = por %p156, %p157
      %s160 = sadd.s32 %s159, 1
      %p163 = scmp.eq.s32.totalorder %s20, 1
      %p164 = scmp.ne.s32.totalorder %s159, %s161
      %p165 = scmp.eq.s32.totalorder %s20, 0
      %p166 = por %p164, %p165
      %p167 = scmp.ne.s32.totalorder %s159, %s161
      %p168 = scmp.eq.s32.totalorder %s25, 1
      %p169 = por %p167, %p168
      %p170 = scmp.ne.s32.totalorder %s161, %s162
      %p171 = scmp.eq.s32.totalorder %s25, 0
      %p172 = por %p170, %p171
      %p173 = scmp.ne.s32.totalorder %s161, %s162
      %p174 = scmp.eq.s32.totalorder %s26, 1
      %p175 = por %p173, %p174
      %p177 = scmp.ne.s32.totalorder %s162, %s176
      %p178 = scmp.eq.s32.totalorder %s26, 0
      %p179 = por %p177, %p178
      %s181 = sadd.s32 %s180, 1
      %p184 = scmp.eq.s32.totalorder %s20, 1
      %p185 = scmp.ne.s32.totalorder %s180, %s182
      %p186 = scmp.eq.s32.totalorder %s20, 0
      %p187 = por %p185, %p186
      %p188 = scmp.ne.s32.totalorder %s180, %s182
      %p189 = scmp.eq.s32.totalorder %s25, 1
      %p190 = por %p188, %p189
      %p191 = scmp.ne.s32.totalorder %s182, %s183
      %p192 = scmp.eq.s32.totalorder %s25, 0
      %p193 = por %p191, %p192
      %p194 = scmp.ne.s32.totalorder %s182, %s183
      %p195 = scmp.eq.s32.totalorder %s26, 1
      %p196 = por %p194, %p195
      %p198 = scmp.ne.s32.totalorder %s183, %s197
      %p199 = scmp.eq.s32.totalorder %s26, 0
      %p200 = por %p198, %p199
      %s202 = sadd.s32 %s201, 1
      %p205 = scmp.eq.s32.totalorder %s20, 1
      %p206 = scmp.ne.s32.totalorder %s201, %s203
      %p207 = scmp.eq.s32.totalorder %s20, 0
      %p208 = por %p206, %p207
      %p209 = scmp.ne.s32.totalorder %s201, %s203
      %p210 = scmp.eq.s32.totalorder %s25, 1
      %p211 = por %p209, %p210
      %p212 = scmp.ne.s32.totalorder %s203, %s204
      %p213 = scmp.eq.s32.totalorder %s25, 0
      %p214 = por %p212, %p213
      %p215 = scmp.ne.s32.totalorder %s203, %s204
      %p216 = scmp.eq.s32.totalorder %s26, 1
      %p217 = por %p215, %p216
      %p219 = scmp.ne.s32.totalorder %s204, %s218
      %p220 = scmp.eq.s32.totalorder %s26, 0
      %p221 = por %p219, %p220
      %s222 = ssub.s32 %s20, %s27
      %p223 = scmp.eq.s32.totalorder %s222, 0
      %s225 = sadd.s32 %s224, 1
      %s226 = scalar_select %p223, %s224, %s225
      %p229 = pneg %p223
      %p230 = scmp.eq.s32.totalorder %s20, 1
      %p231 = por %p229, %p230
      %p232 = scmp.ne.s32.totalorder %s224, %s227
      %p233 = scmp.eq.s32.totalorder %s20, 0
      %p234 = por %p232, %p233
      %p235 = scmp.ne.s32.totalorder %s224, %s227
      %p236 = scmp.eq.s32.totalorder %s25, 1
      %p237 = por %p235, %p236
      %p238 = scmp.ne.s32.totalorder %s227, %s228
      %p239 = scmp.eq.s32.totalorder %s25, 0
      %p240 = por %p238, %p239
      %p241 = scmp.ne.s32.totalorder %s227, %s228
      %p242 = scmp.eq.s32.totalorder %s26, 1
      %p243 = por %p241, %p242
      %p245 = scmp.ne.s32.totalorder %s228, %s244
      %p246 = scmp.eq.s32.totalorder %s26, 0
      %p247 = por %p245, %p246
      %p248 = scmp.le.s32.totalorder 1, %s20
      %p249 = scmp.lt.s32.totalorder %s20, 3
      %p250 = pnand %p248, %p249
      %p251 = pneg %p250
      // Predicated region
      $region9: #{tpu_custom_call.1} parent=5 // pred_check
        _
      $region10: #{tpu_custom_call.1} parent=5 // pred_check_branch
        %253 = sbr.rel (%p250) target = $region12
      $region11: #{tpu_custom_call.1} parent=5 // pred_region
        %s254 = ssub.s32 %s20, 1
        // Predicated region
        $region13: #{tpu_custom_call.1} parent=11 // pred_check
          %p255 = pneg %p67
        $region14: #{tpu_custom_call.1} parent=11 // pred_check_branch
          %257 = sbr.rel (%p255) target = $region16
        $region15: #{tpu_custom_call.1} parent=11 // pred_region
          _
        $region16: #{tpu_custom_call.1} parent=11 // pred_fallthru
          _
        // Predicated region
        $region17: #{tpu_custom_call.1} parent=11 // pred_check
          %p258 = pneg %p88
        $region18: #{tpu_custom_call.1} parent=11 // pred_check_branch
          %260 = sbr.rel (%p258) target = $region20
        $region19: #{tpu_custom_call.1} parent=11 // pred_region
          _
        $region20: #{tpu_custom_call.1} parent=11 // pred_fallthru
          _
        // Predicated region
        $region21: #{tpu_custom_call.1} parent=11 // pred_check
          %p261 = pneg %p109
        $region22: #{tpu_custom_call.1} parent=11 // pred_check_branch
          %263 = sbr.rel (%p261) target = $region24
        $region23: #{tpu_custom_call.1} parent=11 // pred_region
          %s265 = ssub.s32 4096, 4096
          %266 = vsyncadd [#allocation3], %s265
          %s267 = sshll.u32 [#allocation2], 4
          %s268 = int_to_ptr.vmem [resolvable:$true] %s267
          %273 = dma.hbm_to_vmem [thread:$0]  %s3, 4096, %s268, [#allocation3], 256, 256, 16
        $region24: #{tpu_custom_call.1} parent=11 // pred_fallthru
          _
        // Predicated region
        $region25: #{tpu_custom_call.1} parent=11 // pred_check
          %p274 = pneg %p130
        $region26: #{tpu_custom_call.1} parent=11 // pred_check_branch
          %276 = sbr.rel (%p274) target = $region28
        $region27: #{tpu_custom_call.1} parent=11 // pred_region
          _
        $region28: #{tpu_custom_call.1} parent=11 // pred_fallthru
          _
        // Predicated region
        $region29: #{tpu_custom_call.1} parent=11 // pred_check
          %p277 = pneg %p151
        $region30: #{tpu_custom_call.1} parent=11 // pred_check_branch
          %279 = sbr.rel (%p277) target = $region32
        $region31: #{tpu_custom_call.1} parent=11 // pred_region
          %s281 = ssub.s32 32768, 32768
          %282 = vsyncadd [#allocation6], %s281
          %s283 = sshll.u32 [#allocation5], 4
          %s284 = int_to_ptr.vmem [resolvable:$true] %s283
          %289 = dma.hbm_to_vmem [thread:$0]  %s5, 32768, %s284, [#allocation6], 512, 512, 32
        $region32: #{tpu_custom_call.1} parent=11 // pred_fallthru
          _
        // Predicated region
        $region33: #{tpu_custom_call.1} parent=11 // pred_check
          %p290 = pneg %p172
        $region34: #{tpu_custom_call.1} parent=11 // pred_check_branch
          %292 = sbr.rel (%p290) target = $region36
        $region35: #{tpu_custom_call.1} parent=11 // pred_region
          _
        $region36: #{tpu_custom_call.1} parent=11 // pred_fallthru
          _
        // Predicated region
        $region37: #{tpu_custom_call.1} parent=11 // pred_check
          %p293 = pneg %p193
        $region38: #{tpu_custom_call.1} parent=11 // pred_check_branch
          %295 = sbr.rel (%p293) target = $region40
        $region39: #{tpu_custom_call.1} parent=11 // pred_region
          %s297 = ssub.s32 8192, 8192
          %298 = vsyncadd [#allocation6], %s297
          %s299 = sshll.u32 [#allocation7], 4
          %s300 = int_to_ptr.vmem [resolvable:$true] %s299
          %305 = dma.hbm_to_vmem [thread:$0]  %s7, 8192, %s300, [#allocation6], 64, 64, 4
        $region40: #{tpu_custom_call.1} parent=11 // pred_fallthru
          _
        // Predicated region
        $region41: #{tpu_custom_call.1} parent=11 // pred_check
          %p306 = pneg %p214
        $region42: #{tpu_custom_call.1} parent=11 // pred_check_branch
          %308 = sbr.rel (%p306) target = $region44
        $region43: #{tpu_custom_call.1} parent=11 // pred_region
          _
        $region44: #{tpu_custom_call.1} parent=11 // pred_fallthru
          _
      $region12: #{tpu_custom_call.1} parent=5 // pred_fallthru
        _
      %p309 = scmp.lt.s32.totalorder %s20, 2
      // Predicated region
      $region45: #{tpu_custom_call.1} parent=5 // pred_check
        %p310 = pneg %p309
      $region46: #{tpu_custom_call.1} parent=5 // pred_check_branch
        %312 = sbr.rel (%p310) target = $region48
      $region47: #{tpu_custom_call.1} parent=5 // pred_region
        // Predicated region
        $region49: #{tpu_custom_call.1} parent=47 // pred_check
          %p313 = pneg %p40
        $region50: #{tpu_custom_call.1} parent=47 // pred_check_branch
          %315 = sbr.rel (%p313) target = $region52
        $region51: #{tpu_custom_call.1} parent=47 // pred_region
          %s316 = smul.u32 2, %s20
          %p317 = scmp.lt.s32.totalorder %s316, 3
          %s318 = scalar_select %p317, %s316, 3
          %s319 = smul.addr %s318, 8
          %s320 = scalar_lea.vmem %s0, %s319
          %s321 = smul.u32 2, %s20
        $region52: #{tpu_custom_call.1} parent=47 // pred_fallthru
          _
      $region48: #{tpu_custom_call.1} parent=5 // pred_fallthru
        _
      %p322 = scmp.le.s32.totalorder 1, %s20
      %p323 = scmp.lt.s32.totalorder %s20, 3
      %p324 = pnand %p322, %p323
      %p325 = pneg %p324
      // Predicated region
      $region53: #{tpu_custom_call.1} parent=5 // pred_check
        _
      $region54: #{tpu_custom_call.1} parent=5 // pred_check_branch
        %327 = sbr.rel (%p324) target = $region56
      $region55: #{tpu_custom_call.1} parent=5 // pred_region
        %s328 = ssub.s32 %s20, 1
        // Predicated region
        $region57: #{tpu_custom_call.1} parent=55 // pred_check
          %p329 = pneg %p109
        $region58: #{tpu_custom_call.1} parent=55 // pred_check_branch
          %331 = sbr.rel (%p329) target = $region60
        $region59: #{tpu_custom_call.1} parent=55 // pred_region
          %332 = dma.done [#allocation3], 4096
        $region60: #{tpu_custom_call.1} parent=55 // pred_fallthru
          _
        // Predicated region
        $region61: #{tpu_custom_call.1} parent=55 // pred_check
          %p333 = pneg %p151
        $region62: #{tpu_custom_call.1} parent=55 // pred_check_branch
          %335 = sbr.rel (%p333) target = $region64
        $region63: #{tpu_custom_call.1} parent=55 // pred_region
          %336 = dma.done [#allocation6], 32768
        $region64: #{tpu_custom_call.1} parent=55 // pred_fallthru
          _
        // Predicated region
        $region65: #{tpu_custom_call.1} parent=55 // pred_check
          %p337 = pneg %p193
        $region66: #{tpu_custom_call.1} parent=55 // pred_check_branch
          %339 = sbr.rel (%p337) target = $region68
        $region67: #{tpu_custom_call.1} parent=55 // pred_region
          %340 = dma.done [#allocation6], 8192
        $region68: #{tpu_custom_call.1} parent=55 // pred_fallthru
          _
        %s341 = smul.u32 2, %s25
        %p342 = scmp.lt.s32.totalorder %s341, 3
        %s343 = scalar_select %p342, %s341, 3
        %s344 = smul.addr %s343, 8
        %s345 = scalar_lea.vmem %s0, %s344
        %p346 = pneg %p46
        %p347 = pneg %p43
        %p348 = pneg %p67
        %p349 = pneg %p64
        %p350 = pneg %p88
        %p351 = pneg %p85
        %p352 = pneg %p109
        %p353 = pneg %p106
        %p354 = pneg %p130
        %p355 = pneg %p127
        %p356 = pneg %p151
        %p357 = pneg %p148
        %p358 = pneg %p172
        %p359 = pneg %p169
        %p360 = pneg %p193
        %p361 = pneg %p190
        %p362 = pneg %p214
        %p363 = pneg %p211
        %p364 = pneg %p240
        %p365 = pneg %p237
        %s366 = sand.u32 %s227, 1
        %s367 = scalar_lea.sflag [#allocation4], %s366
        %s368 = sand.u32 %s227, 1
        %s369 = smul.addr %s368, 16
        %s370 = scalar_lea.vmem [#allocation8], %s369
        %s371 = smul.u32 2, %s25
        %p372 = scmp.lt.s32.totalorder %s371, 3
        %s373 = scalar_select %p372, %s371, 3
        %s374 = smul.addr %s373, 8
        %s375 = scalar_lea.vmem %s0, %s374
        %s376 = smul.u32 2, %s25
        %s377 = smul.u32 2, %s25
        %v379 = vld [vmem:[%s375] sm:$0xff]
        %v380 = vld [vmem:[%s375 + $0x8] sm:$0xff]
        %v381 = vld [vmem:[%s1] sm:$0xff]
        %383 = vset.pattern.permute.xlu0 0
        %384 = vperm.xlu0 %383, %v379
        %v385 = vpop.permute.xlu0 %384
        %388 = vset.pattern.permute.xlu0 0
        %389 = vperm.xlu0 %388, %v380
        %v390 = vpop.permute.xlu0 %389
        %v392 = vlaneseq
        %v393 = vshrl.u32 %v392, 7
        %v394 = vsub.s32 0, %v393
        %v395 = vrot.slane %v381, %v394
        %v396 = vmul.f32 %v385, %v395
        %v397 = vmul.f32 %v390, %v395
        %398 = vset.pattern.permute.xlu0 1
        %399 = vperm.xlu0 %398, %v379
        %v400 = vpop.permute.xlu0 %399
        %402 = vset.pattern.permute.xlu0 1
        %403 = vperm.xlu0 %402, %v380
        %v404 = vpop.permute.xlu0 %403
        %v406 = vlaneseq
        %v407 = vshrl.u32 %v406, 7
        %v408 = vsub.s32 1, %v407
        %v409 = vrot.slane %v381, %v408
        %v410 = vmul.f32 %v400, %v409
        %v411 = vmul.f32 %v404, %v409
        %v412 = vadd.f32 %v396, %v410
        %v413 = vadd.f32 %v397, %v411
        %414 = vset.pattern.permute.xlu0 2
        %415 = vperm.xlu0 %414, %v379
        %v416 = vpop.permute.xlu0 %415
        %418 = vset.pattern.permute.xlu0 2
        %419 = vperm.xlu0 %418, %v380
        %v420 = vpop.permute.xlu0 %419
        %v422 = vlaneseq
        %v423 = vshrl.u32 %v422, 7
        %v424 = vsub.s32 2, %v423
        %v425 = vrot.slane %v381, %v424
        %v426 = vmul.f32 %v416, %v425
        %v427 = vmul.f32 %v420, %v425
        %v428 = vadd.f32 %v412, %v426
        %v429 = vadd.f32 %v413, %v427
        %430 = vset.pattern.permute.xlu0 3
        %431 = vperm.xlu0 %430, %v379
        %v432 = vpop.permute.xlu0 %431
        %434 = vset.pattern.permute.xlu0 3
        %435 = vperm.xlu0 %434, %v380
        %v436 = vpop.permute.xlu0 %435
        %v438 = vlaneseq
        %v439 = vshrl.u32 %v438, 7
        %v440 = vsub.s32 3, %v439
        %v441 = vrot.slane %v381, %v440
        %v442 = vmul.f32 %v432, %v441
        %v443 = vmul.f32 %v436, %v441
        %v444 = vadd.f32 %v428, %v442
        %v445 = vadd.f32 %v429, %v443
        %446 = vset.pattern.permute.xlu0 4
        %447 = vperm.xlu0 %446, %v379
        %v448 = vpop.permute.xlu0 %447
        %450 = vset.pattern.permute.xlu0 4
        %451 = vperm.xlu0 %450, %v380
        %v452 = vpop.permute.xlu0 %451
        %v454 = vlaneseq
        %v455 = vshrl.u32 %v454, 7
        %v456 = vsub.s32 4, %v455
        %v457 = vrot.slane %v381, %v456
        %v458 = vmul.f32 %v448, %v457
        %v459 = vmul.f32 %v452, %v457
        %v460 = vadd.f32 %v444, %v458
        %v461 = vadd.f32 %v445, %v459
        %462 = vset.pattern.permute.xlu0 5
        %463 = vperm.xlu0 %462, %v379
        %v464 = vpop.permute.xlu0 %463
        %466 = vset.pattern.permute.xlu0 5
        %467 = vperm.xlu0 %466, %v380
        %v468 = vpop.permute.xlu0 %467
        %v470 = vlaneseq
        %v471 = vshrl.u32 %v470, 7
        %v472 = vsub.s32 5, %v471
        %v473 = vrot.slane %v381, %v472
        %v474 = vmul.f32 %v464, %v473
        %v475 = vmul.f32 %v468, %v473
        %v476 = vadd.f32 %v460, %v474
        %v477 = vadd.f32 %v461, %v475
        %478 = vset.pattern.permute.xlu0 6
        %479 = vperm.xlu0 %478, %v379
        %v480 = vpop.permute.xlu0 %479
        %482 = vset.pattern.permute.xlu0 6
        %483 = vperm.xlu0 %482, %v380
        %v484 = vpop.permute.xlu0 %483
        %v486 = vlaneseq
        %v487 = vshrl.u32 %v486, 7
        %v488 = vsub.s32 6, %v487
        %v489 = vrot.slane %v381, %v488
        %v490 = vmul.f32 %v480, %v489
        %v491 = vmul.f32 %v484, %v489
        %v492 = vadd.f32 %v476, %v490
        %v493 = vadd.f32 %v477, %v491
        %494 = vset.pattern.permute.xlu0 7
        %495 = vperm.xlu0 %494, %v379
        %v496 = vpop.permute.xlu0 %495
        %498 = vset.pattern.permute.xlu0 7
        %499 = vperm.xlu0 %498, %v380
        %v500 = vpop.permute.xlu0 %499
        %v502 = vlaneseq
        %v503 = vshrl.u32 %v502, 7
        %v504 = vsub.s32 7, %v503
        %v505 = vrot.slane %v381, %v504
        %v506 = vmul.f32 %v496, %v505
        %v507 = vmul.f32 %v500, %v505
        %v508 = vadd.f32 %v492, %v506
        %v509 = vadd.f32 %v493, %v507
        %v510 = vld [vmem:[%s2] sm:$0x1]
        %v512 = vlaneseq
        %v513 = vshrl.u32 %v512, 7
        %v514 = vsub.s32 0, %v513
        %v515 = vrot.slane %v510, %v514
        %v517 = vadd.f32 %v508, %v515
        %v518 = vadd.f32 %v509, %v515
        %v519 = vmax.f32 %v517, 0.0
        %v520 = vmax.f32 %v518, 0.0
        %v521 = vpack.c.bf16 %v520, %v519
        %v522 = vld [vmem:[#allocation2] sm:$0xff]
        %v523 = vld [vmem:[#allocation2 + $0x8] sm:$0xff]
        %v524 = vld [vmem:[#allocation2 + $0x10] sm:$0xff]
        %v525 = vld [vmem:[#allocation2 + $0x18] sm:$0xff]
        %v526 = vld [vmem:[#allocation2 + $0x20] sm:$0xff]
        %v527 = vld [vmem:[#allocation2 + $0x28] sm:$0xff]
        %v528 = vld [vmem:[#allocation2 + $0x30] sm:$0xff]
        %v529 = vld [vmem:[#allocation2 + $0x38] sm:$0xff]
        %v530 = vld [vmem:[#allocation2 + $0x40] sm:$0xff]
        %v531 = vld [vmem:[#allocation2 + $0x48] sm:$0xff]
        %v532 = vld [vmem:[#allocation2 + $0x50] sm:$0xff]
        %v533 = vld [vmem:[#allocation2 + $0x58] sm:$0xff]
        %v534 = vld [vmem:[#allocation2 + $0x60] sm:$0xff]
        %v535 = vld [vmem:[#allocation2 + $0x68] sm:$0xff]
        %v536 = vld [vmem:[#allocation2 + $0x70] sm:$0xff]
        %v537 = vld [vmem:[#allocation2 + $0x78] sm:$0xff]
        %v538 = vld [vmem:[#allocation2 + $0x80] sm:$0xff]
        %v539 = vld [vmem:[#allocation2 + $0x88] sm:$0xff]
        %v540 = vld [vmem:[#allocation2 + $0x90] sm:$0xff]
        %v541 = vld [vmem:[#allocation2 + $0x98] sm:$0xff]
        %v542 = vld [vmem:[#allocation2 + $0xa0] sm:$0xff]
        %v543 = vld [vmem:[#allocation2 + $0xa8] sm:$0xff]
        %v544 = vld [vmem:[#allocation2 + $0xb0] sm:$0xff]
        %v545 = vld [vmem:[#allocation2 + $0xb8] sm:$0xff]
        %v546 = vld [vmem:[#allocation2 + $0xc0] sm:$0xff]
        %v547 = vld [vmem:[#allocation2 + $0xc8] sm:$0xff]
        %v548 = vld [vmem:[#allocation2 + $0xd0] sm:$0xff]
        %v549 = vld [vmem:[#allocation2 + $0xd8] sm:$0xff]
        %v550 = vld [vmem:[#allocation2 + $0xe0] sm:$0xff]
        %v551 = vld [vmem:[#allocation2 + $0xe8] sm:$0xff]
        %v552 = vld [vmem:[#allocation2 + $0xf0] sm:$0xff]
        %v553 = vld [vmem:[#allocation2 + $0xf8] sm:$0xff]
        %v554 = vld [vmem:[%s4] sm:$0xf]
        %v556 = vlaneseq
        %v557 = vshrl.u32 %v556, 7
        %v558 = vsub.s32 0, %v557
        %v559 = vrot.slane %v554, %v558
        %v560 = vlaneseq
        %v561 = vshrl.u32 %v560, 7
        %v562 = vsub.s32 1, %v561
        %v563 = vrot.slane %v554, %v562
        %v564 = vlaneseq
        %v565 = vshrl.u32 %v564, 7
        %v566 = vsub.s32 2, %v565
        %v567 = vrot.slane %v554, %v566
        %v568 = vlaneseq
        %v569 = vshrl.u32 %v568, 7
        %v570 = vsub.s32 3, %v569
        %v571 = vrot.slane %v554, %v570
        %v608 = vunpack.c.l.b16 %v522
        %v609 = vunpack.c.h.b16 %v522
        %v610 = vunpack.c.l.b16 %v523
        %v611 = vunpack.c.h.b16 %v523
        %v612 = vunpack.c.l.b16 %v524
        %v613 = vunpack.c.h.b16 %v524
        %v614 = vunpack.c.l.b16 %v525
        %v615 = vunpack.c.h.b16 %v525
        %v616 = vunpack.c.l.b16 %v526
        %v617 = vunpack.c.h.b16 %v526
        %v618 = vunpack.c.l.b16 %v527
        %v619 = vunpack.c.h.b16 %v527
        %v620 = vunpack.c.l.b16 %v528
        %v621 = vunpack.c.h.b16 %v528
        %v622 = vunpack.c.l.b16 %v529
        %v623 = vunpack.c.h.b16 %v529
        %v624 = vunpack.c.l.b16 %v530
        %v625 = vunpack.c.h.b16 %v530
        %v626 = vunpack.c.l.b16 %v531
        %v627 = vunpack.c.h.b16 %v531
        %v628 = vunpack.c.l.b16 %v532
        %v629 = vunpack.c.h.b16 %v532
        %v630 = vunpack.c.l.b16 %v533
        %v631 = vunpack.c.h.b16 %v533
        %v632 = vunpack.c.l.b16 %v534
        %v633 = vunpack.c.h.b16 %v534
        %v634 = vunpack.c.l.b16 %v535
        %v635 = vunpack.c.h.b16 %v535
        %v636 = vunpack.c.l.b16 %v536
        %v637 = vunpack.c.h.b16 %v536
        %v638 = vunpack.c.l.b16 %v537
        %v639 = vunpack.c.h.b16 %v537
        %v640 = vunpack.c.l.b16 %v538
        %v641 = vunpack.c.h.b16 %v538
        %v642 = vunpack.c.l.b16 %v539
        %v643 = vunpack.c.h.b16 %v539
        %v644 = vunpack.c.l.b16 %v540
        %v645 = vunpack.c.h.b16 %v540
        %v646 = vunpack.c.l.b16 %v541
        %v647 = vunpack.c.h.b16 %v541
        %v648 = vunpack.c.l.b16 %v542
        %v649 = vunpack.c.h.b16 %v542
        %v650 = vunpack.c.l.b16 %v543
        %v651 = vunpack.c.h.b16 %v543
        %v652 = vunpack.c.l.b16 %v544
        %v653 = vunpack.c.h.b16 %v544
        %v654 = vunpack.c.l.b16 %v545
        %v655 = vunpack.c.h.b16 %v545
        %v656 = vunpack.c.l.b16 %v546
        %v657 = vunpack.c.h.b16 %v546
        %v658 = vunpack.c.l.b16 %v547
        %v659 = vunpack.c.h.b16 %v547
        %v660 = vunpack.c.l.b16 %v548
        %v661 = vunpack.c.h.b16 %v548
        %v662 = vunpack.c.l.b16 %v549
        %v663 = vunpack.c.h.b16 %v549
        %v664 = vunpack.c.l.b16 %v550
        %v665 = vunpack.c.h.b16 %v550
        %v666 = vunpack.c.l.b16 %v551
        %v667 = vunpack.c.h.b16 %v551
        %v668 = vunpack.c.l.b16 %v552
        %v669 = vunpack.c.h.b16 %v552
        %v670 = vunpack.c.l.b16 %v553
        %v671 = vunpack.c.h.b16 %v553
        %v672 = vpack.c.b16 %v612, %v608
        %v673 = vpack.c.b16 %v613, %v609
        %v674 = vpack.c.b16 %v614, %v610
        %v675 = vpack.c.b16 %v615, %v611
        %v676 = vpack.c.b16 %v620, %v616
        %v677 = vpack.c.b16 %v621, %v617
        %v678 = vpack.c.b16 %v622, %v618
        %v679 = vpack.c.b16 %v623, %v619
        %v680 = vpack.c.b16 %v628, %v624
        %v681 = vpack.c.b16 %v629, %v625
        %v682 = vpack.c.b16 %v630, %v626
        %v683 = vpack.c.b16 %v631, %v627
        %v684 = vpack.c.b16 %v636, %v632
        %v685 = vpack.c.b16 %v637, %v633
        %v686 = vpack.c.b16 %v638, %v634
        %v687 = vpack.c.b16 %v639, %v635
        %v688 = vpack.c.b16 %v644, %v640
        %v689 = vpack.c.b16 %v645, %v641
        %v690 = vpack.c.b16 %v646, %v642
        %v691 = vpack.c.b16 %v647, %v643
        %v692 = vpack.c.b16 %v652, %v648
        %v693 = vpack.c.b16 %v653, %v649
        %v694 = vpack.c.b16 %v654, %v650
        %v695 = vpack.c.b16 %v655, %v651
        %v696 = vpack.c.b16 %v660, %v656
        %v697 = vpack.c.b16 %v661, %v657
        %v698 = vpack.c.b16 %v662, %v658
        %v699 = vpack.c.b16 %v663, %v659
        %v700 = vpack.c.b16 %v668, %v664
        %v701 = vpack.c.b16 %v669, %v665
        %v702 = vpack.c.b16 %v670, %v666
        %v703 = vpack.c.b16 %v671, %v667
        %736 = vmatprep.subr.bf16.mxu0 %v673
        %737 = vmatpush1.bf16.msra.mxu0 %v672
        %738 = vmatprep.subr.bf16.mxu0 %v677
        %739 = vmatpush1.bf16.msra.mxu0 %v676
        %740 = vmatprep.subr.bf16.mxu0 %v681
        %741 = vmatpush1.bf16.msra.mxu0 %v680
        %742 = vmatprep.subr.bf16.mxu0 %v685
        %743 = vmatpush1.bf16.msra.mxu0 %v684
        %744 = vmatprep.subr.bf16.mxu0 %v689
        %745 = vmatpush1.bf16.msra.mxu0 %v688
        %746 = vmatprep.subr.bf16.mxu0 %v693
        %747 = vmatpush1.bf16.msra.mxu0 %v692
        %748 = vmatprep.subr.bf16.mxu0 %v697
        %749 = vmatpush1.bf16.msra.mxu0 %v696
        %750 = vmatprep.subr.bf16.mxu0 %v701
        %751 = vmatpush1.bf16.msra.mxu0 %v700
        %752 = vmatprep.subr.bf16.mxu0 0
        %753 = vmatpush1.bf16.msra.mxu0 0
        %754 = vmatprep.subr.bf16.mxu0 0
        %755 = vmatpush1.bf16.msra.mxu0 0
        %756 = vmatprep.subr.bf16.mxu0 0
        %757 = vmatpush1.bf16.msra.mxu0 0
        %758 = vmatprep.subr.bf16.mxu0 0
        %759 = vmatpush1.bf16.msra.mxu0 0
        %760 = vmatprep.subr.bf16.mxu0 0
        %761 = vmatpush1.bf16.msra.mxu0 0
        %762 = vmatprep.subr.bf16.mxu0 0
        %763 = vmatpush1.bf16.msra.mxu0 0
        %764 = vmatprep.subr.bf16.mxu0 0
        %765 = vmatpush1.bf16.msra.mxu0 0
        %766 = vmatprep.subr.bf16.mxu0 0
        %767 = vmatpush1.bf16.msra.mxu0 0
        %768 = vmatprep.mubr.bf16.mxu0 0
        %769 = vmatmul.mubr.bf16.gmra.mrb[0].mxu0 %v521
        %v770 = vpop.f32.mrb[0].mxu0
        %v771 = vadd.f32 %v559, %v770
        %v772 = vpop.f32.mrb[0].mxu0
        %v773 = vadd.f32 %v563, %v772
        %v774 = vpop.f32.mrb[0].mxu0
        %v775 = vadd.f32 %v559, %v774
        %v776 = vpop.f32.mrb[0].mxu0
        %v777 = vadd.f32 %v563, %v776
        %778 = vdwg.mxu0
        %779 = vmatprep.subr.bf16.mxu0 %v675
        %780 = vmatpush1.bf16.msra.mxu0 %v674
        %781 = vmatprep.subr.bf16.mxu0 %v679
        %782 = vmatpush1.bf16.msra.mxu0 %v678
        %783 = vmatprep.subr.bf16.mxu0 %v683
        %784 = vmatpush1.bf16.msra.mxu0 %v682
        %785 = vmatprep.subr.bf16.mxu0 %v687
        %786 = vmatpush1.bf16.msra.mxu0 %v686
        %787 = vmatprep.subr.bf16.mxu0 %v691
        %788 = vmatpush1.bf16.msra.mxu0 %v690
        %789 = vmatprep.subr.bf16.mxu0 %v695
        %790 = vmatpush1.bf16.msra.mxu0 %v694
        %791 = vmatprep.subr.bf16.mxu0 %v699
        %792 = vmatpush1.bf16.msra.mxu0 %v698
        %793 = vmatprep.subr.bf16.mxu0 %v703
        %794 = vmatpush1.bf16.msra.mxu0 %v702
        %795 = vmatprep.subr.bf16.mxu0 0
        %796 = vmatpush1.bf16.msra.mxu0 0
        %797 = vmatprep.subr.bf16.mxu0 0
        %798 = vmatpush1.bf16.msra.mxu0 0
        %799 = vmatprep.subr.bf16.mxu0 0
        %800 = vmatpush1.bf16.msra.mxu0 0
        %801 = vmatprep.subr.bf16.mxu0 0
        %802 = vmatpush1.bf16.msra.mxu0 0
        %803 = vmatprep.subr.bf16.mxu0 0
        %804 = vmatpush1.bf16.msra.mxu0 0
        %805 = vmatprep.subr.bf16.mxu0 0
        %806 = vmatpush1.bf16.msra.mxu0 0
        %807 = vmatprep.subr.bf16.mxu0 0
        %808 = vmatpush1.bf16.msra.mxu0 0
        %809 = vmatprep.subr.bf16.mxu0 0
        %810 = vmatpush1.bf16.msra.mxu0 0
        %811 = vmatprep.mubr.bf16.mxu0 0
        %812 = vmatmul.mubr.bf16.gmra.mrb[0].mxu0 %v521
        %v813 = vpop.f32.mrb[0].mxu0
        %v814 = vadd.f32 %v567, %v813
        %v815 = vpop.f32.mrb[0].mxu0
        %v816 = vadd.f32 %v571, %v815
        %v817 = vpop.f32.mrb[0].mxu0
        %v818 = vadd.f32 %v567, %v817
        %v819 = vpop.f32.mrb[0].mxu0
        %v820 = vadd.f32 %v571, %v819
        %821 = vdwg.mxu0
        %v822 = vmax.f32 %v771, 0.0
        %v823 = vmax.f32 %v773, 0.0
        %v824 = vmax.f32 %v814, 0.0
        %v825 = vmax.f32 %v816, 0.0
        %v826 = vmax.f32 %v775, 0.0
        %v827 = vmax.f32 %v777, 0.0
        %v828 = vmax.f32 %v818, 0.0
        %v829 = vmax.f32 %v820, 0.0
        %v830 = vpack.c.bf16 %v826, %v822
        %v831 = vpack.c.bf16 %v827, %v823
        %v832 = vpack.c.bf16 %v828, %v824
        %v833 = vpack.c.bf16 %v829, %v825
        %v834 = vld [vmem:[#allocation5] sm:$0xff]
        %v835 = vld [vmem:[#allocation5 + $0x8] sm:$0xff]
        %v836 = vld [vmem:[#allocation5 + $0x10] sm:$0xff]
        %v837 = vld [vmem:[#allocation5 + $0x18] sm:$0xff]
        %v838 = vld [vmem:[#allocation5 + $0x20] sm:$0xff]
        %v839 = vld [vmem:[#allocation5 + $0x28] sm:$0xff]
        %v840 = vld [vmem:[#allocation5 + $0x30] sm:$0xff]
        %v841 = vld [vmem:[#allocation5 + $0x38] sm:$0xff]
        %v842 = vld [vmem:[#allocation5 + $0x40] sm:$0xff]
        %v843 = vld [vmem:[#allocation5 + $0x48] sm:$0xff]
        %v844 = vld [vmem:[#allocation5 + $0x50] sm:$0xff]
        %v845 = vld [vmem:[#allocation5 + $0x58] sm:$0xff]
        %v846 = vld [vmem:[#allocation5 + $0x60] sm:$0xff]
        %v847 = vld [vmem:[#allocation5 + $0x68] sm:$0xff]
        %v848 = vld [vmem:[#allocation5 + $0x70] sm:$0xff]
        %v849 = vld [vmem:[#allocation5 + $0x78] sm:$0xff]
        %v850 = vld [vmem:[#allocation5 + $0x80] sm:$0xff]
        %v851 = vld [vmem:[#allocation5 + $0x88] sm:$0xff]
        %v852 = vld [vmem:[#allocation5 + $0x90] sm:$0xff]
        %v853 = vld [vmem:[#allocation5 + $0x98] sm:$0xff]
        %v854 = vld [vmem:[#allocation5 + $0xa0] sm:$0xff]
        %v855 = vld [vmem:[#allocation5 + $0xa8] sm:$0xff]
        %v856 = vld [vmem:[#allocation5 + $0xb0] sm:$0xff]
        %v857 = vld [vmem:[#allocation5 + $0xb8] sm:$0xff]
        %v858 = vld [vmem:[#allocation5 + $0xc0] sm:$0xff]
        %v859 = vld [vmem:[#allocation5 + $0xc8] sm:$0xff]
        %v860 = vld [vmem:[#allocation5 + $0xd0] sm:$0xff]
        %v861 = vld [vmem:[#allocation5 + $0xd8] sm:$0xff]
        %v862 = vld [vmem:[#allocation5 + $0xe0] sm:$0xff]
        %v863 = vld [vmem:[#allocation5 + $0xe8] sm:$0xff]
        %v864 = vld [vmem:[#allocation5 + $0xf0] sm:$0xff]
        %v865 = vld [vmem:[#allocation5 + $0xf8] sm:$0xff]
        %v866 = vld [vmem:[#allocation5 + $0x100] sm:$0xff]
        %v867 = vld [vmem:[#allocation5 + $0x108] sm:$0xff]
        %v868 = vld [vmem:[#allocation5 + $0x110] sm:$0xff]
        %v869 = vld [vmem:[#allocation5 + $0x118] sm:$0xff]
        %v870 = vld [vmem:[#allocation5 + $0x120] sm:$0xff]
        %v871 = vld [vmem:[#allocation5 + $0x128] sm:$0xff]
        %v872 = vld [vmem:[#allocation5 + $0x130] sm:$0xff]
        %v873 = vld [vmem:[#allocation5 + $0x138] sm:$0xff]
        %v874 = vld [vmem:[#allocation5 + $0x140] sm:$0xff]
        %v875 = vld [vmem:[#allocation5 + $0x148] sm:$0xff]
        %v876 = vld [vmem:[#allocation5 + $0x150] sm:$0xff]
        %v877 = vld [vmem:[#allocation5 + $0x158] sm:$0xff]
        %v878 = vld [vmem:[#allocation5 + $0x160] sm:$0xff]
        %v879 = vld [vmem:[#allocation5 + $0x168] sm:$0xff]
        %v880 = vld [vmem:[#allocation5 + $0x170] sm:$0xff]
        %v881 = vld [vmem:[#allocation5 + $0x178] sm:$0xff]
        %v882 = vld [vmem:[#allocation5 + $0x180] sm:$0xff]
        %v883 = vld [vmem:[#allocation5 + $0x188] sm:$0xff]
        %v884 = vld [vmem:[#allocation5 + $0x190] sm:$0xff]
        %v885 = vld [vmem:[#allocation5 + $0x198] sm:$0xff]
        %v886 = vld [vmem:[#allocation5 + $0x1a0] sm:$0xff]
        %v887 = vld [vmem:[#allocation5 + $0x1a8] sm:$0xff]
        %v888 = vld [vmem:[#allocation5 + $0x1b0] sm:$0xff]
        %v889 = vld [vmem:[#allocation5 + $0x1b8] sm:$0xff]
        %v890 = vld [vmem:[#allocation5 + $0x1c0] sm:$0xff]
        %v891 = vld [vmem:[#allocation5 + $0x1c8] sm:$0xff]
        %v892 = vld [vmem:[#allocation5 + $0x1d0] sm:$0xff]
        %v893 = vld [vmem:[#allocation5 + $0x1d8] sm:$0xff]
        %v894 = vld [vmem:[#allocation5 + $0x1e0] sm:$0xff]
        %v895 = vld [vmem:[#allocation5 + $0x1e8] sm:$0xff]
        %v896 = vld [vmem:[#allocation5 + $0x1f0] sm:$0xff]
        %v897 = vld [vmem:[#allocation5 + $0x1f8] sm:$0xff]
        %v898 = vld [vmem:[#allocation5 + $0x200] sm:$0xff]
        %v899 = vld [vmem:[#allocation5 + $0x208] sm:$0xff]
        %v900 = vld [vmem:[#allocation5 + $0x210] sm:$0xff]
        %v901 = vld [vmem:[#allocation5 + $0x218] sm:$0xff]
        %v902 = vld [vmem:[#allocation5 + $0x220] sm:$0xff]
        %v903 = vld [vmem:[#allocation5 + $0x228] sm:$0xff]
        %v904 = vld [vmem:[#allocation5 + $0x230] sm:$0xff]
        %v905 = vld [vmem:[#allocation5 + $0x238] sm:$0xff]
        %v906 = vld [vmem:[#allocation5 + $0x240] sm:$0xff]
        %v907 = vld [vmem:[#allocation5 + $0x248] sm:$0xff]
        %v908 = vld [vmem:[#allocation5 + $0x250] sm:$0xff]
        %v909 = vld [vmem:[#allocation5 + $0x258] sm:$0xff]
        %v910 = vld [vmem:[#allocation5 + $0x260] sm:$0xff]
        %v911 = vld [vmem:[#allocation5 + $0x268] sm:$0xff]
        %v912 = vld [vmem:[#allocation5 + $0x270] sm:$0xff]
        %v913 = vld [vmem:[#allocation5 + $0x278] sm:$0xff]
        %v914 = vld [vmem:[#allocation5 + $0x280] sm:$0xff]
        %v915 = vld [vmem:[#allocation5 + $0x288] sm:$0xff]
        %v916 = vld [vmem:[#allocation5 + $0x290] sm:$0xff]
        %v917 = vld [vmem:[#allocation5 + $0x298] sm:$0xff]
        %v918 = vld [vmem:[#allocation5 + $0x2a0] sm:$0xff]
        %v919 = vld [vmem:[#allocation5 + $0x2a8] sm:$0xff]
        %v920 = vld [vmem:[#allocation5 + $0x2b0] sm:$0xff]
        %v921 = vld [vmem:[#allocation5 + $0x2b8] sm:$0xff]
        %v922 = vld [vmem:[#allocation5 + $0x2c0] sm:$0xff]
        %v923 = vld [vmem:[#allocation5 + $0x2c8] sm:$0xff]
        %v924 = vld [vmem:[#allocation5 + $0x2d0] sm:$0xff]
        %v925 = vld [vmem:[#allocation5 + $0x2d8] sm:$0xff]
        %v926 = vld [vmem:[#allocation5 + $0x2e0] sm:$0xff]
        %v927 = vld [vmem:[#allocation5 + $0x2e8] sm:$0xff]
        %v928 = vld [vmem:[#allocation5 + $0x2f0] sm:$0xff]
        %v929 = vld [vmem:[#allocation5 + $0x2f8] sm:$0xff]
        %v930 = vld [vmem:[#allocation5 + $0x300] sm:$0xff]
        %v931 = vld [vmem:[#allocation5 + $0x308] sm:$0xff]
        %v932 = vld [vmem:[#allocation5 + $0x310] sm:$0xff]
        %v933 = vld [vmem:[#allocation5 + $0x318] sm:$0xff]
        %v934 = vld [vmem:[#allocation5 + $0x320] sm:$0xff]
        %v935 = vld [vmem:[#allocation5 + $0x328] sm:$0xff]
        %v936 = vld [vmem:[#allocation5 + $0x330] sm:$0xff]
        %v937 = vld [vmem:[#allocation5 + $0x338] sm:$0xff]
        %v938 = vld [vmem:[#allocation5 + $0x340] sm:$0xff]
        %v939 = vld [vmem:[#allocation5 + $0x348] sm:$0xff]
        %v940 = vld [vmem:[#allocation5 + $0x350] sm:$0xff]
        %v941 = vld [vmem:[#allocation5 + $0x358] sm:$0xff]
        %v942 = vld [vmem:[#allocation5 + $0x360] sm:$0xff]
        %v943 = vld [vmem:[#allocation5 + $0x368] sm:$0xff]
        %v944 = vld [vmem:[#allocation5 + $0x370] sm:$0xff]
        %v945 = vld [vmem:[#allocation5 + $0x378] sm:$0xff]
        %v946 = vld [vmem:[#allocation5 + $0x380] sm:$0xff]
        %v947 = vld [vmem:[#allocation5 + $0x388] sm:$0xff]
        %v948 = vld [vmem:[#allocation5 + $0x390] sm:$0xff]
        %v949 = vld [vmem:[#allocation5 + $0x398] sm:$0xff]
        %v950 = vld [vmem:[#allocation5 + $0x3a0] sm:$0xff]
        %v951 = vld [vmem:[#allocation5 + $0x3a8] sm:$0xff]
        %v952 = vld [vmem:[#allocation5 + $0x3b0] sm:$0xff]
        %v953 = vld [vmem:[#allocation5 + $0x3b8] sm:$0xff]
        %v954 = vld [vmem:[#allocation5 + $0x3c0] sm:$0xff]
        %v955 = vld [vmem:[#allocation5 + $0x3c8] sm:$0xff]
        %v956 = vld [vmem:[#allocation5 + $0x3d0] sm:$0xff]
        %v957 = vld [vmem:[#allocation5 + $0x3d8] sm:$0xff]
        %v958 = vld [vmem:[#allocation5 + $0x3e0] sm:$0xff]
        %v959 = vld [vmem:[#allocation5 + $0x3e8] sm:$0xff]
        %v960 = vld [vmem:[#allocation5 + $0x3f0] sm:$0xff]
        %v961 = vld [vmem:[#allocation5 + $0x3f8] sm:$0xff]
        %v962 = vld [vmem:[#allocation5 + $0x400] sm:$0xff]
        %v963 = vld [vmem:[#allocation5 + $0x408] sm:$0xff]
        %v964 = vld [vmem:[#allocation5 + $0x410] sm:$0xff]
        %v965 = vld [vmem:[#allocation5 + $0x418] sm:$0xff]
        %v966 = vld [vmem:[#allocation5 + $0x420] sm:$0xff]
        %v967 = vld [vmem:[#allocation5 + $0x428] sm:$0xff]
        %v968 = vld [vmem:[#allocation5 + $0x430] sm:$0xff]
        %v969 = vld [vmem:[#allocation5 + $0x438] sm:$0xff]
        %v970 = vld [vmem:[#allocation5 + $0x440] sm:$0xff]
        %v971 = vld [vmem:[#allocation5 + $0x448] sm:$0xff]
        %v972 = vld [vmem:[#allocation5 + $0x450] sm:$0xff]
        %v973 = vld [vmem:[#allocation5 + $0x458] sm:$0xff]
        %v974 = vld [vmem:[#allocation5 + $0x460] sm:$0xff]
        %v975 = vld [vmem:[#allocation5 + $0x468] sm:$0xff]
        %v976 = vld [vmem:[#allocation5 + $0x470] sm:$0xff]
        %v977 = vld [vmem:[#allocation5 + $0x478] sm:$0xff]
        %v978 = vld [vmem:[#allocation5 + $0x480] sm:$0xff]
        %v979 = vld [vmem:[#allocation5 + $0x488] sm:$0xff]
        %v980 = vld [vmem:[#allocation5 + $0x490] sm:$0xff]
        %v981 = vld [vmem:[#allocation5 + $0x498] sm:$0xff]
        %v982 = vld [vmem:[#allocation5 + $0x4a0] sm:$0xff]
        %v983 = vld [vmem:[#allocation5 + $0x4a8] sm:$0xff]
        %v984 = vld [vmem:[#allocation5 + $0x4b0] sm:$0xff]
        %v985 = vld [vmem:[#allocation5 + $0x4b8] sm:$0xff]
        %v986 = vld [vmem:[#allocation5 + $0x4c0] sm:$0xff]
        %v987 = vld [vmem:[#allocation5 + $0x4c8] sm:$0xff]
        %v988 = vld [vmem:[#allocation5 + $0x4d0] sm:$0xff]
        %v989 = vld [vmem:[#allocation5 + $0x4d8] sm:$0xff]
        %v990 = vld [vmem:[#allocation5 + $0x4e0] sm:$0xff]
        %v991 = vld [vmem:[#allocation5 + $0x4e8] sm:$0xff]
        %v992 = vld [vmem:[#allocation5 + $0x4f0] sm:$0xff]
        %v993 = vld [vmem:[#allocation5 + $0x4f8] sm:$0xff]
        %v994 = vld [vmem:[#allocation5 + $0x500] sm:$0xff]
        %v995 = vld [vmem:[#allocation5 + $0x508] sm:$0xff]
        %v996 = vld [vmem:[#allocation5 + $0x510] sm:$0xff]
        %v997 = vld [vmem:[#allocation5 + $0x518] sm:$0xff]
        %v998 = vld [vmem:[#allocation5 + $0x520] sm:$0xff]
        %v999 = vld [vmem:[#allocation5 + $0x528] sm:$0xff]
        %v1000 = vld [vmem:[#allocation5 + $0x530] sm:$0xff]
        %v1001 = vld [vmem:[#allocation5 + $0x538] sm:$0xff]
        %v1002 = vld [vmem:[#allocation5 + $0x540] sm:$0xff]
        %v1003 = vld [vmem:[#allocation5 + $0x548] sm:$0xff]
        %v1004 = vld [vmem:[#allocation5 + $0x550] sm:$0xff]
        %v1005 = vld [vmem:[#allocation5 + $0x558] sm:$0xff]
        %v1006 = vld [vmem:[#allocation5 + $0x560] sm:$0xff]
        %v1007 = vld [vmem:[#allocation5 + $0x568] sm:$0xff]
        %v1008 = vld [vmem:[#allocation5 + $0x570] sm:$0xff]
        %v1009 = vld [vmem:[#allocation5 + $0x578] sm:$0xff]
        %v1010 = vld [vmem:[#allocation5 + $0x580] sm:$0xff]
        %v1011 = vld [vmem:[#allocation5 + $0x588] sm:$0xff]
        %v1012 = vld [vmem:[#allocation5 + $0x590] sm:$0xff]
        %v1013 = vld [vmem:[#allocation5 + $0x598] sm:$0xff]
        %v1014 = vld [vmem:[#allocation5 + $0x5a0] sm:$0xff]
        %v1015 = vld [vmem:[#allocation5 + $0x5a8] sm:$0xff]
        %v1016 = vld [vmem:[#allocation5 + $0x5b0] sm:$0xff]
        %v1017 = vld [vmem:[#allocation5 + $0x5b8] sm:$0xff]
        %v1018 = vld [vmem:[#allocation5 + $0x5c0] sm:$0xff]
        %v1019 = vld [vmem:[#allocation5 + $0x5c8] sm:$0xff]
        %v1020 = vld [vmem:[#allocation5 + $0x5d0] sm:$0xff]
        %v1021 = vld [vmem:[#allocation5 + $0x5d8] sm:$0xff]
        %v1022 = vld [vmem:[#allocation5 + $0x5e0] sm:$0xff]
        %v1023 = vld [vmem:[#allocation5 + $0x5e8] sm:$0xff]
        %v1024 = vld [vmem:[#allocation5 + $0x5f0] sm:$0xff]
        %v1025 = vld [vmem:[#allocation5 + $0x5f8] sm:$0xff]
        %v1026 = vld [vmem:[#allocation5 + $0x600] sm:$0xff]
        %v1027 = vld [vmem:[#allocation5 + $0x608] sm:$0xff]
        %v1028 = vld [vmem:[#allocation5 + $0x610] sm:$0xff]
        %v1029 = vld [vmem:[#allocation5 + $0x618] sm:$0xff]
        %v1030 = vld [vmem:[#allocation5 + $0x620] sm:$0xff]
        %v1031 = vld [vmem:[#allocation5 + $0x628] sm:$0xff]
        %v1032 = vld [vmem:[#allocation5 + $0x630] sm:$0xff]
        %v1033 = vld [vmem:[#allocation5 + $0x638] sm:$0xff]
        %v1034 = vld [vmem:[#allocation5 + $0x640] sm:$0xff]
        %v1035 = vld [vmem:[#allocation5 + $0x648] sm:$0xff]
        %v1036 = vld [vmem:[#allocation5 + $0x650] sm:$0xff]
        %v1037 = vld [vmem:[#allocation5 + $0x658] sm:$0xff]
        %v1038 = vld [vmem:[#allocation5 + $0x660] sm:$0xff]
        %v1039 = vld [vmem:[#allocation5 + $0x668] sm:$0xff]
        %v1040 = vld [vmem:[#allocation5 + $0x670] sm:$0xff]
        %v1041 = vld [vmem:[#allocation5 + $0x678] sm:$0xff]
        %v1042 = vld [vmem:[#allocation5 + $0x680] sm:$0xff]
        %v1043 = vld [vmem:[#allocation5 + $0x688] sm:$0xff]
        %v1044 = vld [vmem:[#allocation5 + $0x690] sm:$0xff]
        %v1045 = vld [vmem:[#allocation5 + $0x698] sm:$0xff]
        %v1046 = vld [vmem:[#allocation5 + $0x6a0] sm:$0xff]
        %v1047 = vld [vmem:[#allocation5 + $0x6a8] sm:$0xff]
        %v1048 = vld [vmem:[#allocation5 + $0x6b0] sm:$0xff]
        %v1049 = vld [vmem:[#allocation5 + $0x6b8] sm:$0xff]
        %v1050 = vld [vmem:[#allocation5 + $0x6c0] sm:$0xff]
        %v1051 = vld [vmem:[#allocation5 + $0x6c8] sm:$0xff]
        %v1052 = vld [vmem:[#allocation5 + $0x6d0] sm:$0xff]
        %v1053 = vld [vmem:[#allocation5 + $0x6d8] sm:$0xff]
        %v1054 = vld [vmem:[#allocation5 + $0x6e0] sm:$0xff]
        %v1055 = vld [vmem:[#allocation5 + $0x6e8] sm:$0xff]
        %v1056 = vld [vmem:[#allocation5 + $0x6f0] sm:$0xff]
        %v1057 = vld [vmem:[#allocation5 + $0x6f8] sm:$0xff]
        %v1058 = vld [vmem:[#allocation5 + $0x700] sm:$0xff]
        %v1059 = vld [vmem:[#allocation5 + $0x708] sm:$0xff]
        %v1060 = vld [vmem:[#allocation5 + $0x710] sm:$0xff]
        %v1061 = vld [vmem:[#allocation5 + $0x718] sm:$0xff]
        %v1062 = vld [vmem:[#allocation5 + $0x720] sm:$0xff]
        %v1063 = vld [vmem:[#allocation5 + $0x728] sm:$0xff]
        %v1064 = vld [vmem:[#allocation5 + $0x730] sm:$0xff]
        %v1065 = vld [vmem:[#allocation5 + $0x738] sm:$0xff]
        %v1066 = vld [vmem:[#allocation5 + $0x740] sm:$0xff]
        %v1067 = vld [vmem:[#allocation5 + $0x748] sm:$0xff]
        %v1068 = vld [vmem:[#allocation5 + $0x750] sm:$0xff]
        %v1069 = vld [vmem:[#allocation5 + $0x758] sm:$0xff]
        %v1070 = vld [vmem:[#allocation5 + $0x760] sm:$0xff]
        %v1071 = vld [vmem:[#allocation5 + $0x768] sm:$0xff]
        %v1072 = vld [vmem:[#allocation5 + $0x770] sm:$0xff]
        %v1073 = vld [vmem:[#allocation5 + $0x778] sm:$0xff]
        %v1074 = vld [vmem:[#allocation5 + $0x780] sm:$0xff]
        %v1075 = vld [vmem:[#allocation5 + $0x788] sm:$0xff]
        %v1076 = vld [vmem:[#allocation5 + $0x790] sm:$0xff]
        %v1077 = vld [vmem:[#allocation5 + $0x798] sm:$0xff]
        %v1078 = vld [vmem:[#allocation5 + $0x7a0] sm:$0xff]
        %v1079 = vld [vmem:[#allocation5 + $0x7a8] sm:$0xff]
        %v1080 = vld [vmem:[#allocation5 + $0x7b0] sm:$0xff]
        %v1081 = vld [vmem:[#allocation5 + $0x7b8] sm:$0xff]
        %v1082 = vld [vmem:[#allocation5 + $0x7c0] sm:$0xff]
        %v1083 = vld [vmem:[#allocation5 + $0x7c8] sm:$0xff]
        %v1084 = vld [vmem:[#allocation5 + $0x7d0] sm:$0xff]
        %v1085 = vld [vmem:[#allocation5 + $0x7d8] sm:$0xff]
        %v1086 = vld [vmem:[#allocation5 + $0x7e0] sm:$0xff]
        %v1087 = vld [vmem:[#allocation5 + $0x7e8] sm:$0xff]
        %v1088 = vld [vmem:[#allocation5 + $0x7f0] sm:$0xff]
        %v1089 = vld [vmem:[#allocation5 + $0x7f8] sm:$0xff]
        %v1090 = vld [vmem:[%s6] sm:$0xff]
        %v1092 = vlaneseq
        %v1093 = vshrl.u32 %v1092, 7
        %v1094 = vsub.s32 0, %v1093
        %v1095 = vrot.slane %v1090, %v1094
        %v1096 = vlaneseq
        %v1097 = vshrl.u32 %v1096, 7
        %v1098 = vsub.s32 1, %v1097
        %v1099 = vrot.slane %v1090, %v1098
        %v1100 = vlaneseq
        %v1101 = vshrl.u32 %v1100, 7
        %v1102 = vsub.s32 2, %v1101
        %v1103 = vrot.slane %v1090, %v1102
        %v1104 = vlaneseq
        %v1105 = vshrl.u32 %v1104, 7
        %v1106 = vsub.s32 3, %v1105
        %v1107 = vrot.slane %v1090, %v1106
        %v1108 = vlaneseq
        %v1109 = vshrl.u32 %v1108, 7
        %v1110 = vsub.s32 4, %v1109
        %v1111 = vrot.slane %v1090, %v1110
        %v1112 = vlaneseq
        %v1113 = vshrl.u32 %v1112, 7
        %v1114 = vsub.s32 5, %v1113
        %v1115 = vrot.slane %v1090, %v1114
        %v1116 = vlaneseq
        %v1117 = vshrl.u32 %v1116, 7
        %v1118 = vsub.s32 6, %v1117
        %v1119 = vrot.slane %v1090, %v1118
        %v1120 = vlaneseq
        %v1121 = vshrl.u32 %v1120, 7
        %v1122 = vsub.s32 7, %v1121
        %v1123 = vrot.slane %v1090, %v1122
        %v1388 = vunpack.c.l.b16 %v834
        %v1389 = vunpack.c.h.b16 %v834
        %v1390 = vunpack.c.l.b16 %v835
        %v1391 = vunpack.c.h.b16 %v835
        %v1392 = vunpack.c.l.b16 %v836
        %v1393 = vunpack.c.h.b16 %v836
        %v1394 = vunpack.c.l.b16 %v837
        %v1395 = vunpack.c.h.b16 %v837
        %v1396 = vunpack.c.l.b16 %v838
        %v1397 = vunpack.c.h.b16 %v838
        %v1398 = vunpack.c.l.b16 %v839
        %v1399 = vunpack.c.h.b16 %v839
        %v1400 = vunpack.c.l.b16 %v840
        %v1401 = vunpack.c.h.b16 %v840
        %v1402 = vunpack.c.l.b16 %v841
        %v1403 = vunpack.c.h.b16 %v841
        %v1404 = vunpack.c.l.b16 %v842
        %v1405 = vunpack.c.h.b16 %v842
        %v1406 = vunpack.c.l.b16 %v843
        %v1407 = vunpack.c.h.b16 %v843
        %v1408 = vunpack.c.l.b16 %v844
        %v1409 = vunpack.c.h.b16 %v844
        %v1410 = vunpack.c.l.b16 %v845
        %v1411 = vunpack.c.h.b16 %v845
        %v1412 = vunpack.c.l.b16 %v846
        %v1413 = vunpack.c.h.b16 %v846
        %v1414 = vunpack.c.l.b16 %v847
        %v1415 = vunpack.c.h.b16 %v847
        %v1416 = vunpack.c.l.b16 %v848
        %v1417 = vunpack.c.h.b16 %v848
        %v1418 = vunpack.c.l.b16 %v849
        %v1419 = vunpack.c.h.b16 %v849
        %v1420 = vunpack.c.l.b16 %v850
        %v1421 = vunpack.c.h.b16 %v850
        %v1422 = vunpack.c.l.b16 %v851
        %v1423 = vunpack.c.h.b16 %v851
        %v1424 = vunpack.c.l.b16 %v852
        %v1425 = vunpack.c.h.b16 %v852
        %v1426 = vunpack.c.l.b16 %v853
        %v1427 = vunpack.c.h.b16 %v853
        %v1428 = vunpack.c.l.b16 %v854
        %v1429 = vunpack.c.h.b16 %v854
        %v1430 = vunpack.c.l.b16 %v855
        %v1431 = vunpack.c.h.b16 %v855
        %v1432 = vunpack.c.l.b16 %v856
        %v1433 = vunpack.c.h.b16 %v856
        %v1434 = vunpack.c.l.b16 %v857
        %v1435 = vunpack.c.h.b16 %v857
        %v1436 = vunpack.c.l.b16 %v858
        %v1437 = vunpack.c.h.b16 %v858
        %v1438 = vunpack.c.l.b16 %v859
        %v1439 = vunpack.c.h.b16 %v859
        %v1440 = vunpack.c.l.b16 %v860
        %v1441 = vunpack.c.h.b16 %v860
        %v1442 = vunpack.c.l.b16 %v861
        %v1443 = vunpack.c.h.b16 %v861
        %v1444 = vunpack.c.l.b16 %v862
        %v1445 = vunpack.c.h.b16 %v862
        %v1446 = vunpack.c.l.b16 %v863
        %v1447 = vunpack.c.h.b16 %v863
        %v1448 = vunpack.c.l.b16 %v864
        %v1449 = vunpack.c.h.b16 %v864
        %v1450 = vunpack.c.l.b16 %v865
        %v1451 = vunpack.c.h.b16 %v865
        %v1452 = vunpack.c.l.b16 %v866
        %v1453 = vunpack.c.h.b16 %v866
        %v1454 = vunpack.c.l.b16 %v867
        %v1455 = vunpack.c.h.b16 %v867
        %v1456 = vunpack.c.l.b16 %v868
        %v1457 = vunpack.c.h.b16 %v868
        %v1458 = vunpack.c.l.b16 %v869
        %v1459 = vunpack.c.h.b16 %v869
        %v1460 = vunpack.c.l.b16 %v870
        %v1461 = vunpack.c.h.b16 %v870
        %v1462 = vunpack.c.l.b16 %v871
        %v1463 = vunpack.c.h.b16 %v871
        %v1464 = vunpack.c.l.b16 %v872
        %v1465 = vunpack.c.h.b16 %v872
        %v1466 = vunpack.c.l.b16 %v873
        %v1467 = vunpack.c.h.b16 %v873
        %v1468 = vunpack.c.l.b16 %v874
        %v1469 = vunpack.c.h.b16 %v874
        %v1470 = vunpack.c.l.b16 %v875
        %v1471 = vunpack.c.h.b16 %v875
        %v1472 = vunpack.c.l.b16 %v876
        %v1473 = vunpack.c.h.b16 %v876
        %v1474 = vunpack.c.l.b16 %v877
        %v1475 = vunpack.c.h.b16 %v877
        %v1476 = vunpack.c.l.b16 %v878
        %v1477 = vunpack.c.h.b16 %v878
        %v1478 = vunpack.c.l.b16 %v879
        %v1479 = vunpack.c.h.b16 %v879
        %v1480 = vunpack.c.l.b16 %v880
        %v1481 = vunpack.c.h.b16 %v880
        %v1482 = vunpack.c.l.b16 %v881
        %v1483 = vunpack.c.h.b16 %v881
        %v1484 = vunpack.c.l.b16 %v882
        %v1485 = vunpack.c.h.b16 %v882
        %v1486 = vunpack.c.l.b16 %v883
        %v1487 = vunpack.c.h.b16 %v883
        %v1488 = vunpack.c.l.b16 %v884
        %v1489 = vunpack.c.h.b16 %v884
        %v1490 = vunpack.c.l.b16 %v885
        %v1491 = vunpack.c.h.b16 %v885
        %v1492 = vunpack.c.l.b16 %v886
        %v1493 = vunpack.c.h.b16 %v886
        %v1494 = vunpack.c.l.b16 %v887
        %v1495 = vunpack.c.h.b16 %v887
        %v1496 = vunpack.c.l.b16 %v888
        %v1497 = vunpack.c.h.b16 %v888
        %v1498 = vunpack.c.l.b16 %v889
        %v1499 = vunpack.c.h.b16 %v889
        %v1500 = vunpack.c.l.b16 %v890
        %v1501 = vunpack.c.h.b16 %v890
        %v1502 = vunpack.c.l.b16 %v891
        %v1503 = vunpack.c.h.b16 %v891
        %v1504 = vunpack.c.l.b16 %v892
        %v1505 = vunpack.c.h.b16 %v892
        %v1506 = vunpack.c.l.b16 %v893
        %v1507 = vunpack.c.h.b16 %v893
        %v1508 = vunpack.c.l.b16 %v894
        %v1509 = vunpack.c.h.b16 %v894
        %v1510 = vunpack.c.l.b16 %v895
        %v1511 = vunpack.c.h.b16 %v895
        %v1512 = vunpack.c.l.b16 %v896
        %v1513 = vunpack.c.h.b16 %v896
        %v1514 = vunpack.c.l.b16 %v897
        %v1515 = vunpack.c.h.b16 %v897
        %v1516 = vunpack.c.l.b16 %v898
        %v1517 = vunpack.c.h.b16 %v898
        %v1518 = vunpack.c.l.b16 %v899
        %v1519 = vunpack.c.h.b16 %v899
        %v1520 = vunpack.c.l.b16 %v900
        %v1521 = vunpack.c.h.b16 %v900
        %v1522 = vunpack.c.l.b16 %v901
        %v1523 = vunpack.c.h.b16 %v901
        %v1524 = vunpack.c.l.b16 %v902
        %v1525 = vunpack.c.h.b16 %v902
        %v1526 = vunpack.c.l.b16 %v903
        %v1527 = vunpack.c.h.b16 %v903
        %v1528 = vunpack.c.l.b16 %v904
        %v1529 = vunpack.c.h.b16 %v904
        %v1530 = vunpack.c.l.b16 %v905
        %v1531 = vunpack.c.h.b16 %v905
        %v1532 = vunpack.c.l.b16 %v906
        %v1533 = vunpack.c.h.b16 %v906
        %v1534 = vunpack.c.l.b16 %v907
        %v1535 = vunpack.c.h.b16 %v907
        %v1536 = vunpack.c.l.b16 %v908
        %v1537 = vunpack.c.h.b16 %v908
        %v1538 = vunpack.c.l.b16 %v909
        %v1539 = vunpack.c.h.b16 %v909
        %v1540 = vunpack.c.l.b16 %v910
        %v1541 = vunpack.c.h.b16 %v910
        %v1542 = vunpack.c.l.b16 %v911
        %v1543 = vunpack.c.h.b16 %v911
        %v1544 = vunpack.c.l.b16 %v912
        %v1545 = vunpack.c.h.b16 %v912
        %v1546 = vunpack.c.l.b16 %v913
        %v1547 = vunpack.c.h.b16 %v913
        %v1548 = vunpack.c.l.b16 %v914
        %v1549 = vunpack.c.h.b16 %v914
        %v1550 = vunpack.c.l.b16 %v915
        %v1551 = vunpack.c.h.b16 %v915
        %v1552 = vunpack.c.l.b16 %v916
        %v1553 = vunpack.c.h.b16 %v916
        %v1554 = vunpack.c.l.b16 %v917
        %v1555 = vunpack.c.h.b16 %v917
        %v1556 = vunpack.c.l.b16 %v918
        %v1557 = vunpack.c.h.b16 %v918
        %v1558 = vunpack.c.l.b16 %v919
        %v1559 = vunpack.c.h.b16 %v919
        %v1560 = vunpack.c.l.b16 %v920
        %v1561 = vunpack.c.h.b16 %v920
        %v1562 = vunpack.c.l.b16 %v921
        %v1563 = vunpack.c.h.b16 %v921
        %v1564 = vunpack.c.l.b16 %v922
        %v1565 = vunpack.c.h.b16 %v922
        %v1566 = vunpack.c.l.b16 %v923
        %v1567 = vunpack.c.h.b16 %v923
        %v1568 = vunpack.c.l.b16 %v924
        %v1569 = vunpack.c.h.b16 %v924
        %v1570 = vunpack.c.l.b16 %v925
        %v1571 = vunpack.c.h.b16 %v925
        %v1572 = vunpack.c.l.b16 %v926
        %v1573 = vunpack.c.h.b16 %v926
        %v1574 = vunpack.c.l.b16 %v927
        %v1575 = vunpack.c.h.b16 %v927
        %v1576 = vunpack.c.l.b16 %v928
        %v1577 = vunpack.c.h.b16 %v928
        %v1578 = vunpack.c.l.b16 %v929
        %v1579 = vunpack.c.h.b16 %v929
        %v1580 = vunpack.c.l.b16 %v930
        %v1581 = vunpack.c.h.b16 %v930
        %v1582 = vunpack.c.l.b16 %v931
        %v1583 = vunpack.c.h.b16 %v931
        %v1584 = vunpack.c.l.b16 %v932
        %v1585 = vunpack.c.h.b16 %v932
        %v1586 = vunpack.c.l.b16 %v933
        %v1587 = vunpack.c.h.b16 %v933
        %v1588 = vunpack.c.l.b16 %v934
        %v1589 = vunpack.c.h.b16 %v934
        %v1590 = vunpack.c.l.b16 %v935
        %v1591 = vunpack.c.h.b16 %v935
        %v1592 = vunpack.c.l.b16 %v936
        %v1593 = vunpack.c.h.b16 %v936
        %v1594 = vunpack.c.l.b16 %v937
        %v1595 = vunpack.c.h.b16 %v937
        %v1596 = vunpack.c.l.b16 %v938
        %v1597 = vunpack.c.h.b16 %v938
        %v1598 = vunpack.c.l.b16 %v939
        %v1599 = vunpack.c.h.b16 %v939
        %v1600 = vunpack.c.l.b16 %v940
        %v1601 = vunpack.c.h.b16 %v940
        %v1602 = vunpack.c.l.b16 %v941
        %v1603 = vunpack.c.h.b16 %v941
        %v1604 = vunpack.c.l.b16 %v942
        %v1605 = vunpack.c.h.b16 %v942
        %v1606 = vunpack.c.l.b16 %v943
        %v1607 = vunpack.c.h.b16 %v943
        %v1608 = vunpack.c.l.b16 %v944
        %v1609 = vunpack.c.h.b16 %v944
        %v1610 = vunpack.c.l.b16 %v945
        %v1611 = vunpack.c.h.b16 %v945
        %v1612 = vunpack.c.l.b16 %v946
        %v1613 = vunpack.c.h.b16 %v946
        %v1614 = vunpack.c.l.b16 %v947
        %v1615 = vunpack.c.h.b16 %v947
        %v1616 = vunpack.c.l.b16 %v948
        %v1617 = vunpack.c.h.b16 %v948
        %v1618 = vunpack.c.l.b16 %v949
        %v1619 = vunpack.c.h.b16 %v949
        %v1620 = vunpack.c.l.b16 %v950
        %v1621 = vunpack.c.h.b16 %v950
        %v1622 = vunpack.c.l.b16 %v951
        %v1623 = vunpack.c.h.b16 %v951
        %v1624 = vunpack.c.l.b16 %v952
        %v1625 = vunpack.c.h.b16 %v952
        %v1626 = vunpack.c.l.b16 %v953
        %v1627 = vunpack.c.h.b16 %v953
        %v1628 = vunpack.c.l.b16 %v954
        %v1629 = vunpack.c.h.b16 %v954
        %v1630 = vunpack.c.l.b16 %v955
        %v1631 = vunpack.c.h.b16 %v955
        %v1632 = vunpack.c.l.b16 %v956
        %v1633 = vunpack.c.h.b16 %v956
        %v1634 = vunpack.c.l.b16 %v957
        %v1635 = vunpack.c.h.b16 %v957
        %v1636 = vunpack.c.l.b16 %v958
        %v1637 = vunpack.c.h.b16 %v958
        %v1638 = vunpack.c.l.b16 %v959
        %v1639 = vunpack.c.h.b16 %v959
        %v1640 = vunpack.c.l.b16 %v960
        %v1641 = vunpack.c.h.b16 %v960
        %v1642 = vunpack.c.l.b16 %v961
        %v1643 = vunpack.c.h.b16 %v961
        %v1644 = vunpack.c.l.b16 %v962
        %v1645 = vunpack.c.h.b16 %v962
        %v1646 = vunpack.c.l.b16 %v963
        %v1647 = vunpack.c.h.b16 %v963
        %v1648 = vunpack.c.l.b16 %v964
        %v1649 = vunpack.c.h.b16 %v964
        %v1650 = vunpack.c.l.b16 %v965
        %v1651 = vunpack.c.h.b16 %v965
        %v1652 = vunpack.c.l.b16 %v966
        %v1653 = vunpack.c.h.b16 %v966
        %v1654 = vunpack.c.l.b16 %v967
        %v1655 = vunpack.c.h.b16 %v967
        %v1656 = vunpack.c.l.b16 %v968
        %v1657 = vunpack.c.h.b16 %v968
        %v1658 = vunpack.c.l.b16 %v969
        %v1659 = vunpack.c.h.b16 %v969
        %v1660 = vunpack.c.l.b16 %v970
        %v1661 = vunpack.c.h.b16 %v970
        %v1662 = vunpack.c.l.b16 %v971
        %v1663 = vunpack.c.h.b16 %v971
        %v1664 = vunpack.c.l.b16 %v972
        %v1665 = vunpack.c.h.b16 %v972
        %v1666 = vunpack.c.l.b16 %v973
        %v1667 = vunpack.c.h.b16 %v973
        %v1668 = vunpack.c.l.b16 %v974
        %v1669 = vunpack.c.h.b16 %v974
        %v1670 = vunpack.c.l.b16 %v975
        %v1671 = vunpack.c.h.b16 %v975
        %v1672 = vunpack.c.l.b16 %v976
        %v1673 = vunpack.c.h.b16 %v976
        %v1674 = vunpack.c.l.b16 %v977
        %v1675 = vunpack.c.h.b16 %v977
        %v1676 = vunpack.c.l.b16 %v978
        %v1677 = vunpack.c.h.b16 %v978
        %v1678 = vunpack.c.l.b16 %v979
        %v1679 = vunpack.c.h.b16 %v979
        %v1680 = vunpack.c.l.b16 %v980
        %v1681 = vunpack.c.h.b16 %v980
        %v1682 = vunpack.c.l.b16 %v981
        %v1683 = vunpack.c.h.b16 %v981
        %v1684 = vunpack.c.l.b16 %v982
        %v1685 = vunpack.c.h.b16 %v982
        %v1686 = vunpack.c.l.b16 %v983
        %v1687 = vunpack.c.h.b16 %v983
        %v1688 = vunpack.c.l.b16 %v984
        %v1689 = vunpack.c.h.b16 %v984
        %v1690 = vunpack.c.l.b16 %v985
        %v1691 = vunpack.c.h.b16 %v985
        %v1692 = vunpack.c.l.b16 %v986
        %v1693 = vunpack.c.h.b16 %v986
        %v1694 = vunpack.c.l.b16 %v987
        %v1695 = vunpack.c.h.b16 %v987
        %v1696 = vunpack.c.l.b16 %v988
        %v1697 = vunpack.c.h.b16 %v988
        %v1698 = vunpack.c.l.b16 %v989
        %v1699 = vunpack.c.h.b16 %v989
        %v1700 = vunpack.c.l.b16 %v990
        %v1701 = vunpack.c.h.b16 %v990
        %v1702 = vunpack.c.l.b16 %v991
        %v1703 = vunpack.c.h.b16 %v991
        %v1704 = vunpack.c.l.b16 %v992
        %v1705 = vunpack.c.h.b16 %v992
        %v1706 = vunpack.c.l.b16 %v993
        %v1707 = vunpack.c.h.b16 %v993
        %v1708 = vunpack.c.l.b16 %v994
        %v1709 = vunpack.c.h.b16 %v994
        %v1710 = vunpack.c.l.b16 %v995
        %v1711 = vunpack.c.h.b16 %v995
        %v1712 = vunpack.c.l.b16 %v996
        %v1713 = vunpack.c.h.b16 %v996
        %v1714 = vunpack.c.l.b16 %v997
        %v1715 = vunpack.c.h.b16 %v997
        %v1716 = vunpack.c.l.b16 %v998
        %v1717 = vunpack.c.h.b16 %v998
        %v1718 = vunpack.c.l.b16 %v999
        %v1719 = vunpack.c.h.b16 %v999
        %v1720 = vunpack.c.l.b16 %v1000
        %v1721 = vunpack.c.h.b16 %v1000
        %v1722 = vunpack.c.l.b16 %v1001
        %v1723 = vunpack.c.h.b16 %v1001
        %v1724 = vunpack.c.l.b16 %v1002
        %v1725 = vunpack.c.h.b16 %v1002
        %v1726 = vunpack.c.l.b16 %v1003
        %v1727 = vunpack.c.h.b16 %v1003
        %v1728 = vunpack.c.l.b16 %v1004
        %v1729 = vunpack.c.h.b16 %v1004
        %v1730 = vunpack.c.l.b16 %v1005
        %v1731 = vunpack.c.h.b16 %v1005
        %v1732 = vunpack.c.l.b16 %v1006
        %v1733 = vunpack.c.h.b16 %v1006
        %v1734 = vunpack.c.l.b16 %v1007
        %v1735 = vunpack.c.h.b16 %v1007
        %v1736 = vunpack.c.l.b16 %v1008
        %v1737 = vunpack.c.h.b16 %v1008
        %v1738 = vunpack.c.l.b16 %v1009
        %v1739 = vunpack.c.h.b16 %v1009
        %v1740 = vunpack.c.l.b16 %v1010
        %v1741 = vunpack.c.h.b16 %v1010
        %v1742 = vunpack.c.l.b16 %v1011
        %v1743 = vunpack.c.h.b16 %v1011
        %v1744 = vunpack.c.l.b16 %v1012
        %v1745 = vunpack.c.h.b16 %v1012
        %v1746 = vunpack.c.l.b16 %v1013
        %v1747 = vunpack.c.h.b16 %v1013
        %v1748 = vunpack.c.l.b16 %v1014
        %v1749 = vunpack.c.h.b16 %v1014
        %v1750 = vunpack.c.l.b16 %v1015
        %v1751 = vunpack.c.h.b16 %v1015
        %v1752 = vunpack.c.l.b16 %v1016
        %v1753 = vunpack.c.h.b16 %v1016
        %v1754 = vunpack.c.l.b16 %v1017
        %v1755 = vunpack.c.h.b16 %v1017
        %v1756 = vunpack.c.l.b16 %v1018
        %v1757 = vunpack.c.h.b16 %v1018
        %v1758 = vunpack.c.l.b16 %v1019
        %v1759 = vunpack.c.h.b16 %v1019
        %v1760 = vunpack.c.l.b16 %v1020
        %v1761 = vunpack.c.h.b16 %v1020
        %v1762 = vunpack.c.l.b16 %v1021
        %v1763 = vunpack.c.h.b16 %v1021
        %v1764 = vunpack.c.l.b16 %v1022
        %v1765 = vunpack.c.h.b16 %v1022
        %v1766 = vunpack.c.l.b16 %v1023
        %v1767 = vunpack.c.h.b16 %v1023
        %v1768 = vunpack.c.l.b16 %v1024
        %v1769 = vunpack.c.h.b16 %v1024
        %v1770 = vunpack.c.l.b16 %v1025
        %v1771 = vunpack.c.h.b16 %v1025
        %v1772 = vunpack.c.l.b16 %v1026
        %v1773 = vunpack.c.h.b16 %v1026
        %v1774 = vunpack.c.l.b16 %v1027
        %v1775 = vunpack.c.h.b16 %v1027
        %v1776 = vunpack.c.l.b16 %v1028
        %v1777 = vunpack.c.h.b16 %v1028
        %v1778 = vunpack.c.l.b16 %v1029
        %v1779 = vunpack.c.h.b16 %v1029
        %v1780 = vunpack.c.l.b16 %v1030
        %v1781 = vunpack.c.h.b16 %v1030
        %v1782 = vunpack.c.l.b16 %v1031
        %v1783 = vunpack.c.h.b16 %v1031
        %v1784 = vunpack.c.l.b16 %v1032
        %v1785 = vunpack.c.h.b16 %v1032
        %v1786 = vunpack.c.l.b16 %v1033
        %v1787 = vunpack.c.h.b16 %v1033
        %v1788 = vunpack.c.l.b16 %v1034
        %v1789 = vunpack.c.h.b16 %v1034
        %v1790 = vunpack.c.l.b16 %v1035
        %v1791 = vunpack.c.h.b16 %v1035
        %v1792 = vunpack.c.l.b16 %v1036
        %v1793 = vunpack.c.h.b16 %v1036
        %v1794 = vunpack.c.l.b16 %v1037
        %v1795 = vunpack.c.h.b16 %v1037
        %v1796 = vunpack.c.l.b16 %v1038
        %v1797 = vunpack.c.h.b16 %v1038
        %v1798 = vunpack.c.l.b16 %v1039
        %v1799 = vunpack.c.h.b16 %v1039
        %v1800 = vunpack.c.l.b16 %v1040
        %v1801 = vunpack.c.h.b16 %v1040
        %v1802 = vunpack.c.l.b16 %v1041
        %v1803 = vunpack.c.h.b16 %v1041
        %v1804 = vunpack.c.l.b16 %v1042
        %v1805 = vunpack.c.h.b16 %v1042
        %v1806 = vunpack.c.l.b16 %v1043
        %v1807 = vunpack.c.h.b16 %v1043
        %v1808 = vunpack.c.l.b16 %v1044
        %v1809 = vunpack.c.h.b16 %v1044
        %v1810 = vunpack.c.l.b16 %v1045
        %v1811 = vunpack.c.h.b16 %v1045
        %v1812 = vunpack.c.l.b16 %v1046
        %v1813 = vunpack.c.h.b16 %v1046
        %v1814 = vunpack.c.l.b16 %v1047
        %v1815 = vunpack.c.h.b16 %v1047
        %v1816 = vunpack.c.l.b16 %v1048
        %v1817 = vunpack.c.h.b16 %v1048
        %v1818 = vunpack.c.l.b16 %v1049
        %v1819 = vunpack.c.h.b16 %v1049
        %v1820 = vunpack.c.l.b16 %v1050
        %v1821 = vunpack.c.h.b16 %v1050
        %v1822 = vunpack.c.l.b16 %v1051
        %v1823 = vunpack.c.h.b16 %v1051
        %v1824 = vunpack.c.l.b16 %v1052
        %v1825 = vunpack.c.h.b16 %v1052
        %v1826 = vunpack.c.l.b16 %v1053
        %v1827 = vunpack.c.h.b16 %v1053
        %v1828 = vunpack.c.l.b16 %v1054
        %v1829 = vunpack.c.h.b16 %v1054
        %v1830 = vunpack.c.l.b16 %v1055
        %v1831 = vunpack.c.h.b16 %v1055
        %v1832 = vunpack.c.l.b16 %v1056
        %v1833 = vunpack.c.h.b16 %v1056
        %v1834 = vunpack.c.l.b16 %v1057
        %v1835 = vunpack.c.h.b16 %v1057
        %v1836 = vunpack.c.l.b16 %v1058
        %v1837 = vunpack.c.h.b16 %v1058
        %v1838 = vunpack.c.l.b16 %v1059
        %v1839 = vunpack.c.h.b16 %v1059
        %v1840 = vunpack.c.l.b16 %v1060
        %v1841 = vunpack.c.h.b16 %v1060
        %v1842 = vunpack.c.l.b16 %v1061
        %v1843 = vunpack.c.h.b16 %v1061
        %v1844 = vunpack.c.l.b16 %v1062
        %v1845 = vunpack.c.h.b16 %v1062
        %v1846 = vunpack.c.l.b16 %v1063
        %v1847 = vunpack.c.h.b16 %v1063
        %v1848 = vunpack.c.l.b16 %v1064
        %v1849 = vunpack.c.h.b16 %v1064
        %v1850 = vunpack.c.l.b16 %v1065
        %v1851 = vunpack.c.h.b16 %v1065
        %v1852 = vunpack.c.l.b16 %v1066
        %v1853 = vunpack.c.h.b16 %v1066
        %v1854 = vunpack.c.l.b16 %v1067
        %v1855 = vunpack.c.h.b16 %v1067
        %v1856 = vunpack.c.l.b16 %v1068
        %v1857 = vunpack.c.h.b16 %v1068
        %v1858 = vunpack.c.l.b16 %v1069
        %v1859 = vunpack.c.h.b16 %v1069
        %v1860 = vunpack.c.l.b16 %v1070
        %v1861 = vunpack.c.h.b16 %v1070
        %v1862 = vunpack.c.l.b16 %v1071
        %v1863 = vunpack.c.h.b16 %v1071
        %v1864 = vunpack.c.l.b16 %v1072
        %v1865 = vunpack.c.h.b16 %v1072
        %v1866 = vunpack.c.l.b16 %v1073
        %v1867 = vunpack.c.h.b16 %v1073
        %v1868 = vunpack.c.l.b16 %v1074
        %v1869 = vunpack.c.h.b16 %v1074
        %v1870 = vunpack.c.l.b16 %v1075
        %v1871 = vunpack.c.h.b16 %v1075
        %v1872 = vunpack.c.l.b16 %v1076
        %v1873 = vunpack.c.h.b16 %v1076
        %v1874 = vunpack.c.l.b16 %v1077
        %v1875 = vunpack.c.h.b16 %v1077
        %v1876 = vunpack.c.l.b16 %v1078
        %v1877 = vunpack.c.h.b16 %v1078
        %v1878 = vunpack.c.l.b16 %v1079
        %v1879 = vunpack.c.h.b16 %v1079
        %v1880 = vunpack.c.l.b16 %v1080
        %v1881 = vunpack.c.h.b16 %v1080
        %v1882 = vunpack.c.l.b16 %v1081
        %v1883 = vunpack.c.h.b16 %v1081
        %v1884 = vunpack.c.l.b16 %v1082
        %v1885 = vunpack.c.h.b16 %v1082
        %v1886 = vunpack.c.l.b16 %v1083
        %v1887 = vunpack.c.h.b16 %v1083
        %v1888 = vunpack.c.l.b16 %v1084
        %v1889 = vunpack.c.h.b16 %v1084
        %v1890 = vunpack.c.l.b16 %v1085
        %v1891 = vunpack.c.h.b16 %v1085
        %v1892 = vunpack.c.l.b16 %v1086
        %v1893 = vunpack.c.h.b16 %v1086
        %v1894 = vunpack.c.l.b16 %v1087
        %v1895 = vunpack.c.h.b16 %v1087
        %v1896 = vunpack.c.l.b16 %v1088
        %v1897 = vunpack.c.h.b16 %v1088
        %v1898 = vunpack.c.l.b16 %v1089
        %v1899 = vunpack.c.h.b16 %v1089
        %v1900 = vpack.c.b16 %v1396, %v1388
        %v1901 = vpack.c.b16 %v1397, %v1389
        %v1902 = vpack.c.b16 %v1398, %v1390
        %v1903 = vpack.c.b16 %v1399, %v1391
        %v1904 = vpack.c.b16 %v1400, %v1392
        %v1905 = vpack.c.b16 %v1401, %v1393
        %v1906 = vpack.c.b16 %v1402, %v1394
        %v1907 = vpack.c.b16 %v1403, %v1395
        %v1908 = vpack.c.b16 %v1412, %v1404
        %v1909 = vpack.c.b16 %v1413, %v1405
        %v1910 = vpack.c.b16 %v1414, %v1406
        %v1911 = vpack.c.b16 %v1415, %v1407
        %v1912 = vpack.c.b16 %v1416, %v1408
        %v1913 = vpack.c.b16 %v1417, %v1409
        %v1914 = vpack.c.b16 %v1418, %v1410
        %v1915 = vpack.c.b16 %v1419, %v1411
        %v1916 = vpack.c.b16 %v1428, %v1420
        %v1917 = vpack.c.b16 %v1429, %v1421
        %v1918 = vpack.c.b16 %v1430, %v1422
        %v1919 = vpack.c.b16 %v1431, %v1423
        %v1920 = vpack.c.b16 %v1432, %v1424
        %v1921 = vpack.c.b16 %v1433, %v1425
        %v1922 = vpack.c.b16 %v1434, %v1426
        %v1923 = vpack.c.b16 %v1435, %v1427
        %v1924 = vpack.c.b16 %v1444, %v1436
        %v1925 = vpack.c.b16 %v1445, %v1437
        %v1926 = vpack.c.b16 %v1446, %v1438
        %v1927 = vpack.c.b16 %v1447, %v1439
        %v1928 = vpack.c.b16 %v1448, %v1440
        %v1929 = vpack.c.b16 %v1449, %v1441
        %v1930 = vpack.c.b16 %v1450, %v1442
        %v1931 = vpack.c.b16 %v1451, %v1443
        %v1932 = vpack.c.b16 %v1460, %v1452
        %v1933 = vpack.c.b16 %v1461, %v1453
        %v1934 = vpack.c.b16 %v1462, %v1454
        %v1935 = vpack.c.b16 %v1463, %v1455
        %v1936 = vpack.c.b16 %v1464, %v1456
        %v1937 = vpack.c.b16 %v1465, %v1457
        %v1938 = vpack.c.b16 %v1466, %v1458
        %v1939 = vpack.c.b16 %v1467, %v1459
        %v1940 = vpack.c.b16 %v1476, %v1468
        %v1941 = vpack.c.b16 %v1477, %v1469
        %v1942 = vpack.c.b16 %v1478, %v1470
        %v1943 = vpack.c.b16 %v1479, %v1471
        %v1944 = vpack.c.b16 %v1480, %v1472
        %v1945 = vpack.c.b16 %v1481, %v1473
        %v1946 = vpack.c.b16 %v1482, %v1474
        %v1947 = vpack.c.b16 %v1483, %v1475
        %v1948 = vpack.c.b16 %v1492, %v1484
        %v1949 = vpack.c.b16 %v1493, %v1485
        %v1950 = vpack.c.b16 %v1494, %v1486
        %v1951 = vpack.c.b16 %v1495, %v1487
        %v1952 = vpack.c.b16 %v1496, %v1488
        %v1953 = vpack.c.b16 %v1497, %v1489
        %v1954 = vpack.c.b16 %v1498, %v1490
        %v1955 = vpack.c.b16 %v1499, %v1491
        %v1956 = vpack.c.b16 %v1508, %v1500
        %v1957 = vpack.c.b16 %v1509, %v1501
        %v1958 = vpack.c.b16 %v1510, %v1502
        %v1959 = vpack.c.b16 %v1511, %v1503
        %v1960 = vpack.c.b16 %v1512, %v1504
        %v1961 = vpack.c.b16 %v1513, %v1505
        %v1962 = vpack.c.b16 %v1514, %v1506
        %v1963 = vpack.c.b16 %v1515, %v1507
        %v1964 = vpack.c.b16 %v1524, %v1516
        %v1965 = vpack.c.b16 %v1525, %v1517
        %v1966 = vpack.c.b16 %v1526, %v1518
        %v1967 = vpack.c.b16 %v1527, %v1519
        %v1968 = vpack.c.b16 %v1528, %v1520
        %v1969 = vpack.c.b16 %v1529, %v1521
        %v1970 = vpack.c.b16 %v1530, %v1522
        %v1971 = vpack.c.b16 %v1531, %v1523
        %v1972 = vpack.c.b16 %v1540, %v1532
        %v1973 = vpack.c.b16 %v1541, %v1533
        %v1974 = vpack.c.b16 %v1542, %v1534
        %v1975 = vpack.c.b16 %v1543, %v1535
        %v1976 = vpack.c.b16 %v1544, %v1536
        %v1977 = vpack.c.b16 %v1545, %v1537
        %v1978 = vpack.c.b16 %v1546, %v1538
        %v1979 = vpack.c.b16 %v1547, %v1539
        %v1980 = vpack.c.b16 %v1556, %v1548
        %v1981 = vpack.c.b16 %v1557, %v1549
        %v1982 = vpack.c.b16 %v1558, %v1550
        %v1983 = vpack.c.b16 %v1559, %v1551
        %v1984 = vpack.c.b16 %v1560, %v1552
        %v1985 = vpack.c.b16 %v1561, %v1553
        %v1986 = vpack.c.b16 %v1562, %v1554
        %v1987 = vpack.c.b16 %v1563, %v1555
        %v1988 = vpack.c.b16 %v1572, %v1564
        %v1989 = vpack.c.b16 %v1573, %v1565
        %v1990 = vpack.c.b16 %v1574, %v1566
        %v1991 = vpack.c.b16 %v1575, %v1567
        %v1992 = vpack.c.b16 %v1576, %v1568
        %v1993 = vpack.c.b16 %v1577, %v1569
        %v1994 = vpack.c.b16 %v1578, %v1570
        %v1995 = vpack.c.b16 %v1579, %v1571
        %v1996 = vpack.c.b16 %v1588, %v1580
        %v1997 = vpack.c.b16 %v1589, %v1581
        %v1998 = vpack.c.b16 %v1590, %v1582
        %v1999 = vpack.c.b16 %v1591, %v1583
        %v2000 = vpack.c.b16 %v1592, %v1584
        %v2001 = vpack.c.b16 %v1593, %v1585
        %v2002 = vpack.c.b16 %v1594, %v1586
        %v2003 = vpack.c.b16 %v1595, %v1587
        %v2004 = vpack.c.b16 %v1604, %v1596
        %v2005 = vpack.c.b16 %v1605, %v1597
        %v2006 = vpack.c.b16 %v1606, %v1598
        %v2007 = vpack.c.b16 %v1607, %v1599
        %v2008 = vpack.c.b16 %v1608, %v1600
        %v2009 = vpack.c.b16 %v1609, %v1601
        %v2010 = vpack.c.b16 %v1610, %v1602
        %v2011 = vpack.c.b16 %v1611, %v1603
        %v2012 = vpack.c.b16 %v1620, %v1612
        %v2013 = vpack.c.b16 %v1621, %v1613
        %v2014 = vpack.c.b16 %v1622, %v1614
        %v2015 = vpack.c.b16 %v1623, %v1615
        %v2016 = vpack.c.b16 %v1624, %v1616
        %v2017 = vpack.c.b16 %v1625, %v1617
        %v2018 = vpack.c.b16 %v1626, %v1618
        %v2019 = vpack.c.b16 %v1627, %v1619
        %v2020 = vpack.c.b16 %v1636, %v1628
        %v2021 = vpack.c.b16 %v1637, %v1629
        %v2022 = vpack.c.b16 %v1638, %v1630
        %v2023 = vpack.c.b16 %v1639, %v1631
        %v2024 = vpack.c.b16 %v1640, %v1632
        %v2025 = vpack.c.b16 %v1641, %v1633
        %v2026 = vpack.c.b16 %v1642, %v1634
        %v2027 = vpack.c.b16 %v1643, %v1635
        %v2028 = vpack.c.b16 %v1652, %v1644
        %v2029 = vpack.c.b16 %v1653, %v1645
        %v2030 = vpack.c.b16 %v1654, %v1646
        %v2031 = vpack.c.b16 %v1655, %v1647
        %v2032 = vpack.c.b16 %v1656, %v1648
        %v2033 = vpack.c.b16 %v1657, %v1649
        %v2034 = vpack.c.b16 %v1658, %v1650
        %v2035 = vpack.c.b16 %v1659, %v1651
        %v2036 = vpack.c.b16 %v1668, %v1660
        %v2037 = vpack.c.b16 %v1669, %v1661
        %v2038 = vpack.c.b16 %v1670, %v1662
        %v2039 = vpack.c.b16 %v1671, %v1663
        %v2040 = vpack.c.b16 %v1672, %v1664
        %v2041 = vpack.c.b16 %v1673, %v1665
        %v2042 = vpack.c.b16 %v1674, %v1666
        %v2043 = vpack.c.b16 %v1675, %v1667
        %v2044 = vpack.c.b16 %v1684, %v1676
        %v2045 = vpack.c.b16 %v1685, %v1677
        %v2046 = vpack.c.b16 %v1686, %v1678
        %v2047 = vpack.c.b16 %v1687, %v1679
        %v2048 = vpack.c.b16 %v1688, %v1680
        %v2049 = vpack.c.b16 %v1689, %v1681
        %v2050 = vpack.c.b16 %v1690, %v1682
        %v2051 = vpack.c.b16 %v1691, %v1683
        %v2052 = vpack.c.b16 %v1700, %v1692
        %v2053 = vpack.c.b16 %v1701, %v1693
        %v2054 = vpack.c.b16 %v1702, %v1694
        %v2055 = vpack.c.b16 %v1703, %v1695
        %v2056 = vpack.c.b16 %v1704, %v1696
        %v2057 = vpack.c.b16 %v1705, %v1697
        %v2058 = vpack.c.b16 %v1706, %v1698
        %v2059 = vpack.c.b16 %v1707, %v1699
        %v2060 = vpack.c.b16 %v1716, %v1708
        %v2061 = vpack.c.b16 %v1717, %v1709
        %v2062 = vpack.c.b16 %v1718, %v1710
        %v2063 = vpack.c.b16 %v1719, %v1711
        %v2064 = vpack.c.b16 %v1720, %v1712
        %v2065 = vpack.c.b16 %v1721, %v1713
        %v2066 = vpack.c.b16 %v1722, %v1714
        %v2067 = vpack.c.b16 %v1723, %v1715
        %v2068 = vpack.c.b16 %v1732, %v1724
        %v2069 = vpack.c.b16 %v1733, %v1725
        %v2070 = vpack.c.b16 %v1734, %v1726
        %v2071 = vpack.c.b16 %v1735, %v1727
        %v2072 = vpack.c.b16 %v1736, %v1728
        %v2073 = vpack.c.b16 %v1737, %v1729
        %v2074 = vpack.c.b16 %v1738, %v1730
        %v2075 = vpack.c.b16 %v1739, %v1731
        %v2076 = vpack.c.b16 %v1748, %v1740
        %v2077 = vpack.c.b16 %v1749, %v1741
        %v2078 = vpack.c.b16 %v1750, %v1742
        %v2079 = vpack.c.b16 %v1751, %v1743
        %v2080 = vpack.c.b16 %v1752, %v1744
        %v2081 = vpack.c.b16 %v1753, %v1745
        %v2082 = vpack.c.b16 %v1754, %v1746
        %v2083 = vpack.c.b16 %v1755, %v1747
        %v2084 = vpack.c.b16 %v1764, %v1756
        %v2085 = vpack.c.b16 %v1765, %v1757
        %v2086 = vpack.c.b16 %v1766, %v1758
        %v2087 = vpack.c.b16 %v1767, %v1759
        %v2088 = vpack.c.b16 %v1768, %v1760
        %v2089 = vpack.c.b16 %v1769, %v1761
        %v2090 = vpack.c.b16 %v1770, %v1762
        %v2091 = vpack.c.b16 %v1771, %v1763
        %v2092 = vpack.c.b16 %v1780, %v1772
        %v2093 = vpack.c.b16 %v1781, %v1773
        %v2094 = vpack.c.b16 %v1782, %v1774
        %v2095 = vpack.c.b16 %v1783, %v1775
        %v2096 = vpack.c.b16 %v1784, %v1776
        %v2097 = vpack.c.b16 %v1785, %v1777
        %v2098 = vpack.c.b16 %v1786, %v1778
        %v2099 = vpack.c.b16 %v1787, %v1779
        %v2100 = vpack.c.b16 %v1796, %v1788
        %v2101 = vpack.c.b16 %v1797, %v1789
        %v2102 = vpack.c.b16 %v1798, %v1790
        %v2103 = vpack.c.b16 %v1799, %v1791
        %v2104 = vpack.c.b16 %v1800, %v1792
        %v2105 = vpack.c.b16 %v1801, %v1793
        %v2106 = vpack.c.b16 %v1802, %v1794
        %v2107 = vpack.c.b16 %v1803, %v1795
        %v2108 = vpack.c.b16 %v1812, %v1804
        %v2109 = vpack.c.b16 %v1813, %v1805
        %v2110 = vpack.c.b16 %v1814, %v1806
        %v2111 = vpack.c.b16 %v1815, %v1807
        %v2112 = vpack.c.b16 %v1816, %v1808
        %v2113 = vpack.c.b16 %v1817, %v1809
        %v2114 = vpack.c.b16 %v1818, %v1810
        %v2115 = vpack.c.b16 %v1819, %v1811
        %v2116 = vpack.c.b16 %v1828, %v1820
        %v2117 = vpack.c.b16 %v1829, %v1821
        %v2118 = vpack.c.b16 %v1830, %v1822
        %v2119 = vpack.c.b16 %v1831, %v1823
        %v2120 = vpack.c.b16 %v1832, %v1824
        %v2121 = vpack.c.b16 %v1833, %v1825
        %v2122 = vpack.c.b16 %v1834, %v1826
        %v2123 = vpack.c.b16 %v1835, %v1827
        %v2124 = vpack.c.b16 %v1844, %v1836
        %v2125 = vpack.c.b16 %v1845, %v1837
        %v2126 = vpack.c.b16 %v1846, %v1838
        %v2127 = vpack.c.b16 %v1847, %v1839
        %v2128 = vpack.c.b16 %v1848, %v1840
        %v2129 = vpack.c.b16 %v1849, %v1841
        %v2130 = vpack.c.b16 %v1850, %v1842
        %v2131 = vpack.c.b16 %v1851, %v1843
        %v2132 = vpack.c.b16 %v1860, %v1852
        %v2133 = vpack.c.b16 %v1861, %v1853
        %v2134 = vpack.c.b16 %v1862, %v1854
        %v2135 = vpack.c.b16 %v1863, %v1855
        %v2136 = vpack.c.b16 %v1864, %v1856
        %v2137 = vpack.c.b16 %v1865, %v1857
        %v2138 = vpack.c.b16 %v1866, %v1858
        %v2139 = vpack.c.b16 %v1867, %v1859
        %v2140 = vpack.c.b16 %v1876, %v1868
        %v2141 = vpack.c.b16 %v1877, %v1869
        %v2142 = vpack.c.b16 %v1878, %v1870
        %v2143 = vpack.c.b16 %v1879, %v1871
        %v2144 = vpack.c.b16 %v1880, %v1872
        %v2145 = vpack.c.b16 %v1881, %v1873
        %v2146 = vpack.c.b16 %v1882, %v1874
        %v2147 = vpack.c.b16 %v1883, %v1875
        %v2148 = vpack.c.b16 %v1892, %v1884
        %v2149 = vpack.c.b16 %v1893, %v1885
        %v2150 = vpack.c.b16 %v1894, %v1886
        %v2151 = vpack.c.b16 %v1895, %v1887
        %v2152 = vpack.c.b16 %v1896, %v1888
        %v2153 = vpack.c.b16 %v1897, %v1889
        %v2154 = vpack.c.b16 %v1898, %v1890
        %v2155 = vpack.c.b16 %v1899, %v1891
        %2412 = vmatprep.subr.bf16.mxu0 %v1901
        %2413 = vmatpush1.bf16.msra.mxu0 %v1900
        %2414 = vmatprep.subr.bf16.mxu0 %v1909
        %2415 = vmatpush1.bf16.msra.mxu0 %v1908
        %2416 = vmatprep.subr.bf16.mxu0 %v1917
        %2417 = vmatpush1.bf16.msra.mxu0 %v1916
        %2418 = vmatprep.subr.bf16.mxu0 %v1925
        %2419 = vmatpush1.bf16.msra.mxu0 %v1924
        %2420 = vmatprep.subr.bf16.mxu0 %v1933
        %2421 = vmatpush1.bf16.msra.mxu0 %v1932
        %2422 = vmatprep.subr.bf16.mxu0 %v1941
        %2423 = vmatpush1.bf16.msra.mxu0 %v1940
        %2424 = vmatprep.subr.bf16.mxu0 %v1949
        %2425 = vmatpush1.bf16.msra.mxu0 %v1948
        %2426 = vmatprep.subr.bf16.mxu0 %v1957
        %2427 = vmatpush1.bf16.msra.mxu0 %v1956
        %2428 = vmatprep.subr.bf16.mxu0 %v1965
        %2429 = vmatpush1.bf16.msra.mxu0 %v1964
        %2430 = vmatprep.subr.bf16.mxu0 %v1973
        %2431 = vmatpush1.bf16.msra.mxu0 %v1972
        %2432 = vmatprep.subr.bf16.mxu0 %v1981
        %2433 = vmatpush1.bf16.msra.mxu0 %v1980
        %2434 = vmatprep.subr.bf16.mxu0 %v1989
        %2435 = vmatpush1.bf16.msra.mxu0 %v1988
        %2436 = vmatprep.subr.bf16.mxu0 %v1997
        %2437 = vmatpush1.bf16.msra.mxu0 %v1996
        %2438 = vmatprep.subr.bf16.mxu0 %v2005
        %2439 = vmatpush1.bf16.msra.mxu0 %v2004
        %2440 = vmatprep.subr.bf16.mxu0 %v2013
        %2441 = vmatpush1.bf16.msra.mxu0 %v2012
        %2442 = vmatprep.subr.bf16.mxu0 %v2021
        %2443 = vmatpush1.bf16.msra.mxu0 %v2020
        %2444 = vmatprep.mubr.bf16.mxu0 %v831
        %2445 = vmatmul.mubr.bf16.gmra.mrb[0].mxu0 %v830
        %v2446 = vpop.f32.mrb[0].mxu0
        %v2447 = vadd.f32 %v1095, %v2446
        %v2448 = vpop.f32.mrb[0].mxu0
        %v2449 = vadd.f32 %v1099, %v2448
        %v2450 = vpop.f32.mrb[0].mxu0
        %v2451 = vadd.f32 %v1095, %v2450
        %v2452 = vpop.f32.mrb[0].mxu0
        %v2453 = vadd.f32 %v1099, %v2452
        %2454 = vdwg.mxu0
        %2455 = vmatprep.subr.bf16.mxu0 %v2029
        %2456 = vmatpush1.bf16.msra.mxu0 %v2028
        %2457 = vmatprep.subr.bf16.mxu0 %v2037
        %2458 = vmatpush1.bf16.msra.mxu0 %v2036
        %2459 = vmatprep.subr.bf16.mxu0 %v2045
        %2460 = vmatpush1.bf16.msra.mxu0 %v2044
        %2461 = vmatprep.subr.bf16.mxu0 %v2053
        %2462 = vmatpush1.bf16.msra.mxu0 %v2052
        %2463 = vmatprep.subr.bf16.mxu0 %v2061
        %2464 = vmatpush1.bf16.msra.mxu0 %v2060
        %2465 = vmatprep.subr.bf16.mxu0 %v2069
        %2466 = vmatpush1.bf16.msra.mxu0 %v2068
        %2467 = vmatprep.subr.bf16.mxu0 %v2077
        %2468 = vmatpush1.bf16.msra.mxu0 %v2076
        %2469 = vmatprep.subr.bf16.mxu0 %v2085
        %2470 = vmatpush1.bf16.msra.mxu0 %v2084
        %2471 = vmatprep.subr.bf16.mxu0 %v2093
        %2472 = vmatpush1.bf16.msra.mxu0 %v2092
        %2473 = vmatprep.subr.bf16.mxu0 %v2101
        %2474 = vmatpush1.bf16.msra.mxu0 %v2100
        %2475 = vmatprep.subr.bf16.mxu0 %v2109
        %2476 = vmatpush1.bf16.msra.mxu0 %v2108
        %2477 = vmatprep.subr.bf16.mxu0 %v2117
        %2478 = vmatpush1.bf16.msra.mxu0 %v2116
        %2479 = vmatprep.subr.bf16.mxu0 %v2125
        %2480 = vmatpush1.bf16.msra.mxu0 %v2124
        %2481 = vmatprep.subr.bf16.mxu0 %v2133
        %2482 = vmatpush1.bf16.msra.mxu0 %v2132
        %2483 = vmatprep.subr.bf16.mxu0 %v2141
        %2484 = vmatpush1.bf16.msra.mxu0 %v2140
        %2485 = vmatprep.subr.bf16.mxu0 %v2149
        %2486 = vmatpush1.bf16.msra.mxu0 %v2148
        %2487 = vmatprep.mubr.bf16.mxu0 %v833
        %2488 = vmatmul.mubr.bf16.gmra.mrb[0].mxu0 %v832
        %v2489 = vpop.f32.mrb[0].mxu0
        %v2490 = vadd.f32 %v2447, %v2489
        %v2491 = vpop.f32.mrb[0].mxu0
        %v2492 = vadd.f32 %v2449, %v2491
        %v2493 = vpop.f32.mrb[0].mxu0
        %v2494 = vadd.f32 %v2451, %v2493
        %v2495 = vpop.f32.mrb[0].mxu0
        %v2496 = vadd.f32 %v2453, %v2495
        %2497 = vdwg.mxu0
        %2498 = vmatprep.subr.bf16.mxu0 %v1903
        %2499 = vmatpush1.bf16.msra.mxu0 %v1902
        %2500 = vmatprep.subr.bf16.mxu0 %v1911
        %2501 = vmatpush1.bf16.msra.mxu0 %v1910
        %2502 = vmatprep.subr.bf16.mxu0 %v1919
        %2503 = vmatpush1.bf16.msra.mxu0 %v1918
        %2504 = vmatprep.subr.bf16.mxu0 %v1927
        %2505 = vmatpush1.bf16.msra.mxu0 %v1926
        %2506 = vmatprep.subr.bf16.mxu0 %v1935
        %2507 = vmatpush1.bf16.msra.mxu0 %v1934
        %2508 = vmatprep.subr.bf16.mxu0 %v1943
        %2509 = vmatpush1.bf16.msra.mxu0 %v1942
        %2510 = vmatprep.subr.bf16.mxu0 %v1951
        %2511 = vmatpush1.bf16.msra.mxu0 %v1950
        %2512 = vmatprep.subr.bf16.mxu0 %v1959
        %2513 = vmatpush1.bf16.msra.mxu0 %v1958
        %2514 = vmatprep.subr.bf16.mxu0 %v1967
        %2515 = vmatpush1.bf16.msra.mxu0 %v1966
        %2516 = vmatprep.subr.bf16.mxu0 %v1975
        %2517 = vmatpush1.bf16.msra.mxu0 %v1974
        %2518 = vmatprep.subr.bf16.mxu0 %v1983
        %2519 = vmatpush1.bf16.msra.mxu0 %v1982
        %2520 = vmatprep.subr.bf16.mxu0 %v1991
        %2521 = vmatpush1.bf16.msra.mxu0 %v1990
        %2522 = vmatprep.subr.bf16.mxu0 %v1999
        %2523 = vmatpush1.bf16.msra.mxu0 %v1998
        %2524 = vmatprep.subr.bf16.mxu0 %v2007
        %2525 = vmatpush1.bf16.msra.mxu0 %v2006
        %2526 = vmatprep.subr.bf16.mxu0 %v2015
        %2527 = vmatpush1.bf16.msra.mxu0 %v2014
        %2528 = vmatprep.subr.bf16.mxu0 %v2023
        %2529 = vmatpush1.bf16.msra.mxu0 %v2022
        %2530 = vmatprep.mubr.bf16.mxu0 %v831
        %2531 = vmatmul.mubr.bf16.gmra.mrb[0].mxu0 %v830
        %v2532 = vpop.f32.mrb[0].mxu0
        %v2533 = vadd.f32 %v1103, %v2532
        %v2534 = vpop.f32.mrb[0].mxu0
        %v2535 = vadd.f32 %v1107, %v2534
        %v2536 = vpop.f32.mrb[0].mxu0
        %v2537 = vadd.f32 %v1103, %v2536
        %v2538 = vpop.f32.mrb[0].mxu0
        %v2539 = vadd.f32 %v1107, %v2538
        %2540 = vdwg.mxu0
        %2541 = vmatprep.subr.bf16.mxu0 %v2031
        %2542 = vmatpush1.bf16.msra.mxu0 %v2030
        %2543 = vmatprep.subr.bf16.mxu0 %v2039
        %2544 = vmatpush1.bf16.msra.mxu0 %v2038
        %2545 = vmatprep.subr.bf16.mxu0 %v2047
        %2546 = vmatpush1.bf16.msra.mxu0 %v2046
        %2547 = vmatprep.subr.bf16.mxu0 %v2055
        %2548 = vmatpush1.bf16.msra.mxu0 %v2054
        %2549 = vmatprep.subr.bf16.mxu0 %v2063
        %2550 = vmatpush1.bf16.msra.mxu0 %v2062
        %2551 = vmatprep.subr.bf16.mxu0 %v2071
        %2552 = vmatpush1.bf16.msra.mxu0 %v2070
        %2553 = vmatprep.subr.bf16.mxu0 %v2079
        %2554 = vmatpush1.bf16.msra.mxu0 %v2078
        %2555 = vmatprep.subr.bf16.mxu0 %v2087
        %2556 = vmatpush1.bf16.msra.mxu0 %v2086
        %2557 = vmatprep.subr.bf16.mxu0 %v2095
        %2558 = vmatpush1.bf16.msra.mxu0 %v2094
        %2559 = vmatprep.subr.bf16.mxu0 %v2103
        %2560 = vmatpush1.bf16.msra.mxu0 %v2102
        %2561 = vmatprep.subr.bf16.mxu0 %v2111
        %2562 = vmatpush1.bf16.msra.mxu0 %v2110
        %2563 = vmatprep.subr.bf16.mxu0 %v2119
        %2564 = vmatpush1.bf16.msra.mxu0 %v2118
        %2565 = vmatprep.subr.bf16.mxu0 %v2127
        %2566 = vmatpush1.bf16.msra.mxu0 %v2126
        %2567 = vmatprep.subr.bf16.mxu0 %v2135
        %2568 = vmatpush1.bf16.msra.mxu0 %v2134
        %2569 = vmatprep.subr.bf16.mxu0 %v2143
        %2570 = vmatpush1.bf16.msra.mxu0 %v2142
        %2571 = vmatprep.subr.bf16.mxu0 %v2151
        %2572 = vmatpush1.bf16.msra.mxu0 %v2150
        %2573 = vmatprep.mubr.bf16.mxu0 %v833
        %2574 = vmatmul.mubr.bf16.gmra.mrb[0].mxu0 %v832
        %v2575 = vpop.f32.mrb[0].mxu0
        %v2576 = vadd.f32 %v2533, %v2575
        %v2577 = vpop.f32.mrb[0].mxu0
        %v2578 = vadd.f32 %v2535, %v2577
        %v2579 = vpop.f32.mrb[0].mxu0
        %v2580 = vadd.f32 %v2537, %v2579
        %v2581 = vpop.f32.mrb[0].mxu0
        %v2582 = vadd.f32 %v2539, %v2581
        %2583 = vdwg.mxu0
        %2584 = vmatprep.subr.bf16.mxu0 %v1905
        %2585 = vmatpush1.bf16.msra.mxu0 %v1904
        %2586 = vmatprep.subr.bf16.mxu0 %v1913
        %2587 = vmatpush1.bf16.msra.mxu0 %v1912
        %2588 = vmatprep.subr.bf16.mxu0 %v1921
        %2589 = vmatpush1.bf16.msra.mxu0 %v1920
        %2590 = vmatprep.subr.bf16.mxu0 %v1929
        %2591 = vmatpush1.bf16.msra.mxu0 %v1928
        %2592 = vmatprep.subr.bf16.mxu0 %v1937
        %2593 = vmatpush1.bf16.msra.mxu0 %v1936
        %2594 = vmatprep.subr.bf16.mxu0 %v1945
        %2595 = vmatpush1.bf16.msra.mxu0 %v1944
        %2596 = vmatprep.subr.bf16.mxu0 %v1953
        %2597 = vmatpush1.bf16.msra.mxu0 %v1952
        %2598 = vmatprep.subr.bf16.mxu0 %v1961
        %2599 = vmatpush1.bf16.msra.mxu0 %v1960
        %2600 = vmatprep.subr.bf16.mxu0 %v1969
        %2601 = vmatpush1.bf16.msra.mxu0 %v1968
        %2602 = vmatprep.subr.bf16.mxu0 %v1977
        %2603 = vmatpush1.bf16.msra.mxu0 %v1976
        %2604 = vmatprep.subr.bf16.mxu0 %v1985
        %2605 = vmatpush1.bf16.msra.mxu0 %v1984
        %2606 = vmatprep.subr.bf16.mxu0 %v1993
        %2607 = vmatpush1.bf16.msra.mxu0 %v1992
        %2608 = vmatprep.subr.bf16.mxu0 %v2001
        %2609 = vmatpush1.bf16.msra.mxu0 %v2000
        %2610 = vmatprep.subr.bf16.mxu0 %v2009
        %2611 = vmatpush1.bf16.msra.mxu0 %v2008
        %2612 = vmatprep.subr.bf16.mxu0 %v2017
        %2613 = vmatpush1.bf16.msra.mxu0 %v2016
        %2614 = vmatprep.subr.bf16.mxu0 %v2025
        %2615 = vmatpush1.bf16.msra.mxu0 %v2024
        %2616 = vmatprep.mubr.bf16.mxu0 %v831
        %2617 = vmatmul.mubr.bf16.gmra.mrb[0].mxu0 %v830
        %v2618 = vpop.f32.mrb[0].mxu0
        %v2619 = vadd.f32 %v1111, %v2618
        %v2620 = vpop.f32.mrb[0].mxu0
        %v2621 = vadd.f32 %v1115, %v2620
        %v2622 = vpop.f32.mrb[0].mxu0
        %v2623 = vadd.f32 %v1111, %v2622
        %v2624 = vpop.f32.mrb[0].mxu0
        %v2625 = vadd.f32 %v1115, %v2624
        %2626 = vdwg.mxu0
        %2627 = vmatprep.subr.bf16.mxu0 %v2033
        %2628 = vmatpush1.bf16.msra.mxu0 %v2032
        %2629 = vmatprep.subr.bf16.mxu0 %v2041
        %2630 = vmatpush1.bf16.msra.mxu0 %v2040
        %2631 = vmatprep.subr.bf16.mxu0 %v2049
        %2632 = vmatpush1.bf16.msra.mxu0 %v2048
        %2633 = vmatprep.subr.bf16.mxu0 %v2057
        %2634 = vmatpush1.bf16.msra.mxu0 %v2056
        %2635 = vmatprep.subr.bf16.mxu0 %v2065
        %2636 = vmatpush1.bf16.msra.mxu0 %v2064
        %2637 = vmatprep.subr.bf16.mxu0 %v2073
        %2638 = vmatpush1.bf16.msra.mxu0 %v2072
        %2639 = vmatprep.subr.bf16.mxu0 %v2081
        %2640 = vmatpush1.bf16.msra.mxu0 %v2080
        %2641 = vmatprep.subr.bf16.mxu0 %v2089
        %2642 = vmatpush1.bf16.msra.mxu0 %v2088
        %2643 = vmatprep.subr.bf16.mxu0 %v2097
        %2644 = vmatpush1.bf16.msra.mxu0 %v2096
        %2645 = vmatprep.subr.bf16.mxu0 %v2105
        %2646 = vmatpush1.bf16.msra.mxu0 %v2104
        %2647 = vmatprep.subr.bf16.mxu0 %v2113
        %2648 = vmatpush1.bf16.msra.mxu0 %v2112
        %2649 = vmatprep.subr.bf16.mxu0 %v2121
        %2650 = vmatpush1.bf16.msra.mxu0 %v2120
        %2651 = vmatprep.subr.bf16.mxu0 %v2129
        %2652 = vmatpush1.bf16.msra.mxu0 %v2128
        %2653 = vmatprep.subr.bf16.mxu0 %v2137
        %2654 = vmatpush1.bf16.msra.mxu0 %v2136
        %2655 = vmatprep.subr.bf16.mxu0 %v2145
        %2656 = vmatpush1.bf16.msra.mxu0 %v2144
        %2657 = vmatprep.subr.bf16.mxu0 %v2153
        %2658 = vmatpush1.bf16.msra.mxu0 %v2152
        %2659 = vmatprep.mubr.bf16.mxu0 %v833
        %2660 = vmatmul.mubr.bf16.gmra.mrb[0].mxu0 %v832
        %v2661 = vpop.f32.mrb[0].mxu0
        %v2662 = vadd.f32 %v2619, %v2661
        %v2663 = vpop.f32.mrb[0].mxu0
        %v2664 = vadd.f32 %v2621, %v2663
        %v2665 = vpop.f32.mrb[0].mxu0
        %v2666 = vadd.f32 %v2623, %v2665
        %v2667 = vpop.f32.mrb[0].mxu0
        %v2668 = vadd.f32 %v2625, %v2667
        %2669 = vdwg.mxu0
        %2670 = vmatprep.subr.bf16.mxu0 %v1907
        %2671 = vmatpush1.bf16.msra.mxu0 %v1906
        %2672 = vmatprep.subr.bf16.mxu0 %v1915
        %2673 = vmatpush1.bf16.msra.mxu0 %v1914
        %2674 = vmatprep.subr.bf16.mxu0 %v1923
        %2675 = vmatpush1.bf16.msra.mxu0 %v1922
        %2676 = vmatprep.subr.bf16.mxu0 %v1931
        %2677 = vmatpush1.bf16.msra.mxu0 %v1930
        %2678 = vmatprep.subr.bf16.mxu0 %v1939
        %2679 = vmatpush1.bf16.msra.mxu0 %v1938
        %2680 = vmatprep.subr.bf16.mxu0 %v1947
        %2681 = vmatpush1.bf16.msra.mxu0 %v1946
        %2682 = vmatprep.subr.bf16.mxu0 %v1955
        %2683 = vmatpush1.bf16.msra.mxu0 %v1954
        %2684 = vmatprep.subr.bf16.mxu0 %v1963
        %2685 = vmatpush1.bf16.msra.mxu0 %v1962
        %2686 = vmatprep.subr.bf16.mxu0 %v1971
        %2687 = vmatpush1.bf16.msra.mxu0 %v1970
        %2688 = vmatprep.subr.bf16.mxu0 %v1979
        %2689 = vmatpush1.bf16.msra.mxu0 %v1978
        %2690 = vmatprep.subr.bf16.mxu0 %v1987
        %2691 = vmatpush1.bf16.msra.mxu0 %v1986
        %2692 = vmatprep.subr.bf16.mxu0 %v1995
        %2693 = vmatpush1.bf16.msra.mxu0 %v1994
        %2694 = vmatprep.subr.bf16.mxu0 %v2003
        %2695 = vmatpush1.bf16.msra.mxu0 %v2002
        %2696 = vmatprep.subr.bf16.mxu0 %v2011
        %2697 = vmatpush1.bf16.msra.mxu0 %v2010
        %2698 = vmatprep.subr.bf16.mxu0 %v2019
        %2699 = vmatpush1.bf16.msra.mxu0 %v2018
        %2700 = vmatprep.subr.bf16.mxu0 %v2027
        %2701 = vmatpush1.bf16.msra.mxu0 %v2026
        %2702 = vmatprep.mubr.bf16.mxu0 %v831
        %2703 = vmatmul.mubr.bf16.gmra.mrb[0].mxu0 %v830
        %v2704 = vpop.f32.mrb[0].mxu0
        %v2705 = vadd.f32 %v1119, %v2704
        %v2706 = vpop.f32.mrb[0].mxu0
        %v2707 = vadd.f32 %v1123, %v2706
        %v2708 = vpop.f32.mrb[0].mxu0
        %v2709 = vadd.f32 %v1119, %v2708
        %v2710 = vpop.f32.mrb[0].mxu0
        %v2711 = vadd.f32 %v1123, %v2710
        %2712 = vdwg.mxu0
        %2713 = vmatprep.subr.bf16.mxu0 %v2035
        %2714 = vmatpush1.bf16.msra.mxu0 %v2034
        %2715 = vmatprep.subr.bf16.mxu0 %v2043
        %2716 = vmatpush1.bf16.msra.mxu0 %v2042
        %2717 = vmatprep.subr.bf16.mxu0 %v2051
        %2718 = vmatpush1.bf16.msra.mxu0 %v2050
        %2719 = vmatprep.subr.bf16.mxu0 %v2059
        %2720 = vmatpush1.bf16.msra.mxu0 %v2058
        %2721 = vmatprep.subr.bf16.mxu0 %v2067
        %2722 = vmatpush1.bf16.msra.mxu0 %v2066
        %2723 = vmatprep.subr.bf16.mxu0 %v2075
        %2724 = vmatpush1.bf16.msra.mxu0 %v2074
        %2725 = vmatprep.subr.bf16.mxu0 %v2083
        %2726 = vmatpush1.bf16.msra.mxu0 %v2082
        %2727 = vmatprep.subr.bf16.mxu0 %v2091
        %2728 = vmatpush1.bf16.msra.mxu0 %v2090
        %2729 = vmatprep.subr.bf16.mxu0 %v2099
        %2730 = vmatpush1.bf16.msra.mxu0 %v2098
        %2731 = vmatprep.subr.bf16.mxu0 %v2107
        %2732 = vmatpush1.bf16.msra.mxu0 %v2106
        %2733 = vmatprep.subr.bf16.mxu0 %v2115
        %2734 = vmatpush1.bf16.msra.mxu0 %v2114
        %2735 = vmatprep.subr.bf16.mxu0 %v2123
        %2736 = vmatpush1.bf16.msra.mxu0 %v2122
        %2737 = vmatprep.subr.bf16.mxu0 %v2131
        %2738 = vmatpush1.bf16.msra.mxu0 %v2130
        %2739 = vmatprep.subr.bf16.mxu0 %v2139
        %2740 = vmatpush1.bf16.msra.mxu0 %v2138
        %2741 = vmatprep.subr.bf16.mxu0 %v2147
        %2742 = vmatpush1.bf16.msra.mxu0 %v2146
        %2743 = vmatprep.subr.bf16.mxu0 %v2155
        %2744 = vmatpush1.bf16.msra.mxu0 %v2154
        %2745 = vmatprep.mubr.bf16.mxu0 %v833
        %2746 = vmatmul.mubr.bf16.gmra.mrb[0].mxu0 %v832
        %v2747 = vpop.f32.mrb[0].mxu0
        %v2748 = vadd.f32 %v2705, %v2747
        %v2749 = vpop.f32.mrb[0].mxu0
        %v2750 = vadd.f32 %v2707, %v2749
        %v2751 = vpop.f32.mrb[0].mxu0
        %v2752 = vadd.f32 %v2709, %v2751
        %v2753 = vpop.f32.mrb[0].mxu0
        %v2754 = vadd.f32 %v2711, %v2753
        %2755 = vdwg.mxu0
        %v2756 = vmax.f32 %v2490, 0.0
        %v2757 = vmax.f32 %v2492, 0.0
        %v2758 = vmax.f32 %v2576, 0.0
        %v2759 = vmax.f32 %v2578, 0.0
        %v2760 = vmax.f32 %v2662, 0.0
        %v2761 = vmax.f32 %v2664, 0.0
        %v2762 = vmax.f32 %v2748, 0.0
        %v2763 = vmax.f32 %v2750, 0.0
        %v2764 = vmax.f32 %v2494, 0.0
        %v2765 = vmax.f32 %v2496, 0.0
        %v2766 = vmax.f32 %v2580, 0.0
        %v2767 = vmax.f32 %v2582, 0.0
        %v2768 = vmax.f32 %v2666, 0.0
        %v2769 = vmax.f32 %v2668, 0.0
        %v2770 = vmax.f32 %v2752, 0.0
        %v2771 = vmax.f32 %v2754, 0.0
        %v2772 = vpack.c.bf16 %v2764, %v2756
        %v2773 = vpack.c.bf16 %v2765, %v2757
        %v2774 = vpack.c.bf16 %v2766, %v2758
        %v2775 = vpack.c.bf16 %v2767, %v2759
        %v2776 = vpack.c.bf16 %v2768, %v2760
        %v2777 = vpack.c.bf16 %v2769, %v2761
        %v2778 = vpack.c.bf16 %v2770, %v2762
        %v2779 = vpack.c.bf16 %v2771, %v2763
        %v2780 = vld [vmem:[#allocation7] sm:$0xf]
        %v2781 = vld [vmem:[#allocation7 + $0x4] sm:$0xf]
        %v2782 = vld [vmem:[#allocation7 + $0x8] sm:$0xf]
        %v2783 = vld [vmem:[#allocation7 + $0xc] sm:$0xf]
        %v2784 = vld [vmem:[#allocation7 + $0x10] sm:$0xf]
        %v2785 = vld [vmem:[#allocation7 + $0x14] sm:$0xf]
        %v2786 = vld [vmem:[#allocation7 + $0x18] sm:$0xf]
        %v2787 = vld [vmem:[#allocation7 + $0x1c] sm:$0xf]
        %v2788 = vld [vmem:[#allocation7 + $0x20] sm:$0xf]
        %v2789 = vld [vmem:[#allocation7 + $0x24] sm:$0xf]
        %v2790 = vld [vmem:[#allocation7 + $0x28] sm:$0xf]
        %v2791 = vld [vmem:[#allocation7 + $0x2c] sm:$0xf]
        %v2792 = vld [vmem:[#allocation7 + $0x30] sm:$0xf]
        %v2793 = vld [vmem:[#allocation7 + $0x34] sm:$0xf]
        %v2794 = vld [vmem:[#allocation7 + $0x38] sm:$0xf]
        %v2795 = vld [vmem:[#allocation7 + $0x3c] sm:$0xf]
        %v2796 = vld [vmem:[#allocation7 + $0x40] sm:$0xf]
        %v2797 = vld [vmem:[#allocation7 + $0x44] sm:$0xf]
        %v2798 = vld [vmem:[#allocation7 + $0x48] sm:$0xf]
        %v2799 = vld [vmem:[#allocation7 + $0x4c] sm:$0xf]
        %v2800 = vld [vmem:[#allocation7 + $0x50] sm:$0xf]
        %v2801 = vld [vmem:[#allocation7 + $0x54] sm:$0xf]
        %v2802 = vld [vmem:[#allocation7 + $0x58] sm:$0xf]
        %v2803 = vld [vmem:[#allocation7 + $0x5c] sm:$0xf]
        %v2804 = vld [vmem:[#allocation7 + $0x60] sm:$0xf]
        %v2805 = vld [vmem:[#allocation7 + $0x64] sm:$0xf]
        %v2806 = vld [vmem:[#allocation7 + $0x68] sm:$0xf]
        %v2807 = vld [vmem:[#allocation7 + $0x6c] sm:$0xf]
        %v2808 = vld [vmem:[#allocation7 + $0x70] sm:$0xf]
        %v2809 = vld [vmem:[#allocation7 + $0x74] sm:$0xf]
        %v2810 = vld [vmem:[#allocation7 + $0x78] sm:$0xf]
        %v2811 = vld [vmem:[#allocation7 + $0x7c] sm:$0xf]
        %v2812 = vld [vmem:[#allocation7 + $0x80] sm:$0xf]
        %v2813 = vld [vmem:[#allocation7 + $0x84] sm:$0xf]
        %v2814 = vld [vmem:[#allocation7 + $0x88] sm:$0xf]
        %v2815 = vld [vmem:[#allocation7 + $0x8c] sm:$0xf]
        %v2816 = vld [vmem:[#allocation7 + $0x90] sm:$0xf]
        %v2817 = vld [vmem:[#allocation7 + $0x94] sm:$0xf]
        %v2818 = vld [vmem:[#allocation7 + $0x98] sm:$0xf]
        %v2819 = vld [vmem:[#allocation7 + $0x9c] sm:$0xf]
        %v2820 = vld [vmem:[#allocation7 + $0xa0] sm:$0xf]
        %v2821 = vld [vmem:[#allocation7 + $0xa4] sm:$0xf]
        %v2822 = vld [vmem:[#allocation7 + $0xa8] sm:$0xf]
        %v2823 = vld [vmem:[#allocation7 + $0xac] sm:$0xf]
        %v2824 = vld [vmem:[#allocation7 + $0xb0] sm:$0xf]
        %v2825 = vld [vmem:[#allocation7 + $0xb4] sm:$0xf]
        %v2826 = vld [vmem:[#allocation7 + $0xb8] sm:$0xf]
        %v2827 = vld [vmem:[#allocation7 + $0xbc] sm:$0xf]
        %v2828 = vld [vmem:[#allocation7 + $0xc0] sm:$0xf]
        %v2829 = vld [vmem:[#allocation7 + $0xc4] sm:$0xf]
        %v2830 = vld [vmem:[#allocation7 + $0xc8] sm:$0xf]
        %v2831 = vld [vmem:[#allocation7 + $0xcc] sm:$0xf]
        %v2832 = vld [vmem:[#allocation7 + $0xd0] sm:$0xf]
        %v2833 = vld [vmem:[#allocation7 + $0xd4] sm:$0xf]
        %v2834 = vld [vmem:[#allocation7 + $0xd8] sm:$0xf]
        %v2835 = vld [vmem:[#allocation7 + $0xdc] sm:$0xf]
        %v2836 = vld [vmem:[#allocation7 + $0xe0] sm:$0xf]
        %v2837 = vld [vmem:[#allocation7 + $0xe4] sm:$0xf]
        %v2838 = vld [vmem:[#allocation7 + $0xe8] sm:$0xf]
        %v2839 = vld [vmem:[#allocation7 + $0xec] sm:$0xf]
        %v2840 = vld [vmem:[#allocation7 + $0xf0] sm:$0xf]
        %v2841 = vld [vmem:[#allocation7 + $0xf4] sm:$0xf]
        %v2842 = vld [vmem:[#allocation7 + $0xf8] sm:$0xf]
        %v2843 = vld [vmem:[#allocation7 + $0xfc] sm:$0xf]
        %v2844 = vld [vmem:[#allocation7 + $0x100] sm:$0xf]
        %v2845 = vld [vmem:[#allocation7 + $0x104] sm:$0xf]
        %v2846 = vld [vmem:[#allocation7 + $0x108] sm:$0xf]
        %v2847 = vld [vmem:[#allocation7 + $0x10c] sm:$0xf]
        %v2848 = vld [vmem:[#allocation7 + $0x110] sm:$0xf]
        %v2849 = vld [vmem:[#allocation7 + $0x114] sm:$0xf]
        %v2850 = vld [vmem:[#allocation7 + $0x118] sm:$0xf]
        %v2851 = vld [vmem:[#allocation7 + $0x11c] sm:$0xf]
        %v2852 = vld [vmem:[#allocation7 + $0x120] sm:$0xf]
        %v2853 = vld [vmem:[#allocation7 + $0x124] sm:$0xf]
        %v2854 = vld [vmem:[#allocation7 + $0x128] sm:$0xf]
        %v2855 = vld [vmem:[#allocation7 + $0x12c] sm:$0xf]
        %v2856 = vld [vmem:[#allocation7 + $0x130] sm:$0xf]
        %v2857 = vld [vmem:[#allocation7 + $0x134] sm:$0xf]
        %v2858 = vld [vmem:[#allocation7 + $0x138] sm:$0xf]
        %v2859 = vld [vmem:[#allocation7 + $0x13c] sm:$0xf]
        %v2860 = vld [vmem:[#allocation7 + $0x140] sm:$0xf]
        %v2861 = vld [vmem:[#allocation7 + $0x144] sm:$0xf]
        %v2862 = vld [vmem:[#allocation7 + $0x148] sm:$0xf]
        %v2863 = vld [vmem:[#allocation7 + $0x14c] sm:$0xf]
        %v2864 = vld [vmem:[#allocation7 + $0x150] sm:$0xf]
        %v2865 = vld [vmem:[#allocation7 + $0x154] sm:$0xf]
        %v2866 = vld [vmem:[#allocation7 + $0x158] sm:$0xf]
        %v2867 = vld [vmem:[#allocation7 + $0x15c] sm:$0xf]
        %v2868 = vld [vmem:[#allocation7 + $0x160] sm:$0xf]
        %v2869 = vld [vmem:[#allocation7 + $0x164] sm:$0xf]
        %v2870 = vld [vmem:[#allocation7 + $0x168] sm:$0xf]
        %v2871 = vld [vmem:[#allocation7 + $0x16c] sm:$0xf]
        %v2872 = vld [vmem:[#allocation7 + $0x170] sm:$0xf]
        %v2873 = vld [vmem:[#allocation7 + $0x174] sm:$0xf]
        %v2874 = vld [vmem:[#allocation7 + $0x178] sm:$0xf]
        %v2875 = vld [vmem:[#allocation7 + $0x17c] sm:$0xf]
        %v2876 = vld [vmem:[#allocation7 + $0x180] sm:$0xf]
        %v2877 = vld [vmem:[#allocation7 + $0x184] sm:$0xf]
        %v2878 = vld [vmem:[#allocation7 + $0x188] sm:$0xf]
        %v2879 = vld [vmem:[#allocation7 + $0x18c] sm:$0xf]
        %v2880 = vld [vmem:[#allocation7 + $0x190] sm:$0xf]
        %v2881 = vld [vmem:[#allocation7 + $0x194] sm:$0xf]
        %v2882 = vld [vmem:[#allocation7 + $0x198] sm:$0xf]
        %v2883 = vld [vmem:[#allocation7 + $0x19c] sm:$0xf]
        %v2884 = vld [vmem:[#allocation7 + $0x1a0] sm:$0xf]
        %v2885 = vld [vmem:[#allocation7 + $0x1a4] sm:$0xf]
        %v2886 = vld [vmem:[#allocation7 + $0x1a8] sm:$0xf]
        %v2887 = vld [vmem:[#allocation7 + $0x1ac] sm:$0xf]
        %v2888 = vld [vmem:[#allocation7 + $0x1b0] sm:$0xf]
        %v2889 = vld [vmem:[#allocation7 + $0x1b4] sm:$0xf]
        %v2890 = vld [vmem:[#allocation7 + $0x1b8] sm:$0xf]
        %v2891 = vld [vmem:[#allocation7 + $0x1bc] sm:$0xf]
        %v2892 = vld [vmem:[#allocation7 + $0x1c0] sm:$0xf]
        %v2893 = vld [vmem:[#allocation7 + $0x1c4] sm:$0xf]
        %v2894 = vld [vmem:[#allocation7 + $0x1c8] sm:$0xf]
        %v2895 = vld [vmem:[#allocation7 + $0x1cc] sm:$0xf]
        %v2896 = vld [vmem:[#allocation7 + $0x1d0] sm:$0xf]
        %v2897 = vld [vmem:[#allocation7 + $0x1d4] sm:$0xf]
        %v2898 = vld [vmem:[#allocation7 + $0x1d8] sm:$0xf]
        %v2899 = vld [vmem:[#allocation7 + $0x1dc] sm:$0xf]
        %v2900 = vld [vmem:[#allocation7 + $0x1e0] sm:$0xf]
        %v2901 = vld [vmem:[#allocation7 + $0x1e4] sm:$0xf]
        %v2902 = vld [vmem:[#allocation7 + $0x1e8] sm:$0xf]
        %v2903 = vld [vmem:[#allocation7 + $0x1ec] sm:$0xf]
        %v2904 = vld [vmem:[#allocation7 + $0x1f0] sm:$0xf]
        %v2905 = vld [vmem:[#allocation7 + $0x1f4] sm:$0xf]
        %v2906 = vld [vmem:[#allocation7 + $0x1f8] sm:$0xf]
        %v2907 = vld [vmem:[#allocation7 + $0x1fc] sm:$0xf]
        %v2908 = vld [vmem:[%s8] sm:$0x1]
        %v2910 = vlaneseq
        %v2911 = vshrl.u32 %v2910, 7
        %v2912 = vsub.s32 0, %v2911
        %v2913 = vrot.slane %v2908, %v2912
        %v3043 = vunpack.c.l.b16 %v2780
        %v3044 = vunpack.c.l.b16 %v2781
        %v3045 = vunpack.c.l.b16 %v2782
        %v3046 = vunpack.c.l.b16 %v2783
        %v3047 = vunpack.c.l.b16 %v2784
        %v3048 = vunpack.c.l.b16 %v2785
        %v3049 = vunpack.c.l.b16 %v2786
        %v3050 = vunpack.c.l.b16 %v2787
        %v3051 = vunpack.c.l.b16 %v2788
        %v3052 = vunpack.c.l.b16 %v2789
        %v3053 = vunpack.c.l.b16 %v2790
        %v3054 = vunpack.c.l.b16 %v2791
        %v3055 = vunpack.c.l.b16 %v2792
        %v3056 = vunpack.c.l.b16 %v2793
        %v3057 = vunpack.c.l.b16 %v2794
        %v3058 = vunpack.c.l.b16 %v2795
        %v3059 = vunpack.c.l.b16 %v2796
        %v3060 = vunpack.c.l.b16 %v2797
        %v3061 = vunpack.c.l.b16 %v2798
        %v3062 = vunpack.c.l.b16 %v2799
        %v3063 = vunpack.c.l.b16 %v2800
        %v3064 = vunpack.c.l.b16 %v2801
        %v3065 = vunpack.c.l.b16 %v2802
        %v3066 = vunpack.c.l.b16 %v2803
        %v3067 = vunpack.c.l.b16 %v2804
        %v3068 = vunpack.c.l.b16 %v2805
        %v3069 = vunpack.c.l.b16 %v2806
        %v3070 = vunpack.c.l.b16 %v2807
        %v3071 = vunpack.c.l.b16 %v2808
        %v3072 = vunpack.c.l.b16 %v2809
        %v3073 = vunpack.c.l.b16 %v2810
        %v3074 = vunpack.c.l.b16 %v2811
        %v3075 = vunpack.c.l.b16 %v2812
        %v3076 = vunpack.c.l.b16 %v2813
        %v3077 = vunpack.c.l.b16 %v2814
        %v3078 = vunpack.c.l.b16 %v2815
        %v3079 = vunpack.c.l.b16 %v2816
        %v3080 = vunpack.c.l.b16 %v2817
        %v3081 = vunpack.c.l.b16 %v2818
        %v3082 = vunpack.c.l.b16 %v2819
        %v3083 = vunpack.c.l.b16 %v2820
        %v3084 = vunpack.c.l.b16 %v2821
        %v3085 = vunpack.c.l.b16 %v2822
        %v3086 = vunpack.c.l.b16 %v2823
        %v3087 = vunpack.c.l.b16 %v2824
        %v3088 = vunpack.c.l.b16 %v2825
        %v3089 = vunpack.c.l.b16 %v2826
        %v3090 = vunpack.c.l.b16 %v2827
        %v3091 = vunpack.c.l.b16 %v2828
        %v3092 = vunpack.c.l.b16 %v2829
        %v3093 = vunpack.c.l.b16 %v2830
        %v3094 = vunpack.c.l.b16 %v2831
        %v3095 = vunpack.c.l.b16 %v2832
        %v3096 = vunpack.c.l.b16 %v2833
        %v3097 = vunpack.c.l.b16 %v2834
        %v3098 = vunpack.c.l.b16 %v2835
        %v3099 = vunpack.c.l.b16 %v2836
        %v3100 = vunpack.c.l.b16 %v2837
        %v3101 = vunpack.c.l.b16 %v2838
        %v3102 = vunpack.c.l.b16 %v2839
        %v3103 = vunpack.c.l.b16 %v2840
        %v3104 = vunpack.c.l.b16 %v2841
        %v3105 = vunpack.c.l.b16 %v2842
        %v3106 = vunpack.c.l.b16 %v2843
        %v3107 = vunpack.c.l.b16 %v2844
        %v3108 = vunpack.c.l.b16 %v2845
        %v3109 = vunpack.c.l.b16 %v2846
        %v3110 = vunpack.c.l.b16 %v2847
        %v3111 = vunpack.c.l.b16 %v2848
        %v3112 = vunpack.c.l.b16 %v2849
        %v3113 = vunpack.c.l.b16 %v2850
        %v3114 = vunpack.c.l.b16 %v2851
        %v3115 = vunpack.c.l.b16 %v2852
        %v3116 = vunpack.c.l.b16 %v2853
        %v3117 = vunpack.c.l.b16 %v2854
        %v3118 = vunpack.c.l.b16 %v2855
        %v3119 = vunpack.c.l.b16 %v2856
        %v3120 = vunpack.c.l.b16 %v2857
        %v3121 = vunpack.c.l.b16 %v2858
        %v3122 = vunpack.c.l.b16 %v2859
        %v3123 = vunpack.c.l.b16 %v2860
        %v3124 = vunpack.c.l.b16 %v2861
        %v3125 = vunpack.c.l.b16 %v2862
        %v3126 = vunpack.c.l.b16 %v2863
        %v3127 = vunpack.c.l.b16 %v2864
        %v3128 = vunpack.c.l.b16 %v2865
        %v3129 = vunpack.c.l.b16 %v2866
        %v3130 = vunpack.c.l.b16 %v2867
        %v3131 = vunpack.c.l.b16 %v2868
        %v3132 = vunpack.c.l.b16 %v2869
        %v3133 = vunpack.c.l.b16 %v2870
        %v3134 = vunpack.c.l.b16 %v2871
        %v3135 = vunpack.c.l.b16 %v2872
        %v3136 = vunpack.c.l.b16 %v2873
        %v3137 = vunpack.c.l.b16 %v2874
        %v3138 = vunpack.c.l.b16 %v2875
        %v3139 = vunpack.c.l.b16 %v2876
        %v3140 = vunpack.c.l.b16 %v2877
        %v3141 = vunpack.c.l.b16 %v2878
        %v3142 = vunpack.c.l.b16 %v2879
        %v3143 = vunpack.c.l.b16 %v2880
        %v3144 = vunpack.c.l.b16 %v2881
        %v3145 = vunpack.c.l.b16 %v2882
        %v3146 = vunpack.c.l.b16 %v2883
        %v3147 = vunpack.c.l.b16 %v2884
        %v3148 = vunpack.c.l.b16 %v2885
        %v3149 = vunpack.c.l.b16 %v2886
        %v3150 = vunpack.c.l.b16 %v2887
        %v3151 = vunpack.c.l.b16 %v2888
        %v3152 = vunpack.c.l.b16 %v2889
        %v3153 = vunpack.c.l.b16 %v2890
        %v3154 = vunpack.c.l.b16 %v2891
        %v3155 = vunpack.c.l.b16 %v2892
        %v3156 = vunpack.c.l.b16 %v2893
        %v3157 = vunpack.c.l.b16 %v2894
        %v3158 = vunpack.c.l.b16 %v2895
        %v3159 = vunpack.c.l.b16 %v2896
        %v3160 = vunpack.c.l.b16 %v2897
        %v3161 = vunpack.c.l.b16 %v2898
        %v3162 = vunpack.c.l.b16 %v2899
        %v3163 = vunpack.c.l.b16 %v2900
        %v3164 = vunpack.c.l.b16 %v2901
        %v3165 = vunpack.c.l.b16 %v2902
        %v3166 = vunpack.c.l.b16 %v2903
        %v3167 = vunpack.c.l.b16 %v2904
        %v3168 = vunpack.c.l.b16 %v2905
        %v3169 = vunpack.c.l.b16 %v2906
        %v3170 = vunpack.c.l.b16 %v2907
        %v3171 = vpack.c.b16 %v3044, %v3043
        %v3172 = vpack.c.b16 %v3046, %v3045
        %v3173 = vpack.c.b16 %v3048, %v3047
        %v3174 = vpack.c.b16 %v3050, %v3049
        %v3175 = vpack.c.b16 %v3052, %v3051
        %v3176 = vpack.c.b16 %v3054, %v3053
        %v3177 = vpack.c.b16 %v3056, %v3055
        %v3178 = vpack.c.b16 %v3058, %v3057
        %v3179 = vpack.c.b16 %v3060, %v3059
        %v3180 = vpack.c.b16 %v3062, %v3061
        %v3181 = vpack.c.b16 %v3064, %v3063
        %v3182 = vpack.c.b16 %v3066, %v3065
        %v3183 = vpack.c.b16 %v3068, %v3067
        %v3184 = vpack.c.b16 %v3070, %v3069
        %v3185 = vpack.c.b16 %v3072, %v3071
        %v3186 = vpack.c.b16 %v3074, %v3073
        %v3187 = vpack.c.b16 %v3076, %v3075
        %v3188 = vpack.c.b16 %v3078, %v3077
        %v3189 = vpack.c.b16 %v3080, %v3079
        %v3190 = vpack.c.b16 %v3082, %v3081
        %v3191 = vpack.c.b16 %v3084, %v3083
        %v3192 = vpack.c.b16 %v3086, %v3085
        %v3193 = vpack.c.b16 %v3088, %v3087
        %v3194 = vpack.c.b16 %v3090, %v3089
        %v3195 = vpack.c.b16 %v3092, %v3091
        %v3196 = vpack.c.b16 %v3094, %v3093
        %v3197 = vpack.c.b16 %v3096, %v3095
        %v3198 = vpack.c.b16 %v3098, %v3097
        %v3199 = vpack.c.b16 %v3100, %v3099
        %v3200 = vpack.c.b16 %v3102, %v3101
        %v3201 = vpack.c.b16 %v3104, %v3103
        %v3202 = vpack.c.b16 %v3106, %v3105
        %v3203 = vpack.c.b16 %v3108, %v3107
        %v3204 = vpack.c.b16 %v3110, %v3109
        %v3205 = vpack.c.b16 %v3112, %v3111
        %v3206 = vpack.c.b16 %v3114, %v3113
        %v3207 = vpack.c.b16 %v3116, %v3115
        %v3208 = vpack.c.b16 %v3118, %v3117
        %v3209 = vpack.c.b16 %v3120, %v3119
        %v3210 = vpack.c.b16 %v3122, %v3121
        %v3211 = vpack.c.b16 %v3124, %v3123
        %v3212 = vpack.c.b16 %v3126, %v3125
        %v3213 = vpack.c.b16 %v3128, %v3127
        %v3214 = vpack.c.b16 %v3130, %v3129
        %v3215 = vpack.c.b16 %v3132, %v3131
        %v3216 = vpack.c.b16 %v3134, %v3133
        %v3217 = vpack.c.b16 %v3136, %v3135
        %v3218 = vpack.c.b16 %v3138, %v3137
        %v3219 = vpack.c.b16 %v3140, %v3139
        %v3220 = vpack.c.b16 %v3142, %v3141
        %v3221 = vpack.c.b16 %v3144, %v3143
        %v3222 = vpack.c.b16 %v3146, %v3145
        %v3223 = vpack.c.b16 %v3148, %v3147
        %v3224 = vpack.c.b16 %v3150, %v3149
        %v3225 = vpack.c.b16 %v3152, %v3151
        %v3226 = vpack.c.b16 %v3154, %v3153
        %v3227 = vpack.c.b16 %v3156, %v3155
        %v3228 = vpack.c.b16 %v3158, %v3157
        %v3229 = vpack.c.b16 %v3160, %v3159
        %v3230 = vpack.c.b16 %v3162, %v3161
        %v3231 = vpack.c.b16 %v3164, %v3163
        %v3232 = vpack.c.b16 %v3166, %v3165
        %v3233 = vpack.c.b16 %v3168, %v3167
        %v3234 = vpack.c.b16 %v3170, %v3169
        %3299 = vmatprep.subr.bf16.mxu0 0
        %3300 = vmatpush1.bf16.msra.mxu0 %v3171
        %3301 = vmatprep.subr.bf16.mxu0 0
        %3302 = vmatpush1.bf16.msra.mxu0 %v3172
        %3303 = vmatprep.subr.bf16.mxu0 0
        %3304 = vmatpush1.bf16.msra.mxu0 %v3173
        %3305 = vmatprep.subr.bf16.mxu0 0
        %3306 = vmatpush1.bf16.msra.mxu0 %v3174
        %3307 = vmatprep.subr.bf16.mxu0 0
        %3308 = vmatpush1.bf16.msra.mxu0 %v3175
        %3309 = vmatprep.subr.bf16.mxu0 0
        %3310 = vmatpush1.bf16.msra.mxu0 %v3176
        %3311 = vmatprep.subr.bf16.mxu0 0
        %3312 = vmatpush1.bf16.msra.mxu0 %v3177
        %3313 = vmatprep.subr.bf16.mxu0 0
        %3314 = vmatpush1.bf16.msra.mxu0 %v3178
        %3315 = vmatprep.subr.bf16.mxu0 0
        %3316 = vmatpush1.bf16.msra.mxu0 %v3179
        %3317 = vmatprep.subr.bf16.mxu0 0
        %3318 = vmatpush1.bf16.msra.mxu0 %v3180
        %3319 = vmatprep.subr.bf16.mxu0 0
        %3320 = vmatpush1.bf16.msra.mxu0 %v3181
        %3321 = vmatprep.subr.bf16.mxu0 0
        %3322 = vmatpush1.bf16.msra.mxu0 %v3182
        %3323 = vmatprep.subr.bf16.mxu0 0
        %3324 = vmatpush1.bf16.msra.mxu0 %v3183
        %3325 = vmatprep.subr.bf16.mxu0 0
        %3326 = vmatpush1.bf16.msra.mxu0 %v3184
        %3327 = vmatprep.subr.bf16.mxu0 0
        %3328 = vmatpush1.bf16.msra.mxu0 %v3185
        %3329 = vmatprep.subr.bf16.mxu0 0
        %3330 = vmatpush1.bf16.msra.mxu0 %v3186
        %3331 = vmatprep.mubr.bf16.mxu0 %v2773
        %3332 = vmatmul.mubr.bf16.gmra.mrb[0].mxu0 %v2772
        %v3333 = vpop.f32.mrb[0].mxu0
        %v3334 = vadd.f32 %v2913, %v3333
        %v3335 = vpop.f32.mrb[0].mxu0
        %v3336 = vpop.f32.mrb[0].mxu0
        %v3337 = vadd.f32 %v2913, %v3336
        %v3338 = vpop.f32.mrb[0].mxu0
        %3339 = vdwg.mxu0
        %3340 = vmatprep.subr.bf16.mxu0 0
        %3341 = vmatpush1.bf16.msra.mxu0 %v3187
        %3342 = vmatprep.subr.bf16.mxu0 0
        %3343 = vmatpush1.bf16.msra.mxu0 %v3188
        %3344 = vmatprep.subr.bf16.mxu0 0
        %3345 = vmatpush1.bf16.msra.mxu0 %v3189
        %3346 = vmatprep.subr.bf16.mxu0 0
        %3347 = vmatpush1.bf16.msra.mxu0 %v3190
        %3348 = vmatprep.subr.bf16.mxu0 0
        %3349 = vmatpush1.bf16.msra.mxu0 %v3191
        %3350 = vmatprep.subr.bf16.mxu0 0
        %3351 = vmatpush1.bf16.msra.mxu0 %v3192
        %3352 = vmatprep.subr.bf16.mxu0 0
        %3353 = vmatpush1.bf16.msra.mxu0 %v3193
        %3354 = vmatprep.subr.bf16.mxu0 0
        %3355 = vmatpush1.bf16.msra.mxu0 %v3194
        %3356 = vmatprep.subr.bf16.mxu0 0
        %3357 = vmatpush1.bf16.msra.mxu0 %v3195
        %3358 = vmatprep.subr.bf16.mxu0 0
        %3359 = vmatpush1.bf16.msra.mxu0 %v3196
        %3360 = vmatprep.subr.bf16.mxu0 0
        %3361 = vmatpush1.bf16.msra.mxu0 %v3197
        %3362 = vmatprep.subr.bf16.mxu0 0
        %3363 = vmatpush1.bf16.msra.mxu0 %v3198
        %3364 = vmatprep.subr.bf16.mxu0 0
        %3365 = vmatpush1.bf16.msra.mxu0 %v3199
        %3366 = vmatprep.subr.bf16.mxu0 0
        %3367 = vmatpush1.bf16.msra.mxu0 %v3200
        %3368 = vmatprep.subr.bf16.mxu0 0
        %3369 = vmatpush1.bf16.msra.mxu0 %v3201
        %3370 = vmatprep.subr.bf16.mxu0 0
        %3371 = vmatpush1.bf16.msra.mxu0 %v3202
        %3372 = vmatprep.mubr.bf16.mxu0 %v2775
        %3373 = vmatmul.mubr.bf16.gmra.mrb[0].mxu0 %v2774
        %v3374 = vpop.f32.mrb[0].mxu0
        %v3375 = vadd.f32 %v3334, %v3374
        %v3376 = vpop.f32.mrb[0].mxu0
        %v3377 = vpop.f32.mrb[0].mxu0
        %v3378 = vadd.f32 %v3337, %v3377
        %v3379 = vpop.f32.mrb[0].mxu0
        %3380 = vdwg.mxu0
        %3381 = vmatprep.subr.bf16.mxu0 0
        %3382 = vmatpush1.bf16.msra.mxu0 %v3203
        %3383 = vmatprep.subr.bf16.mxu0 0
        %3384 = vmatpush1.bf16.msra.mxu0 %v3204
        %3385 = vmatprep.subr.bf16.mxu0 0
        %3386 = vmatpush1.bf16.msra.mxu0 %v3205
        %3387 = vmatprep.subr.bf16.mxu0 0
        %3388 = vmatpush1.bf16.msra.mxu0 %v3206
        %3389 = vmatprep.subr.bf16.mxu0 0
        %3390 = vmatpush1.bf16.msra.mxu0 %v3207
        %3391 = vmatprep.subr.bf16.mxu0 0
        %3392 = vmatpush1.bf16.msra.mxu0 %v3208
        %3393 = vmatprep.subr.bf16.mxu0 0
        %3394 = vmatpush1.bf16.msra.mxu0 %v3209
        %3395 = vmatprep.subr.bf16.mxu0 0
        %3396 = vmatpush1.bf16.msra.mxu0 %v3210
        %3397 = vmatprep.subr.bf16.mxu0 0
        %3398 = vmatpush1.bf16.msra.mxu0 %v3211
        %3399 = vmatprep.subr.bf16.mxu0 0
        %3400 = vmatpush1.bf16.msra.mxu0 %v3212
        %3401 = vmatprep.subr.bf16.mxu0 0
        %3402 = vmatpush1.bf16.msra.mxu0 %v3213
        %3403 = vmatprep.subr.bf16.mxu0 0
        %3404 = vmatpush1.bf16.msra.mxu0 %v3214
        %3405 = vmatprep.subr.bf16.mxu0 0
        %3406 = vmatpush1.bf16.msra.mxu0 %v3215
        %3407 = vmatprep.subr.bf16.mxu0 0
        %3408 = vmatpush1.bf16.msra.mxu0 %v3216
        %3409 = vmatprep.subr.bf16.mxu0 0
        %3410 = vmatpush1.bf16.msra.mxu0 %v3217
        %3411 = vmatprep.subr.bf16.mxu0 0
        %3412 = vmatpush1.bf16.msra.mxu0 %v3218
        %3413 = vmatprep.mubr.bf16.mxu0 %v2777
        %3414 = vmatmul.mubr.bf16.gmra.mrb[0].mxu0 %v2776
        %v3415 = vpop.f32.mrb[0].mxu0
        %v3416 = vadd.f32 %v3375, %v3415
        %v3417 = vpop.f32.mrb[0].mxu0
        %v3418 = vpop.f32.mrb[0].mxu0
        %v3419 = vadd.f32 %v3378, %v3418
        %v3420 = vpop.f32.mrb[0].mxu0
        %3421 = vdwg.mxu0
        %3422 = vmatprep.subr.bf16.mxu0 0
        %3423 = vmatpush1.bf16.msra.mxu0 %v3219
        %3424 = vmatprep.subr.bf16.mxu0 0
        %3425 = vmatpush1.bf16.msra.mxu0 %v3220
        %3426 = vmatprep.subr.bf16.mxu0 0
        %3427 = vmatpush1.bf16.msra.mxu0 %v3221
        %3428 = vmatprep.subr.bf16.mxu0 0
        %3429 = vmatpush1.bf16.msra.mxu0 %v3222
        %3430 = vmatprep.subr.bf16.mxu0 0
        %3431 = vmatpush1.bf16.msra.mxu0 %v3223
        %3432 = vmatprep.subr.bf16.mxu0 0
        %3433 = vmatpush1.bf16.msra.mxu0 %v3224
        %3434 = vmatprep.subr.bf16.mxu0 0
        %3435 = vmatpush1.bf16.msra.mxu0 %v3225
        %3436 = vmatprep.subr.bf16.mxu0 0
        %3437 = vmatpush1.bf16.msra.mxu0 %v3226
        %3438 = vmatprep.subr.bf16.mxu0 0
        %3439 = vmatpush1.bf16.msra.mxu0 %v3227
        %3440 = vmatprep.subr.bf16.mxu0 0
        %3441 = vmatpush1.bf16.msra.mxu0 %v3228
        %3442 = vmatprep.subr.bf16.mxu0 0
        %3443 = vmatpush1.bf16.msra.mxu0 %v3229
        %3444 = vmatprep.subr.bf16.mxu0 0
        %3445 = vmatpush1.bf16.msra.mxu0 %v3230
        %3446 = vmatprep.subr.bf16.mxu0 0
        %3447 = vmatpush1.bf16.msra.mxu0 %v3231
        %3448 = vmatprep.subr.bf16.mxu0 0
        %3449 = vmatpush1.bf16.msra.mxu0 %v3232
        %3450 = vmatprep.subr.bf16.mxu0 0
        %3451 = vmatpush1.bf16.msra.mxu0 %v3233
        %3452 = vmatprep.subr.bf16.mxu0 0
        %3453 = vmatpush1.bf16.msra.mxu0 %v3234
        %3454 = vmatprep.mubr.bf16.mxu0 %v2779
        %3455 = vmatmul.mubr.bf16.gmra.mrb[0].mxu0 %v2778
        %v3456 = vpop.f32.mrb[0].mxu0
        %v3457 = vadd.f32 %v3416, %v3456
        %v3458 = vpop.f32.mrb[0].mxu0
        %v3459 = vpop.f32.mrb[0].mxu0
        %v3460 = vadd.f32 %v3419, %v3459
        %v3461 = vpop.f32.mrb[0].mxu0
        %3462 = vdwg.mxu0
        %3463 = vst [vmem:[%s370] sm:$0xff] %v3457
        %3464 = vst [vmem:[%s370 + $0x8] sm:$0xff] %v3460
        %s3465 = sand.u32 %s227, 1
        %s3466 = scalar_lea.sflag [#allocation4], %s3465
        %s3467 = sand.u32 %s227, 1
        %s3468 = smul.addr %s3467, 16
        %s3469 = scalar_lea.vmem [#allocation8], %s3468
        // Predicated region
        $region69: #{tpu_custom_call.1} parent=55 // pred_check
          %p3470 = pneg %p237
        $region70: #{tpu_custom_call.1} parent=55 // pred_check_branch
          %3472 = sbr.rel (%p3470) target = $region72
        $region71: #{tpu_custom_call.1} parent=55 // pred_region
          %s3473 = smul.u32 2, %s25
          %s3475 = ssub.s32 256, 256
          %3476 = vsyncadd %s3466, %s3475
          %s3477 = smul.addr %s3473, 128
          %s3478 = scalar_lea.hbm %s9, %s3477
          %s3479 = sshll.u32 %s3469, 4
          %s3480 = int_to_ptr.vmem [resolvable:$true] %s3479
          %3485 = dma.vmem_to_hbm [thread:$0]  %s3480, 256, %s3478, %s3466, 128, 128, 8
        $region72: #{tpu_custom_call.1} parent=55 // pred_fallthru
          _
      $region56: #{tpu_custom_call.1} parent=5 // pred_fallthru
        _
      %p3486 = scmp.le.s32.totalorder 2, %s20
      // Predicated region
      $region73: #{tpu_custom_call.1} parent=5 // pred_check
        %p3487 = pneg %p3486
      $region74: #{tpu_custom_call.1} parent=5 // pred_check_branch
        %3489 = sbr.rel (%p3487) target = $region76
      $region75: #{tpu_custom_call.1} parent=5 // pred_region
        %s3490 = ssub.s32 %s20, 2
        // Predicated region
        $region77: #{tpu_custom_call.1} parent=75 // pred_check
          %p3491 = pneg %p243
        $region78: #{tpu_custom_call.1} parent=75 // pred_check_branch
          %3493 = sbr.rel (%p3491) target = $region80
        $region79: #{tpu_custom_call.1} parent=75 // pred_region
          %s3494 = sand.u32 %s228, 1
          %s3495 = scalar_lea.sflag [#allocation4], %s3494
          %s3496 = sand.u32 %s228, 1
          %s3497 = smul.addr %s3496, 16
          %s3498 = scalar_lea.vmem [#allocation8], %s3497
          %3499 = dma.done %s3495, 256
        $region80: #{tpu_custom_call.1} parent=75 // pred_fallthru
          _
      $region76: #{tpu_custom_call.1} parent=5 // pred_fallthru
        _
    $region6: #{tpu_custom_call.1} parent=1 // loop_footer
      %s24 = sadd.s32 1, %s20
    $region7: #{tpu_custom_call.1} parent=1 // loop_footer_branch
      %19 = sbr.rel target = $region3
    $region8: #{tpu_custom_call.1} parent=1 // loop_exit
      _
    %3500 = vsyncpa [#allocation3], 1
    %s3501 = scalar_lea.sflag [#allocation3], 1
    %3502 = vsyncpa %s3501, 1
    %3503 = vsyncpa [#allocation6], 1
    %3504 = vsyncpa [#allocation4], 1
    %s3505 = scalar_lea.sflag [#allocation4], 1
    %3506 = vsyncpa %s3505, 1

</llo_original>
